<compile_context>
chip_gen: v5e
topology: v5e:2x2
jax: 0.10.0
libtpu: 0.0.40
codegen_flags: <defaults>
</compile_context>

<pallas_src>
import functools
import math

import jax
import jax.numpy as jnp
import numpy as np
from jax import lax
from jax.experimental import pallas as pl
from jax.experimental.pallas import tpu as pltpu

EPS = 1e-5          # torch.nn.LayerNorm default eps
NEG_SLOPE = 0.01    # torch.nn.LeakyReLU default negative_slope


def _layer_norm(x, gamma, beta):
    # var = E[x^2] - mu^2 so the two cross-lane reductions are independent.
    mu = jnp.mean(x, axis=-1, keepdims=True)
    ms = jnp.mean(x * x, axis=-1, keepdims=True)
    var = ms - mu * mu
    return (x - mu) * lax.rsqrt(var + EPS) * gamma + beta


def _fusion_kernel(n_groups, group_size, head_dim, batch_tile, seq_len, d_model,
                   q_ref, k_ref, v_ref,
                   wq_ref, bq_ref, wk_ref, bk_ref, wv_ref, bv_ref,
                   wo_ref, bo_ref,
                   g1_ref, be1_ref,
                   w1_ref, b1_ref, w2_ref, b2_ref,
                   g2_ref, be2_ref,
                   out_ref,
                   ctx_scr):
    TB, S, D = batch_tile, seq_len, d_model
    hd, g = head_dim, group_size
    M = TB * S

    Xq = q_ref[...]                               # f32, kept for the residual
    xq = Xq.astype(jnp.bfloat16)
    xk = k_ref[...].astype(jnp.bfloat16)
    xv = v_ref[...].astype(jnp.bfloat16)

    def group_body(gi, attn):
        # Grouped in-projection: (M, D) @ (D, g*hd) fills the MXU N dimension.
        # wq / bq already carry the 1/sqrt(head_dim) scale (folded on host).
        qg = jnp.dot(xq, wq_ref[gi], preferred_element_type=jnp.float32) + bq_ref[gi]
        kg = jnp.dot(xk, wk_ref[gi], preferred_element_type=jnp.float32) + bk_ref[gi]
        vg = jnp.dot(xv, wv_ref[gi], preferred_element_type=jnp.float32) + bv_ref[gi]

        # Small static unroll over the g heads inside this group.
        for j in range(g):
            lo = j * hd
            qh = qg[:, lo:lo + hd].astype(jnp.bfloat16).reshape(TB, S, hd)
            kh = kg[:, lo:lo + hd].astype(jnp.bfloat16).reshape(TB, S, hd)
            vh = vg[:, lo:lo + hd].astype(jnp.bfloat16).reshape(TB, S, hd)

            s = jnp.einsum("bqd,bkd->bqk", qh, kh,
                           preferred_element_type=jnp.float32)   # (TB, S, S) f32
            s = s - jnp.max(s, axis=-1, keepdims=True)
            p = jnp.exp(s)
            p = p * pl.reciprocal(jnp.sum(p, axis=-1, keepdims=True), approx=True)
            ctx = jnp.einsum("bqk,bkd->bqd", p.astype(jnp.bfloat16), vh,
                             preferred_element_type=jnp.float32)  # (TB, S, hd)
            ctx_scr[:, lo:lo + hd] = ctx.reshape(M, hd)

        # Grouped out-projection: (M, g*hd) @ (g*hd, D) fills the MXU K dim.
        return attn + jnp.dot(ctx_scr[...].astype(jnp.bfloat16), wo_ref[gi],
                              preferred_element_type=jnp.float32)

    # Initialise the accumulator with the out-proj bias (saves a full-slab add).
    attn0 = jnp.broadcast_to(bo_ref[...], (M, D)).astype(jnp.float32)
    attn = lax.fori_loop(0, n_groups, group_body, attn0)

    # --- AddNorm 1 (dropout is identity in eval mode) ---
    x1 = _layer_norm(Xq + attn, g1_ref[...], be1_ref[...])

    # --- Feedforward: Linear -> LeakyReLU -> (Dropout) -> Linear ---
    h1 = jnp.dot(x1.astype(jnp.bfloat16), w1_ref[...],
                 preferred_element_type=jnp.float32) + b1_ref[...]
    h1 = jnp.where(h1 >= 0, h1, NEG_SLOPE * h1)
    ff = jnp.dot(h1.astype(jnp.bfloat16), w2_ref[...],
                 preferred_element_type=jnp.float32) + b2_ref[...]

    # --- AddNorm 2 ---  (out block is (M, D): lane-dense, no reshape)
    out_ref[...] = _layer_norm(x1 + ff, g2_ref[...], be2_ref[...])


def _prepare_params(p, nhead, group_size, compute_dtype=jnp.bfloat16):
    """Host-side weight prep: transpose, fold attention scale, group heads."""
    D = p["wq"].shape[0]
    hd = D // nhead
    g = group_size
    n_groups = nhead // g
    gsz = g * hd
    scale = 1.0 / math.sqrt(hd)

    def split_in(w, b, s=1.0):
        # torch Linear weight is (out, in); kernel computes x @ W, so transpose
        # and regroup the output features (head-major) into head groups.
        wT = (w.T * s).reshape(D, n_groups, gsz).transpose(1, 0, 2)      # (G, D, gsz)
        bg = (b.reshape(-1) * s).reshape(n_groups, 1, gsz)               # (G, 1, gsz)
        return wT.astype(compute_dtype), bg.astype(jnp.float32)

    wq_g, bq_g = split_in(p["wq"], p["bq"], scale)   # scale folded into q proj
    wk_g, bk_g = split_in(p["wk"], p["bk"])
    wv_g, bv_g = split_in(p["wv"], p["bv"])
    wo_g = p["wo"].T.reshape(n_groups, gsz, D).astype(compute_dtype)      # (G, gsz, D)

    return {
        "wq": wq_g, "bq": bq_g, "wk": wk_g, "bk": bk_g, "wv": wv_g, "bv": bv_g,
        "wo": wo_g, "bo": p["bo"].astype(jnp.float32),
        "g1": p["g1"].astype(jnp.float32), "be1": p["be1"].astype(jnp.float32),
        "w1": p["w1"].T.astype(compute_dtype), "b1": p["b1"].astype(jnp.float32),
        "w2": p["w2"].T.astype(compute_dtype), "b2": p["b2"].astype(jnp.float32),
        "g2": p["g2"].astype(jnp.float32), "be2": p["be2"].astype(jnp.float32),
    }


def _pick_group_size(nhead, head_dim, mxu_width=256):
    """Largest divisor g of nhead with g*head_dim <= the MXU width."""
    g = 1
    for cand in range(1, nhead + 1):
        if nhead % cand == 0 and cand * head_dim <= mxu_width:
            g = cand
    return g


def _pick_batch_tile(B, S, target_rows=512):
    """Largest divisor of B with <= target_rows flattened rows per step.

    Capped at B//2 so the grid has >= 2 steps (v7x megacore sharding), and
    restricted to tiles whose row count is sublane-aligned (multiple of 8).
    """
    cap = max(1, B // 2)
    best = None
    for tb in range(1, cap + 1):
        if B % tb != 0:
            continue
        if (tb * S) % 8 != 0:
            continue
        if tb * S <= max(target_rows, S):
            best = tb
    if best is None:
        best = B          # fall back to one full-array block
    return best


def _const_spec(shape, single_buffer):
    nd = len(shape)
    index_map = lambda i, _nd=nd: (0,) * _nd
    if single_buffer:
        try:
            # Constant (resident) blocks do not need double buffering.
            return pl.BlockSpec(shape, index_map, pipeline_mode=pl.Buffered(1))
        except TypeError:
            pass
    return pl.BlockSpec(shape, index_map)


def cross_modality_fusion(Q, K, V, params, nhead, batch_tile=None,
                          group_size=None, compute_dtype=jnp.bfloat16,
                          single_buffer_weights=True):
    B, S, D = Q.shape
    head_dim = D // nhead
    assert nhead * head_dim == D
    if group_size is None:
        group_size = _pick_group_size(nhead, head_dim)
    n_groups = nhead // group_size
    gsz = group_size * head_dim
    if batch_tile is None:
        batch_tile = _pick_batch_tile(B, S)
    assert B % batch_tile == 0
    rows = batch_tile * S

    prep = _prepare_params(params, nhead, group_size, compute_dtype)
    hidden = prep["w1"].shape[1]

    order = ["wq", "bq", "wk", "bk", "wv", "bv", "wo", "bo",
             "g1", "be1", "w1", "b1", "w2", "b2", "g2", "be2"]
    wargs = [prep[name] for name in order]

    # Host-side 2-D layout: lane-dense (rows, D) blocks, no in-kernel IO reshape.
    Q2 = Q.reshape(B * S, D)
    K2 = K.reshape(B * S, D)
    V2 = V.reshape(B * S, D)
    io_spec = pl.BlockSpec((rows, D), lambda i: (i, 0))

    # --- VMEM budget + cost estimate -------------------------------------
    weight_bytes = sum(int(np.prod(w.shape)) * w.dtype.itemsize for w in wargs)
    wbuf = 1 if single_buffer_weights else 2
    io_block_bytes = 4 * rows * D * 4 * 2           # 3 in + 1 out, double buffered
    act_bytes = (3 * rows * D * 2                   # bf16 activations
                 + 3 * rows * gsz * 4                # grouped q/k/v projections
                 + 2 * batch_tile * S * S * 4        # score / prob
                 + 3 * rows * D * 4                  # attn / x1 / ff
                 + rows * hidden * 4                 # ffn hidden
                 + rows * gsz * 4)                   # ctx scratch
    need = weight_bytes * wbuf + io_block_bytes + act_bytes
    try:
        cap = int(pltpu.get_tpu_info().vmem_capacity_bytes)
    except Exception:
        cap = 64 * 1024 * 1024
    vmem_limit = int(min(0.8 * cap, max(32 * 1024 * 1024, 1.25 * need)))

    flops = (2 * B * S * D * D * 4                   # q/k/v in-proj + out-proj
             + 2 * B * S * S * D * 2                 # scores + context
             + 2 * B * S * D * hidden * 2)           # feed-forward
    transcendentals = B * nhead * S * S + 4 * B * S
    bytes_accessed = 4 * B * S * D * 4 + weight_bytes
    cost = pl.CostEstimate(flops=int(flops),
                           transcendentals=int(transcendentals),
                           bytes_accessed=int(bytes_accessed))

    kernel = functools.partial(_fusion_kernel, n_groups, group_size, head_dim,
                               batch_tile, S, D)

    out2 = pl.pallas_call(
        kernel,
        out_shape=jax.ShapeDtypeStruct((B * S, D), jnp.float32),
        grid=(B // batch_tile,),
        in_specs=[io_spec, io_spec, io_spec]
                 + [_const_spec(w.shape, single_buffer_weights) for w in wargs],
        out_specs=io_spec,
        scratch_shapes=[pltpu.VMEM((rows, gsz), jnp.float32)],
        compiler_params=pltpu.CompilerParams(
            dimension_semantics=("parallel",),
            vmem_limit_bytes=vmem_limit),
        cost_estimate=cost,
    )(Q2, K2, V2, *wargs)

    return out2.reshape(B, S, D)


def ref_forward(Q, K, V, p, nhead):
    """Pure-JAX f32 reference matching the PyTorch module (eval mode)."""
    B, S, D = Q.shape
    head_dim = D // nhead
    q = Q @ p["wq"].T + p["bq"]
    k = K @ p["wk"].T + p["bk"]
    v = V @ p["wv"].T + p["bv"]

    def split(x):
        return x.reshape(B, S, nhead, head_dim).transpose(0, 2, 1, 3)

    qh, kh, vh = split(q), split(k), split(v)
    s = jnp.einsum("bhqd,bhkd->bhqk", qh, kh) / math.sqrt(head_dim)
    a = jax.nn.softmax(s, axis=-1)
    ctx = jnp.einsum("bhqk,bhkd->bhqd", a, vh).transpose(0, 2, 1, 3).reshape(B, S, D)
    attn_out = ctx @ p["wo"].T + p["bo"]

    def ln(x, g, b):
        mu = x.mean(-1, keepdims=True)
        var = ((x - mu) ** 2).mean(-1, keepdims=True)
        return (x - mu) / jnp.sqrt(var + EPS) * g + b

    x1 = ln(Q + attn_out, p["g1"], p["be1"])
    h1 = x1 @ p["w1"].T + p["b1"]
    h1 = jnp.where(h1 >= 0, h1, NEG_SLOPE * h1)
    ff = h1 @ p["w2"].T + p["b2"]
    return ln(x1 + ff, p["g2"], p["be2"])


if __name__ == "__main__":
    B, S, D, nhead, hidden = 2, 8, 32, 4, 64

    key = jax.random.PRNGKey(0)
    keys = jax.random.split(key, 16)

    def nrm(k, shape, scale=0.1):
        return jax.random.normal(k, shape, dtype=jnp.float32) * scale

    # Deterministic synthetic parameters (shapes match the PyTorch module).
    params = {
        "wq": nrm(keys[0], (D, D)), "bq": nrm(keys[1], (1, D)),
        "wk": nrm(keys[2], (D, D)), "bk": nrm(keys[3], (1, D)),
        "wv": nrm(keys[4], (D, D)), "bv": nrm(keys[5], (1, D)),
        "wo": nrm(keys[6], (D, D)), "bo": nrm(keys[7], (1, D)),
        "g1": jnp.ones((1, D), jnp.float32), "be1": jnp.zeros((1, D), jnp.float32),
        "w1": nrm(keys[8], (hidden, D)), "b1": nrm(keys[9], (1, hidden)),
        "w2": nrm(keys[10], (D, hidden)), "b2": nrm(keys[11], (1, D)),
        "g2": jnp.ones((1, D), jnp.float32), "be2": jnp.zeros((1, D), jnp.float32),
    }

    Q = jax.random.normal(keys[12], (B, S, D), jnp.float32)
    K = jax.random.normal(keys[13], (B, S, D), jnp.float32)
    V = jax.random.normal(keys[14], (B, S, D), jnp.float32)

    try:
        out = cross_modality_fusion(Q, K, V, params, nhead)
    except Exception:
        # Fallback for JAX builds where single-buffered (Buffered(1)) weight
        # blocks are not supported in pallas_call: use default double buffering.
        out = cross_modality_fusion(Q, K, V, params, nhead,
                                    single_buffer_weights=False)
    out = jax.block_until_ready(out)

    ref = ref_forward(Q, K, V, params, nhead)
    # Tolerance sized for bf16 MXU operands (f32 accumulation) + approx
    # reciprocal in the softmax normalisation.
    np.testing.assert_allclose(np.asarray(out), np.asarray(ref),
                               atol=3e-2, rtol=3e-2)
    print("KERNEL_OK")
</pallas_src>

<mosaic_0001>
module attributes {stable_mosaic.version = 11 : i64} {
  func.func @_fusion_kernel(%arg0: i32, %arg1: memref<8x32xf32, #tpu.memory_space<vmem>>, %arg2: memref<8x32xf32, #tpu.memory_space<vmem>>, %arg3: memref<8x32xf32, #tpu.memory_space<vmem>>, %arg4: memref<1x32x32xbf16, #tpu.memory_space<vmem>>, %arg5: memref<1x1x32xf32, #tpu.memory_space<vmem>>, %arg6: memref<1x32x32xbf16, #tpu.memory_space<vmem>>, %arg7: memref<1x1x32xf32, #tpu.memory_space<vmem>>, %arg8: memref<1x32x32xbf16, #tpu.memory_space<vmem>>, %arg9: memref<1x1x32xf32, #tpu.memory_space<vmem>>, %arg10: memref<1x32x32xbf16, #tpu.memory_space<vmem>>, %arg11: memref<1x32xf32, #tpu.memory_space<vmem>>, %arg12: memref<1x32xf32, #tpu.memory_space<vmem>>, %arg13: memref<1x32xf32, #tpu.memory_space<vmem>>, %arg14: memref<32x64xbf16, #tpu.memory_space<vmem>>, %arg15: memref<1x64xf32, #tpu.memory_space<vmem>>, %arg16: memref<64x32xbf16, #tpu.memory_space<vmem>>, %arg17: memref<1x32xf32, #tpu.memory_space<vmem>>, %arg18: memref<1x32xf32, #tpu.memory_space<vmem>>, %arg19: memref<1x32xf32, #tpu.memory_space<vmem>>, %arg20: memref<8x32xf32, #tpu.memory_space<vmem>>, %arg21: memref<8x32xf32, #tpu.memory_space<vmem>>) attributes {dimension_semantics = [#tpu.dimension_semantics<parallel>], iteration_bounds = array<i64: 2>, scalar_prefetch = 0 : i64, scratch_operands = 1 : i64, tpu.core_type = #tpu.core_type<tc>, window_params = [{transform_indices = @transform_0, window_bounds = array<i64: 8, 32>}, {transform_indices = @transform_1, window_bounds = array<i64: 8, 32>}, {transform_indices = @transform_2, window_bounds = array<i64: 8, 32>}, {pipeline_mode = #tpu.pipeline_mode<synchronous>, transform_indices = @transform_3, window_bounds = array<i64: 1, 32, 32>}, {pipeline_mode = #tpu.pipeline_mode<synchronous>, transform_indices = @transform_4, window_bounds = array<i64: 1, 1, 32>}, {pipeline_mode = #tpu.pipeline_mode<synchronous>, transform_indices = @transform_5, window_bounds = array<i64: 1, 32, 32>}, {pipeline_mode = #tpu.pipeline_mode<synchronous>, transform_indices = @transform_6, window_bounds = array<i64: 1, 1, 32>}, {pipeline_mode = #tpu.pipeline_mode<synchronous>, transform_indices = @transform_7, window_bounds = array<i64: 1, 32, 32>}, {pipeline_mode = #tpu.pipeline_mode<synchronous>, transform_indices = @transform_8, window_bounds = array<i64: 1, 1, 32>}, {pipeline_mode = #tpu.pipeline_mode<synchronous>, transform_indices = @transform_9, window_bounds = array<i64: 1, 32, 32>}, {pipeline_mode = #tpu.pipeline_mode<synchronous>, transform_indices = @transform_10, window_bounds = array<i64: 1, 32>}, {pipeline_mode = #tpu.pipeline_mode<synchronous>, transform_indices = @transform_11, window_bounds = array<i64: 1, 32>}, {pipeline_mode = #tpu.pipeline_mode<synchronous>, transform_indices = @transform_12, window_bounds = array<i64: 1, 32>}, {pipeline_mode = #tpu.pipeline_mode<synchronous>, transform_indices = @transform_13, window_bounds = array<i64: 32, 64>}, {pipeline_mode = #tpu.pipeline_mode<synchronous>, transform_indices = @transform_14, window_bounds = array<i64: 1, 64>}, {pipeline_mode = #tpu.pipeline_mode<synchronous>, transform_indices = @transform_15, window_bounds = array<i64: 64, 32>}, {pipeline_mode = #tpu.pipeline_mode<synchronous>, transform_indices = @transform_16, window_bounds = array<i64: 1, 32>}, {pipeline_mode = #tpu.pipeline_mode<synchronous>, transform_indices = @transform_17, window_bounds = array<i64: 1, 32>}, {pipeline_mode = #tpu.pipeline_mode<synchronous>, transform_indices = @transform_18, window_bounds = array<i64: 1, 32>}, {transform_indices = @transform_19, window_bounds = array<i64: 8, 32>}]} {
    %c0 = arith.constant 0 : index
    %c0_0 = arith.constant 0 : index
    %0 = vector.load %arg1[%c0, %c0_0] : memref<8x32xf32, #tpu.memory_space<vmem>>, vector<8x32xf32>
    %1 = arith.truncf %0 : vector<8x32xf32> to vector<8x32xbf16>
    %c0_1 = arith.constant 0 : index
    %c0_2 = arith.constant 0 : index
    %2 = vector.load %arg2[%c0_1, %c0_2] : memref<8x32xf32, #tpu.memory_space<vmem>>, vector<8x32xf32>
    %3 = arith.truncf %2 : vector<8x32xf32> to vector<8x32xbf16>
    %c0_3 = arith.constant 0 : index
    %c0_4 = arith.constant 0 : index
    %4 = vector.load %arg3[%c0_3, %c0_4] : memref<8x32xf32, #tpu.memory_space<vmem>>, vector<8x32xf32>
    %5 = arith.truncf %4 : vector<8x32xf32> to vector<8x32xbf16>
    %c0_5 = arith.constant 0 : index
    %c0_6 = arith.constant 0 : index
    %6 = vector.load %arg11[%c0_5, %c0_6] : memref<1x32xf32, #tpu.memory_space<vmem>>, vector<1x32xf32>
    %7 = vector.shape_cast %6 : vector<1x32xf32> to vector<1x32xf32>
    %8 = vector.broadcast %7 : vector<1x32xf32> to vector<8x32xf32>
    %c0_i32 = arith.constant 0 : i32
    %9 = arith.index_cast %c0_i32 : i32 to index
    %c0_7 = arith.constant 0 : index
    %c0_8 = arith.constant 0 : index
    %10 = vector.load %arg4[%9, %c0_7, %c0_8] : memref<1x32x32xbf16, #tpu.memory_space<vmem>>, vector<1x32x32xbf16>
    %11 = vector.shape_cast %10 : vector<1x32x32xbf16> to vector<32x32xbf16>
    %cst = arith.constant dense<0.000000e+00> : vector<8x32xf32>
    %12 = tpu.matmul %1, %11, %cst {dimension_numbers = #tpu.dot_dimension_numbers<[1], [0], [0], [1], [0, 0, 1, 1], [], []>} : vector<8x32xbf16>, vector<32x32xbf16>, vector<8x32xf32> -> vector<8x32xf32>
    %13 = arith.index_cast %c0_i32 : i32 to index
    %c0_9 = arith.constant 0 : index
    %c0_10 = arith.constant 0 : index
    %14 = vector.load %arg5[%13, %c0_9, %c0_10] : memref<1x1x32xf32, #tpu.memory_space<vmem>>, vector<1x1x32xf32>
    %15 = vector.shape_cast %14 : vector<1x1x32xf32> to vector<1x32xf32>
    %16 = vector.broadcast %15 : vector<1x32xf32> to vector<8x32xf32>
    %17 = arith.addf %12, %16 : vector<8x32xf32>
    %18 = arith.index_cast %c0_i32 : i32 to index
    %c0_11 = arith.constant 0 : index
    %c0_12 = arith.constant 0 : index
    %19 = vector.load %arg6[%18, %c0_11, %c0_12] : memref<1x32x32xbf16, #tpu.memory_space<vmem>>, vector<1x32x32xbf16>
    %20 = vector.shape_cast %19 : vector<1x32x32xbf16> to vector<32x32xbf16>
    %cst_13 = arith.constant dense<0.000000e+00> : vector<8x32xf32>
    %21 = tpu.matmul %3, %20, %cst_13 {dimension_numbers = #tpu.dot_dimension_numbers<[1], [0], [0], [1], [0, 0, 1, 1], [], []>} : vector<8x32xbf16>, vector<32x32xbf16>, vector<8x32xf32> -> vector<8x32xf32>
    %22 = arith.index_cast %c0_i32 : i32 to index
    %c0_14 = arith.constant 0 : index
    %c0_15 = arith.constant 0 : index
    %23 = vector.load %arg7[%22, %c0_14, %c0_15] : memref<1x1x32xf32, #tpu.memory_space<vmem>>, vector<1x1x32xf32>
    %24 = vector.shape_cast %23 : vector<1x1x32xf32> to vector<1x32xf32>
    %25 = vector.broadcast %24 : vector<1x32xf32> to vector<8x32xf32>
    %26 = arith.addf %21, %25 : vector<8x32xf32>
    %27 = arith.index_cast %c0_i32 : i32 to index
    %c0_16 = arith.constant 0 : index
    %c0_17 = arith.constant 0 : index
    %28 = vector.load %arg8[%27, %c0_16, %c0_17] : memref<1x32x32xbf16, #tpu.memory_space<vmem>>, vector<1x32x32xbf16>
    %29 = vector.shape_cast %28 : vector<1x32x32xbf16> to vector<32x32xbf16>
    %cst_18 = arith.constant dense<0.000000e+00> : vector<8x32xf32>
    %30 = tpu.matmul %5, %29, %cst_18 {dimension_numbers = #tpu.dot_dimension_numbers<[1], [0], [0], [1], [0, 0, 1, 1], [], []>} : vector<8x32xbf16>, vector<32x32xbf16>, vector<8x32xf32> -> vector<8x32xf32>
    %31 = arith.index_cast %c0_i32 : i32 to index
    %c0_19 = arith.constant 0 : index
    %c0_20 = arith.constant 0 : index
    %32 = vector.load %arg9[%31, %c0_19, %c0_20] : memref<1x1x32xf32, #tpu.memory_space<vmem>>, vector<1x1x32xf32>
    %33 = vector.shape_cast %32 : vector<1x1x32xf32> to vector<1x32xf32>
    %34 = vector.broadcast %33 : vector<1x32xf32> to vector<8x32xf32>
    %35 = arith.addf %30, %34 : vector<8x32xf32>
    %36 = vector.extract_strided_slice %17 {offsets = [0, 0], sizes = [8, 8], strides = [1, 1]} : vector<8x32xf32> to vector<8x8xf32>
    %37 = arith.truncf %36 : vector<8x8xf32> to vector<8x8xbf16>
    %38 = vector.shape_cast %37 : vector<8x8xbf16> to vector<1x8x8xbf16>
    %39 = vector.extract_strided_slice %26 {offsets = [0, 0], sizes = [8, 8], strides = [1, 1]} : vector<8x32xf32> to vector<8x8xf32>
    %40 = arith.truncf %39 : vector<8x8xf32> to vector<8x8xbf16>
    %41 = vector.shape_cast %40 : vector<8x8xbf16> to vector<1x8x8xbf16>
    %42 = vector.extract_strided_slice %35 {offsets = [0, 0], sizes = [8, 8], strides = [1, 1]} : vector<8x32xf32> to vector<8x8xf32>
    %43 = arith.truncf %42 : vector<8x8xf32> to vector<8x8xbf16>
    %44 = vector.shape_cast %43 : vector<8x8xbf16> to vector<1x8x8xbf16>
    "tpu.trace_start"() <{level = 10 : i32, message = "bqd,bkd->bqk"}> : () -> ()
    %cst_21 = arith.constant dense<0.000000e+00> : vector<1x8x8xf32>
    %45 = tpu.matmul %38, %41, %cst_21 {dimension_numbers = #tpu.dot_dimension_numbers<[2], [2], [1], [1], [0, 0, 0, 1, 1, 1], [0], [0]>} : vector<1x8x8xbf16>, vector<1x8x8xbf16>, vector<1x8x8xf32> -> vector<1x8x8xf32>
    "tpu.trace_stop"() : () -> ()
    %cst_22 = arith.constant dense<0xFF800000> : vector<1x8xf32>
    %46 = vector.multi_reduction <maximumf>, %45, %cst_22 [2] : vector<1x8x8xf32> to vector<1x8xf32>
    %47 = vector.shape_cast %46 : vector<1x8xf32> to vector<1x8x1xf32>
    %48 = vector.broadcast %47 : vector<1x8x1xf32> to vector<1x8x8xf32>
    %49 = arith.subf %45, %48 : vector<1x8x8xf32>
    %50 = math.exp %49 : vector<1x8x8xf32>
    %cst_23 = arith.constant dense<0.000000e+00> : vector<1x8xf32>
    %51 = vector.multi_reduction <add>, %50, %cst_23 [2] : vector<1x8x8xf32> to vector<1x8xf32>
    %52 = vector.shape_cast %51 : vector<1x8xf32> to vector<1x8x1xf32>
    %53 = tpu.reciprocal %52 {approx = true} : vector<1x8x1xf32> -> vector<1x8x1xf32>
    %54 = vector.broadcast %53 : vector<1x8x1xf32> to vector<1x8x8xf32>
    %55 = arith.mulf %50, %54 : vector<1x8x8xf32>
    %56 = arith.truncf %55 : vector<1x8x8xf32> to vector<1x8x8xbf16>
    "tpu.trace_start"() <{level = 10 : i32, message = "bqk,bkd->bqd"}> : () -> ()
    %cst_24 = arith.constant dense<0.000000e+00> : vector<1x8x8xf32>
    %57 = tpu.matmul %56, %44, %cst_24 {dimension_numbers = #tpu.dot_dimension_numbers<[2], [1], [1], [2], [0, 0, 0, 1, 1, 2], [0], [0]>} : vector<1x8x8xbf16>, vector<1x8x8xbf16>, vector<1x8x8xf32> -> vector<1x8x8xf32>
    "tpu.trace_stop"() : () -> ()
    %58 = vector.shape_cast %57 : vector<1x8x8xf32> to vector<8x8xf32>
    %c0_25 = arith.constant 0 : index
    %c0_26 = arith.constant 0 : index
    %59 = vector.load %arg21[%c0_25, %c0_26] : memref<8x32xf32, #tpu.memory_space<vmem>>, vector<8x8xf32>
    tpu.vector_store %arg21[%c0_25, %c0_26], %58 {strides = array<i32>} : memref<8x32xf32, #tpu.memory_space<vmem>>, vector<8x8xf32>,
    %60 = vector.extract_strided_slice %17 {offsets = [0, 8], sizes = [8, 8], strides = [1, 1]} : vector<8x32xf32> to vector<8x8xf32>
    %61 = arith.truncf %60 : vector<8x8xf32> to vector<8x8xbf16>
    %62 = vector.shape_cast %61 : vector<8x8xbf16> to vector<1x8x8xbf16>
    %63 = vector.extract_strided_slice %26 {offsets = [0, 8], sizes = [8, 8], strides = [1, 1]} : vector<8x32xf32> to vector<8x8xf32>
    %64 = arith.truncf %63 : vector<8x8xf32> to vector<8x8xbf16>
    %65 = vector.shape_cast %64 : vector<8x8xbf16> to vector<1x8x8xbf16>
    %66 = vector.extract_strided_slice %35 {offsets = [0, 8], sizes = [8, 8], strides = [1, 1]} : vector<8x32xf32> to vector<8x8xf32>
    %67 = arith.truncf %66 : vector<8x8xf32> to vector<8x8xbf16>
    %68 = vector.shape_cast %67 : vector<8x8xbf16> to vector<1x8x8xbf16>
    "tpu.trace_start"() <{level = 10 : i32, message = "bqd,bkd->bqk"}> : () -> ()
    %cst_27 = arith.constant dense<0.000000e+00> : vector<1x8x8xf32>
    %69 = tpu.matmul %62, %65, %cst_27 {dimension_numbers = #tpu.dot_dimension_numbers<[2], [2], [1], [1], [0, 0, 0, 1, 1, 1], [0], [0]>} : vector<1x8x8xbf16>, vector<1x8x8xbf16>, vector<1x8x8xf32> -> vector<1x8x8xf32>
    "tpu.trace_stop"() : () -> ()
    %cst_28 = arith.constant dense<0xFF800000> : vector<1x8xf32>
    %70 = vector.multi_reduction <maximumf>, %69, %cst_28 [2] : vector<1x8x8xf32> to vector<1x8xf32>
    %71 = vector.shape_cast %70 : vector<1x8xf32> to vector<1x8x1xf32>
    %72 = vector.broadcast %71 : vector<1x8x1xf32> to vector<1x8x8xf32>
    %73 = arith.subf %69, %72 : vector<1x8x8xf32>
    %74 = math.exp %73 : vector<1x8x8xf32>
    %cst_29 = arith.constant dense<0.000000e+00> : vector<1x8xf32>
    %75 = vector.multi_reduction <add>, %74, %cst_29 [2] : vector<1x8x8xf32> to vector<1x8xf32>
    %76 = vector.shape_cast %75 : vector<1x8xf32> to vector<1x8x1xf32>
    %77 = tpu.reciprocal %76 {approx = true} : vector<1x8x1xf32> -> vector<1x8x1xf32>
    %78 = vector.broadcast %77 : vector<1x8x1xf32> to vector<1x8x8xf32>
    %79 = arith.mulf %74, %78 : vector<1x8x8xf32>
    %80 = arith.truncf %79 : vector<1x8x8xf32> to vector<1x8x8xbf16>
    "tpu.trace_start"() <{level = 10 : i32, message = "bqk,bkd->bqd"}> : () -> ()
    %cst_30 = arith.constant dense<0.000000e+00> : vector<1x8x8xf32>
    %81 = tpu.matmul %80, %68, %cst_30 {dimension_numbers = #tpu.dot_dimension_numbers<[2], [1], [1], [2], [0, 0, 0, 1, 1, 2], [0], [0]>} : vector<1x8x8xbf16>, vector<1x8x8xbf16>, vector<1x8x8xf32> -> vector<1x8x8xf32>
    "tpu.trace_stop"() : () -> ()
    %82 = vector.shape_cast %81 : vector<1x8x8xf32> to vector<8x8xf32>
    %c0_31 = arith.constant 0 : index
    %c8 = arith.constant 8 : index
    %83 = vector.load %arg21[%c0_31, %c8] : memref<8x32xf32, #tpu.memory_space<vmem>>, vector<8x8xf32>
    tpu.vector_store %arg21[%c0_31, %c8], %82 {strides = array<i32>} : memref<8x32xf32, #tpu.memory_space<vmem>>, vector<8x8xf32>,
    %84 = vector.extract_strided_slice %17 {offsets = [0, 16], sizes = [8, 8], strides = [1, 1]} : vector<8x32xf32> to vector<8x8xf32>
    %85 = arith.truncf %84 : vector<8x8xf32> to vector<8x8xbf16>
    %86 = vector.shape_cast %85 : vector<8x8xbf16> to vector<1x8x8xbf16>
    %87 = vector.extract_strided_slice %26 {offsets = [0, 16], sizes = [8, 8], strides = [1, 1]} : vector<8x32xf32> to vector<8x8xf32>
    %88 = arith.truncf %87 : vector<8x8xf32> to vector<8x8xbf16>
    %89 = vector.shape_cast %88 : vector<8x8xbf16> to vector<1x8x8xbf16>
    %90 = vector.extract_strided_slice %35 {offsets = [0, 16], sizes = [8, 8], strides = [1, 1]} : vector<8x32xf32> to vector<8x8xf32>
    %91 = arith.truncf %90 : vector<8x8xf32> to vector<8x8xbf16>
    %92 = vector.shape_cast %91 : vector<8x8xbf16> to vector<1x8x8xbf16>
    "tpu.trace_start"() <{level = 10 : i32, message = "bqd,bkd->bqk"}> : () -> ()
    %cst_32 = arith.constant dense<0.000000e+00> : vector<1x8x8xf32>
    %93 = tpu.matmul %86, %89, %cst_32 {dimension_numbers = #tpu.dot_dimension_numbers<[2], [2], [1], [1], [0, 0, 0, 1, 1, 1], [0], [0]>} : vector<1x8x8xbf16>, vector<1x8x8xbf16>, vector<1x8x8xf32> -> vector<1x8x8xf32>
    "tpu.trace_stop"() : () -> ()
    %cst_33 = arith.constant dense<0xFF800000> : vector<1x8xf32>
    %94 = vector.multi_reduction <maximumf>, %93, %cst_33 [2] : vector<1x8x8xf32> to vector<1x8xf32>
    %95 = vector.shape_cast %94 : vector<1x8xf32> to vector<1x8x1xf32>
    %96 = vector.broadcast %95 : vector<1x8x1xf32> to vector<1x8x8xf32>
    %97 = arith.subf %93, %96 : vector<1x8x8xf32>
    %98 = math.exp %97 : vector<1x8x8xf32>
    %cst_34 = arith.constant dense<0.000000e+00> : vector<1x8xf32>
    %99 = vector.multi_reduction <add>, %98, %cst_34 [2] : vector<1x8x8xf32> to vector<1x8xf32>
    %100 = vector.shape_cast %99 : vector<1x8xf32> to vector<1x8x1xf32>
    %101 = tpu.reciprocal %100 {approx = true} : vector<1x8x1xf32> -> vector<1x8x1xf32>
    %102 = vector.broadcast %101 : vector<1x8x1xf32> to vector<1x8x8xf32>
    %103 = arith.mulf %98, %102 : vector<1x8x8xf32>
    %104 = arith.truncf %103 : vector<1x8x8xf32> to vector<1x8x8xbf16>
    "tpu.trace_start"() <{level = 10 : i32, message = "bqk,bkd->bqd"}> : () -> ()
    %cst_35 = arith.constant dense<0.000000e+00> : vector<1x8x8xf32>
    %105 = tpu.matmul %104, %92, %cst_35 {dimension_numbers = #tpu.dot_dimension_numbers<[2], [1], [1], [2], [0, 0, 0, 1, 1, 2], [0], [0]>} : vector<1x8x8xbf16>, vector<1x8x8xbf16>, vector<1x8x8xf32> -> vector<1x8x8xf32>
    "tpu.trace_stop"() : () -> ()
    %106 = vector.shape_cast %105 : vector<1x8x8xf32> to vector<8x8xf32>
    %c0_36 = arith.constant 0 : index
    %c16 = arith.constant 16 : index
    %107 = vector.load %arg21[%c0_36, %c16] : memref<8x32xf32, #tpu.memory_space<vmem>>, vector<8x8xf32>
    tpu.vector_store %arg21[%c0_36, %c16], %106 {strides = array<i32>} : memref<8x32xf32, #tpu.memory_space<vmem>>, vector<8x8xf32>,
    %108 = vector.extract_strided_slice %17 {offsets = [0, 24], sizes = [8, 8], strides = [1, 1]} : vector<8x32xf32> to vector<8x8xf32>
    %109 = arith.truncf %108 : vector<8x8xf32> to vector<8x8xbf16>
    %110 = vector.shape_cast %109 : vector<8x8xbf16> to vector<1x8x8xbf16>
    %111 = vector.extract_strided_slice %26 {offsets = [0, 24], sizes = [8, 8], strides = [1, 1]} : vector<8x32xf32> to vector<8x8xf32>
    %112 = arith.truncf %111 : vector<8x8xf32> to vector<8x8xbf16>
    %113 = vector.shape_cast %112 : vector<8x8xbf16> to vector<1x8x8xbf16>
    %114 = vector.extract_strided_slice %35 {offsets = [0, 24], sizes = [8, 8], strides = [1, 1]} : vector<8x32xf32> to vector<8x8xf32>
    %115 = arith.truncf %114 : vector<8x8xf32> to vector<8x8xbf16>
    %116 = vector.shape_cast %115 : vector<8x8xbf16> to vector<1x8x8xbf16>
    "tpu.trace_start"() <{level = 10 : i32, message = "bqd,bkd->bqk"}> : () -> ()
    %cst_37 = arith.constant dense<0.000000e+00> : vector<1x8x8xf32>
    %117 = tpu.matmul %110, %113, %cst_37 {dimension_numbers = #tpu.dot_dimension_numbers<[2], [2], [1], [1], [0, 0, 0, 1, 1, 1], [0], [0]>} : vector<1x8x8xbf16>, vector<1x8x8xbf16>, vector<1x8x8xf32> -> vector<1x8x8xf32>
    "tpu.trace_stop"() : () -> ()
    %cst_38 = arith.constant dense<0xFF800000> : vector<1x8xf32>
    %118 = vector.multi_reduction <maximumf>, %117, %cst_38 [2] : vector<1x8x8xf32> to vector<1x8xf32>
    %119 = vector.shape_cast %118 : vector<1x8xf32> to vector<1x8x1xf32>
    %120 = vector.broadcast %119 : vector<1x8x1xf32> to vector<1x8x8xf32>
    %121 = arith.subf %117, %120 : vector<1x8x8xf32>
    %122 = math.exp %121 : vector<1x8x8xf32>
    %cst_39 = arith.constant dense<0.000000e+00> : vector<1x8xf32>
    %123 = vector.multi_reduction <add>, %122, %cst_39 [2] : vector<1x8x8xf32> to vector<1x8xf32>
    %124 = vector.shape_cast %123 : vector<1x8xf32> to vector<1x8x1xf32>
    %125 = tpu.reciprocal %124 {approx = true} : vector<1x8x1xf32> -> vector<1x8x1xf32>
    %126 = vector.broadcast %125 : vector<1x8x1xf32> to vector<1x8x8xf32>
    %127 = arith.mulf %122, %126 : vector<1x8x8xf32>
    %128 = arith.truncf %127 : vector<1x8x8xf32> to vector<1x8x8xbf16>
    "tpu.trace_start"() <{level = 10 : i32, message = "bqk,bkd->bqd"}> : () -> ()
    %cst_40 = arith.constant dense<0.000000e+00> : vector<1x8x8xf32>
    %129 = tpu.matmul %128, %116, %cst_40 {dimension_numbers = #tpu.dot_dimension_numbers<[2], [1], [1], [2], [0, 0, 0, 1, 1, 2], [0], [0]>} : vector<1x8x8xbf16>, vector<1x8x8xbf16>, vector<1x8x8xf32> -> vector<1x8x8xf32>
    "tpu.trace_stop"() : () -> ()
    %130 = vector.shape_cast %129 : vector<1x8x8xf32> to vector<8x8xf32>
    %c0_41 = arith.constant 0 : index
    %c24 = arith.constant 24 : index
    %131 = vector.load %arg21[%c0_41, %c24] : memref<8x32xf32, #tpu.memory_space<vmem>>, vector<8x8xf32>
    tpu.vector_store %arg21[%c0_41, %c24], %130 {strides = array<i32>} : memref<8x32xf32, #tpu.memory_space<vmem>>, vector<8x8xf32>,
    %c0_42 = arith.constant 0 : index
    %c0_43 = arith.constant 0 : index
    %132 = vector.load %arg21[%c0_42, %c0_43] : memref<8x32xf32, #tpu.memory_space<vmem>>, vector<8x32xf32>
    %133 = arith.truncf %132 : vector<8x32xf32> to vector<8x32xbf16>
    %134 = arith.index_cast %c0_i32 : i32 to index
    %c0_44 = arith.constant 0 : index
    %c0_45 = arith.constant 0 : index
    %135 = vector.load %arg10[%134, %c0_44, %c0_45] : memref<1x32x32xbf16, #tpu.memory_space<vmem>>, vector<1x32x32xbf16>
    %136 = vector.shape_cast %135 : vector<1x32x32xbf16> to vector<32x32xbf16>
    %cst_46 = arith.constant dense<0.000000e+00> : vector<8x32xf32>
    %137 = tpu.matmul %133, %136, %cst_46 {dimension_numbers = #tpu.dot_dimension_numbers<[1], [0], [0], [1], [0, 0, 1, 1], [], []>} : vector<8x32xbf16>, vector<32x32xbf16>, vector<8x32xf32> -> vector<8x32xf32>
    %138 = arith.addf %8, %137 : vector<8x32xf32>
    %c1_i32 = arith.constant 1 : i32
    %139 = arith.addf %0, %138 : vector<8x32xf32>
    %c0_47 = arith.constant 0 : index
    %c0_48 = arith.constant 0 : index
    %140 = vector.load %arg12[%c0_47, %c0_48] : memref<1x32xf32, #tpu.memory_space<vmem>>, vector<1x32xf32>
    %c0_49 = arith.constant 0 : index
    %c0_50 = arith.constant 0 : index
    %141 = vector.load %arg13[%c0_49, %c0_50] : memref<1x32xf32, #tpu.memory_space<vmem>>, vector<1x32xf32>
    %cst_51 = arith.constant dense<0.000000e+00> : vector<8xf32>
    %142 = vector.multi_reduction <add>, %139, %cst_51 [1] : vector<8x32xf32> to vector<8xf32>
    %143 = vector.shape_cast %142 : vector<8xf32> to vector<8x1xf32>
    %cst_52 = arith.constant 3.200000e+01 : f32
    %144 = vector.broadcast %cst_52 : f32 to vector<8x1xf32>
    %145 = arith.divf %143, %144 : vector<8x1xf32>
    %146 = arith.mulf %139, %139 : vector<8x32xf32>
    %cst_53 = arith.constant dense<0.000000e+00> : vector<8xf32>
    %147 = vector.multi_reduction <add>, %146, %cst_53 [1] : vector<8x32xf32> to vector<8xf32>
    %148 = vector.shape_cast %147 : vector<8xf32> to vector<8x1xf32>
    %cst_54 = arith.constant 3.200000e+01 : f32
    %149 = vector.broadcast %cst_54 : f32 to vector<8x1xf32>
    %150 = arith.divf %148, %149 : vector<8x1xf32>
    %151 = arith.mulf %145, %145 : vector<8x1xf32>
    %152 = arith.subf %150, %151 : vector<8x1xf32>
    %153 = vector.broadcast %145 : vector<8x1xf32> to vector<8x32xf32>
    %154 = arith.subf %139, %153 : vector<8x32xf32>
    %cst_55 = arith.constant 9.99999974E-6 : f32
    %155 = vector.broadcast %cst_55 : f32 to vector<8x1xf32>
    %156 = arith.addf %152, %155 : vector<8x1xf32>
    %157 = math.rsqrt %156 : vector<8x1xf32>
    %158 = vector.broadcast %157 : vector<8x1xf32> to vector<8x32xf32>
    %159 = arith.mulf %154, %158 : vector<8x32xf32>
    %160 = vector.broadcast %140 : vector<1x32xf32> to vector<8x32xf32>
    %161 = arith.mulf %159, %160 : vector<8x32xf32>
    %162 = vector.broadcast %141 : vector<1x32xf32> to vector<8x32xf32>
    %163 = arith.addf %161, %162 : vector<8x32xf32>
    %164 = arith.truncf %163 : vector<8x32xf32> to vector<8x32xbf16>
    %c0_56 = arith.constant 0 : index
    %c0_57 = arith.constant 0 : index
    %165 = vector.load %arg14[%c0_56, %c0_57] : memref<32x64xbf16, #tpu.memory_space<vmem>>, vector<32x64xbf16>
    %cst_58 = arith.constant dense<0.000000e+00> : vector<8x64xf32>
    %166 = tpu.matmul %164, %165, %cst_58 {dimension_numbers = #tpu.dot_dimension_numbers<[1], [0], [0], [1], [0, 0, 1, 1], [], []>} : vector<8x32xbf16>, vector<32x64xbf16>, vector<8x64xf32> -> vector<8x64xf32>
    %c0_59 = arith.constant 0 : index
    %c0_60 = arith.constant 0 : index
    %167 = vector.load %arg15[%c0_59, %c0_60] : memref<1x64xf32, #tpu.memory_space<vmem>>, vector<1x64xf32>
    %168 = vector.broadcast %167 : vector<1x64xf32> to vector<8x64xf32>
    %169 = arith.addf %166, %168 : vector<8x64xf32>
    %cst_61 = arith.constant 0.000000e+00 : f32
    %170 = vector.broadcast %cst_61 : f32 to vector<8x64xf32>
    %171 = arith.cmpf oge, %169, %170 : vector<8x64xf32>
    %cst_62 = arith.constant 0.00999999977 : f32
    %172 = vector.broadcast %cst_62 : f32 to vector<8x64xf32>
    %173 = arith.mulf %172, %169 : vector<8x64xf32>
    %174 = arith.select %171, %169, %173 : vector<8x64xi1>, vector<8x64xf32>
    %175 = arith.truncf %174 : vector<8x64xf32> to vector<8x64xbf16>
    %c0_63 = arith.constant 0 : index
    %c0_64 = arith.constant 0 : index
    %176 = vector.load %arg16[%c0_63, %c0_64] : memref<64x32xbf16, #tpu.memory_space<vmem>>, vector<64x32xbf16>
    %cst_65 = arith.constant dense<0.000000e+00> : vector<8x32xf32>
    %177 = tpu.matmul %175, %176, %cst_65 {dimension_numbers = #tpu.dot_dimension_numbers<[1], [0], [0], [1], [0, 0, 1, 1], [], []>} : vector<8x64xbf16>, vector<64x32xbf16>, vector<8x32xf32> -> vector<8x32xf32>
    %c0_66 = arith.constant 0 : index
    %c0_67 = arith.constant 0 : index
    %178 = vector.load %arg17[%c0_66, %c0_67] : memref<1x32xf32, #tpu.memory_space<vmem>>, vector<1x32xf32>
    %179 = vector.broadcast %178 : vector<1x32xf32> to vector<8x32xf32>
    %180 = arith.addf %177, %179 : vector<8x32xf32>
    %181 = arith.addf %163, %180 : vector<8x32xf32>
    %c0_68 = arith.constant 0 : index
    %c0_69 = arith.constant 0 : index
    %182 = vector.load %arg18[%c0_68, %c0_69] : memref<1x32xf32, #tpu.memory_space<vmem>>, vector<1x32xf32>
    %c0_70 = arith.constant 0 : index
    %c0_71 = arith.constant 0 : index
    %183 = vector.load %arg19[%c0_70, %c0_71] : memref<1x32xf32, #tpu.memory_space<vmem>>, vector<1x32xf32>
    %cst_72 = arith.constant dense<0.000000e+00> : vector<8xf32>
    %184 = vector.multi_reduction <add>, %181, %cst_72 [1] : vector<8x32xf32> to vector<8xf32>
    %185 = vector.shape_cast %184 : vector<8xf32> to vector<8x1xf32>
    %cst_73 = arith.constant 3.200000e+01 : f32
    %186 = vector.broadcast %cst_73 : f32 to vector<8x1xf32>
    %187 = arith.divf %185, %186 : vector<8x1xf32>
    %188 = arith.mulf %181, %181 : vector<8x32xf32>
    %cst_74 = arith.constant dense<0.000000e+00> : vector<8xf32>
    %189 = vector.multi_reduction <add>, %188, %cst_74 [1] : vector<8x32xf32> to vector<8xf32>
    %190 = vector.shape_cast %189 : vector<8xf32> to vector<8x1xf32>
    %cst_75 = arith.constant 3.200000e+01 : f32
    %191 = vector.broadcast %cst_75 : f32 to vector<8x1xf32>
    %192 = arith.divf %190, %191 : vector<8x1xf32>
    %193 = arith.mulf %187, %187 : vector<8x1xf32>
    %194 = arith.subf %192, %193 : vector<8x1xf32>
    %195 = vector.broadcast %187 : vector<8x1xf32> to vector<8x32xf32>
    %196 = arith.subf %181, %195 : vector<8x32xf32>
    %cst_76 = arith.constant 9.99999974E-6 : f32
    %197 = vector.broadcast %cst_76 : f32 to vector<8x1xf32>
    %198 = arith.addf %194, %197 : vector<8x1xf32>
    %199 = math.rsqrt %198 : vector<8x1xf32>
    %200 = vector.broadcast %199 : vector<8x1xf32> to vector<8x32xf32>
    %201 = arith.mulf %196, %200 : vector<8x32xf32>
    %202 = vector.broadcast %182 : vector<1x32xf32> to vector<8x32xf32>
    %203 = arith.mulf %201, %202 : vector<8x32xf32>
    %204 = vector.broadcast %183 : vector<1x32xf32> to vector<8x32xf32>
    %205 = arith.addf %203, %204 : vector<8x32xf32>
    %c0_77 = arith.constant 0 : index
    %c0_78 = arith.constant 0 : index
    %206 = vector.load %arg20[%c0_77, %c0_78] : memref<8x32xf32, #tpu.memory_space<vmem>>, vector<8x32xf32>
    tpu.vector_store %arg20[%c0_77, %c0_78], %205 {strides = array<i32>} : memref<8x32xf32, #tpu.memory_space<vmem>>, vector<8x32xf32>,
    return
  }
  func.func @transform_0(%arg0: i32) -> (i32, i32) {
    %c0_i32 = arith.constant 0 : i32
    %c0_i32_0 = arith.constant 0 : i32
    return %arg0, %c0_i32 : i32, i32
  }
  func.func @transform_1(%arg0: i32) -> (i32, i32) {
    %c0_i32 = arith.constant 0 : i32
    %c0_i32_0 = arith.constant 0 : i32
    return %arg0, %c0_i32 : i32, i32
  }
  func.func @transform_2(%arg0: i32) -> (i32, i32) {
    %c0_i32 = arith.constant 0 : i32
    %c0_i32_0 = arith.constant 0 : i32
    return %arg0, %c0_i32 : i32, i32
  }
  func.func @transform_3(%arg0: i32) -> (i32, i32, i32) {
    %c0_i32 = arith.constant 0 : i32
    %c0_i32_0 = arith.constant 0 : i32
    %c0_i32_1 = arith.constant 0 : i32
    %c0_i32_2 = arith.constant 0 : i32
    return %c0_i32, %c0_i32_0, %c0_i32_1 : i32, i32, i32
  }
  func.func @transform_4(%arg0: i32) -> (i32, i32, i32) {
    %c0_i32 = arith.constant 0 : i32
    %c0_i32_0 = arith.constant 0 : i32
    %c0_i32_1 = arith.constant 0 : i32
    %c0_i32_2 = arith.constant 0 : i32
    return %c0_i32, %c0_i32_0, %c0_i32_1 : i32, i32, i32
  }
  func.func @transform_5(%arg0: i32) -> (i32, i32, i32) {
    %c0_i32 = arith.constant 0 : i32
    %c0_i32_0 = arith.constant 0 : i32
    %c0_i32_1 = arith.constant 0 : i32
    %c0_i32_2 = arith.constant 0 : i32
    return %c0_i32, %c0_i32_0, %c0_i32_1 : i32, i32, i32
  }
  func.func @transform_6(%arg0: i32) -> (i32, i32, i32) {
    %c0_i32 = arith.constant 0 : i32
    %c0_i32_0 = arith.constant 0 : i32
    %c0_i32_1 = arith.constant 0 : i32
    %c0_i32_2 = arith.constant 0 : i32
    return %c0_i32, %c0_i32_0, %c0_i32_1 : i32, i32, i32
  }
  func.func @transform_7(%arg0: i32) -> (i32, i32, i32) {
    %c0_i32 = arith.constant 0 : i32
    %c0_i32_0 = arith.constant 0 : i32
    %c0_i32_1 = arith.constant 0 : i32
    %c0_i32_2 = arith.constant 0 : i32
    return %c0_i32, %c0_i32_0, %c0_i32_1 : i32, i32, i32
  }
  func.func @transform_8(%arg0: i32) -> (i32, i32, i32) {
    %c0_i32 = arith.constant 0 : i32
    %c0_i32_0 = arith.constant 0 : i32
    %c0_i32_1 = arith.constant 0 : i32
    %c0_i32_2 = arith.constant 0 : i32
    return %c0_i32, %c0_i32_0, %c0_i32_1 : i32, i32, i32
  }
  func.func @transform_9(%arg0: i32) -> (i32, i32, i32) {
    %c0_i32 = arith.constant 0 : i32
    %c0_i32_0 = arith.constant 0 : i32
    %c0_i32_1 = arith.constant 0 : i32
    %c0_i32_2 = arith.constant 0 : i32
    return %c0_i32, %c0_i32_0, %c0_i32_1 : i32, i32, i32
  }
  func.func @transform_10(%arg0: i32) -> (i32, i32) {
    %c0_i32 = arith.constant 0 : i32
    %c0_i32_0 = arith.constant 0 : i32
    %c0_i32_1 = arith.constant 0 : i32
    return %c0_i32, %c0_i32_0 : i32, i32
  }
  func.func @transform_11(%arg0: i32) -> (i32, i32) {
    %c0_i32 = arith.constant 0 : i32
    %c0_i32_0 = arith.constant 0 : i32
    %c0_i32_1 = arith.constant 0 : i32
    return %c0_i32, %c0_i32_0 : i32, i32
  }
  func.func @transform_12(%arg0: i32) -> (i32, i32) {
    %c0_i32 = arith.constant 0 : i32
    %c0_i32_0 = arith.constant 0 : i32
    %c0_i32_1 = arith.constant 0 : i32
    return %c0_i32, %c0_i32_0 : i32, i32
  }
  func.func @transform_13(%arg0: i32) -> (i32, i32) {
    %c0_i32 = arith.constant 0 : i32
    %c0_i32_0 = arith.constant 0 : i32
    %c0_i32_1 = arith.constant 0 : i32
    return %c0_i32, %c0_i32_0 : i32, i32
  }
  func.func @transform_14(%arg0: i32) -> (i32, i32) {
    %c0_i32 = arith.constant 0 : i32
    %c0_i32_0 = arith.constant 0 : i32
    %c0_i32_1 = arith.constant 0 : i32
    return %c0_i32, %c0_i32_0 : i32, i32
  }
  func.func @transform_15(%arg0: i32) -> (i32, i32) {
    %c0_i32 = arith.constant 0 : i32
    %c0_i32_0 = arith.constant 0 : i32
    %c0_i32_1 = arith.constant 0 : i32
    return %c0_i32, %c0_i32_0 : i32, i32
  }
  func.func @transform_16(%arg0: i32) -> (i32, i32) {
    %c0_i32 = arith.constant 0 : i32
    %c0_i32_0 = arith.constant 0 : i32
    %c0_i32_1 = arith.constant 0 : i32
    return %c0_i32, %c0_i32_0 : i32, i32
  }
  func.func @transform_17(%arg0: i32) -> (i32, i32) {
    %c0_i32 = arith.constant 0 : i32
    %c0_i32_0 = arith.constant 0 : i32
    %c0_i32_1 = arith.constant 0 : i32
    return %c0_i32, %c0_i32_0 : i32, i32
  }
  func.func @transform_18(%arg0: i32) -> (i32, i32) {
    %c0_i32 = arith.constant 0 : i32
    %c0_i32_0 = arith.constant 0 : i32
    %c0_i32_1 = arith.constant 0 : i32
    return %c0_i32, %c0_i32_0 : i32, i32
  }
  func.func @transform_19(%arg0: i32) -> (i32, i32) {
    %c0_i32 = arith.constant 0 : i32
    %c0_i32_0 = arith.constant 0 : i32
    return %arg0, %c0_i32 : i32, i32
  }
}

module attributes {stable_mosaic.version = 11 : i64} {
  func.func @_fusion_kernel(%arg0: i32, %arg1: memref<8x32xf32, #tpu.memory_space<vmem>>, %arg2: memref<8x32xf32, #tpu.memory_space<vmem>>, %arg3: memref<8x32xf32, #tpu.memory_space<vmem>>, %arg4: memref<1x32x32xbf16, #tpu.memory_space<vmem>>, %arg5: memref<1x1x32xf32, #tpu.memory_space<vmem>>, %arg6: memref<1x32x32xbf16, #tpu.memory_space<vmem>>, %arg7: memref<1x1x32xf32, #tpu.memory_space<vmem>>, %arg8: memref<1x32x32xbf16, #tpu.memory_space<vmem>>, %arg9: memref<1x1x32xf32, #tpu.memory_space<vmem>>, %arg10: memref<1x32x32xbf16, #tpu.memory_space<vmem>>, %arg11: memref<1x32xf32, #tpu.memory_space<vmem>>, %arg12: memref<1x32xf32, #tpu.memory_space<vmem>>, %arg13: memref<1x32xf32, #tpu.memory_space<vmem>>, %arg14: memref<32x64xbf16, #tpu.memory_space<vmem>>, %arg15: memref<1x64xf32, #tpu.memory_space<vmem>>, %arg16: memref<64x32xbf16, #tpu.memory_space<vmem>>, %arg17: memref<1x32xf32, #tpu.memory_space<vmem>>, %arg18: memref<1x32xf32, #tpu.memory_space<vmem>>, %arg19: memref<1x32xf32, #tpu.memory_space<vmem>>, %arg20: memref<8x32xf32, #tpu.memory_space<vmem>>, %arg21: memref<8x32xf32, #tpu.memory_space<vmem>>) attributes {dimension_semantics = [#tpu.dimension_semantics<parallel>], iteration_bounds = array<i64: 2>, scalar_prefetch = 0 : i64, scratch_operands = 1 : i64, tpu.core_type = #tpu.core_type<tc>, window_params = [{transform_indices = @transform_0, window_bounds = array<i64: 8, 32>}, {transform_indices = @transform_1, window_bounds = array<i64: 8, 32>}, {transform_indices = @transform_2, window_bounds = array<i64: 8, 32>}, {pipeline_mode = #tpu.pipeline_mode<synchronous>, transform_indices = @transform_3, window_bounds = array<i64: 1, 32, 32>}, {pipeline_mode = #tpu.pipeline_mode<synchronous>, transform_indices = @transform_4, window_bounds = array<i64: 1, 1, 32>}, {pipeline_mode = #tpu.pipeline_mode<synchronous>, transform_indices = @transform_5, window_bounds = array<i64: 1, 32, 32>}, {pipeline_mode = #tpu.pipeline_mode<synchronous>, transform_indices = @transform_6, window_bounds = array<i64: 1, 1, 32>}, {pipeline_mode = #tpu.pipeline_mode<synchronous>, transform_indices = @transform_7, window_bounds = array<i64: 1, 32, 32>}, {pipeline_mode = #tpu.pipeline_mode<synchronous>, transform_indices = @transform_8, window_bounds = array<i64: 1, 1, 32>}, {pipeline_mode = #tpu.pipeline_mode<synchronous>, transform_indices = @transform_9, window_bounds = array<i64: 1, 32, 32>}, {pipeline_mode = #tpu.pipeline_mode<synchronous>, transform_indices = @transform_10, window_bounds = array<i64: 1, 32>}, {pipeline_mode = #tpu.pipeline_mode<synchronous>, transform_indices = @transform_11, window_bounds = array<i64: 1, 32>}, {pipeline_mode = #tpu.pipeline_mode<synchronous>, transform_indices = @transform_12, window_bounds = array<i64: 1, 32>}, {pipeline_mode = #tpu.pipeline_mode<synchronous>, transform_indices = @transform_13, window_bounds = array<i64: 32, 64>}, {pipeline_mode = #tpu.pipeline_mode<synchronous>, transform_indices = @transform_14, window_bounds = array<i64: 1, 64>}, {pipeline_mode = #tpu.pipeline_mode<synchronous>, transform_indices = @transform_15, window_bounds = array<i64: 64, 32>}, {pipeline_mode = #tpu.pipeline_mode<synchronous>, transform_indices = @transform_16, window_bounds = array<i64: 1, 32>}, {pipeline_mode = #tpu.pipeline_mode<synchronous>, transform_indices = @transform_17, window_bounds = array<i64: 1, 32>}, {pipeline_mode = #tpu.pipeline_mode<synchronous>, transform_indices = @transform_18, window_bounds = array<i64: 1, 32>}, {transform_indices = @transform_19, window_bounds = array<i64: 8, 32>}]} {
    %c0 = arith.constant 0 : index
    %c0_0 = arith.constant 0 : index
    %0 = vector.load %arg1[%c0, %c0_0] : memref<8x32xf32, #tpu.memory_space<vmem>>, vector<8x32xf32>
    %1 = arith.truncf %0 : vector<8x32xf32> to vector<8x32xbf16>
    %c0_1 = arith.constant 0 : index
    %c0_2 = arith.constant 0 : index
    %2 = vector.load %arg2[%c0_1, %c0_2] : memref<8x32xf32, #tpu.memory_space<vmem>>, vector<8x32xf32>
    %3 = arith.truncf %2 : vector<8x32xf32> to vector<8x32xbf16>
    %c0_3 = arith.constant 0 : index
    %c0_4 = arith.constant 0 : index
    %4 = vector.load %arg3[%c0_3, %c0_4] : memref<8x32xf32, #tpu.memory_space<vmem>>, vector<8x32xf32>
    %5 = arith.truncf %4 : vector<8x32xf32> to vector<8x32xbf16>
    %c0_5 = arith.constant 0 : index
    %c0_6 = arith.constant 0 : index
    %6 = vector.load %arg11[%c0_5, %c0_6] : memref<1x32xf32, #tpu.memory_space<vmem>>, vector<1x32xf32>
    %7 = vector.shape_cast %6 : vector<1x32xf32> to vector<1x32xf32>
    %8 = vector.broadcast %7 : vector<1x32xf32> to vector<8x32xf32>
    %c0_i32 = arith.constant 0 : i32
    %9 = arith.index_cast %c0_i32 : i32 to index
    %c0_7 = arith.constant 0 : index
    %c0_8 = arith.constant 0 : index
    %10 = vector.load %arg4[%9, %c0_7, %c0_8] : memref<1x32x32xbf16, #tpu.memory_space<vmem>>, vector<1x32x32xbf16>
    %11 = vector.shape_cast %10 : vector<1x32x32xbf16> to vector<32x32xbf16>
    %cst = arith.constant dense<0.000000e+00> : vector<8x32xf32>
    %12 = tpu.matmul %1, %11, %cst {dimension_numbers = #tpu.dot_dimension_numbers<[1], [0], [0], [1], [0, 0, 1, 1], [], []>} : vector<8x32xbf16>, vector<32x32xbf16>, vector<8x32xf32> -> vector<8x32xf32>
    %13 = arith.index_cast %c0_i32 : i32 to index
    %c0_9 = arith.constant 0 : index
    %c0_10 = arith.constant 0 : index
    %14 = vector.load %arg5[%13, %c0_9, %c0_10] : memref<1x1x32xf32, #tpu.memory_space<vmem>>, vector<1x1x32xf32>
    %15 = vector.shape_cast %14 : vector<1x1x32xf32> to vector<1x32xf32>
    %16 = vector.broadcast %15 : vector<1x32xf32> to vector<8x32xf32>
    %17 = arith.addf %12, %16 : vector<8x32xf32>
    %18 = arith.index_cast %c0_i32 : i32 to index
    %c0_11 = arith.constant 0 : index
    %c0_12 = arith.constant 0 : index
    %19 = vector.load %arg6[%18, %c0_11, %c0_12] : memref<1x32x32xbf16, #tpu.memory_space<vmem>>, vector<1x32x32xbf16>
    %20 = vector.shape_cast %19 : vector<1x32x32xbf16> to vector<32x32xbf16>
    %cst_13 = arith.constant dense<0.000000e+00> : vector<8x32xf32>
    %21 = tpu.matmul %3, %20, %cst_13 {dimension_numbers = #tpu.dot_dimension_numbers<[1], [0], [0], [1], [0, 0, 1, 1], [], []>} : vector<8x32xbf16>, vector<32x32xbf16>, vector<8x32xf32> -> vector<8x32xf32>
    %22 = arith.index_cast %c0_i32 : i32 to index
    %c0_14 = arith.constant 0 : index
    %c0_15 = arith.constant 0 : index
    %23 = vector.load %arg7[%22, %c0_14, %c0_15] : memref<1x1x32xf32, #tpu.memory_space<vmem>>, vector<1x1x32xf32>
    %24 = vector.shape_cast %23 : vector<1x1x32xf32> to vector<1x32xf32>
    %25 = vector.broadcast %24 : vector<1x32xf32> to vector<8x32xf32>
    %26 = arith.addf %21, %25 : vector<8x32xf32>
    %27 = arith.index_cast %c0_i32 : i32 to index
    %c0_16 = arith.constant 0 : index
    %c0_17 = arith.constant 0 : index
    %28 = vector.load %arg8[%27, %c0_16, %c0_17] : memref<1x32x32xbf16, #tpu.memory_space<vmem>>, vector<1x32x32xbf16>
    %29 = vector.shape_cast %28 : vector<1x32x32xbf16> to vector<32x32xbf16>
    %cst_18 = arith.constant dense<0.000000e+00> : vector<8x32xf32>
    %30 = tpu.matmul %5, %29, %cst_18 {dimension_numbers = #tpu.dot_dimension_numbers<[1], [0], [0], [1], [0, 0, 1, 1], [], []>} : vector<8x32xbf16>, vector<32x32xbf16>, vector<8x32xf32> -> vector<8x32xf32>
    %31 = arith.index_cast %c0_i32 : i32 to index
    %c0_19 = arith.constant 0 : index
    %c0_20 = arith.constant 0 : index
    %32 = vector.load %arg9[%31, %c0_19, %c0_20] : memref<1x1x32xf32, #tpu.memory_space<vmem>>, vector<1x1x32xf32>
    %33 = vector.shape_cast %32 : vector<1x1x32xf32> to vector<1x32xf32>
    %34 = vector.broadcast %33 : vector<1x32xf32> to vector<8x32xf32>
    %35 = arith.addf %30, %34 : vector<8x32xf32>
    %36 = vector.extract_strided_slice %17 {offsets = [0, 0], sizes = [8, 8], strides = [1, 1]} : vector<8x32xf32> to vector<8x8xf32>
    %37 = arith.truncf %36 : vector<8x8xf32> to vector<8x8xbf16>
    %38 = vector.shape_cast %37 : vector<8x8xbf16> to vector<1x8x8xbf16>
    %39 = vector.extract_strided_slice %26 {offsets = [0, 0], sizes = [8, 8], strides = [1, 1]} : vector<8x32xf32> to vector<8x8xf32>
    %40 = arith.truncf %39 : vector<8x8xf32> to vector<8x8xbf16>
    %41 = vector.shape_cast %40 : vector<8x8xbf16> to vector<1x8x8xbf16>
    %42 = vector.extract_strided_slice %35 {offsets = [0, 0], sizes = [8, 8], strides = [1, 1]} : vector<8x32xf32> to vector<8x8xf32>
    %43 = arith.truncf %42 : vector<8x8xf32> to vector<8x8xbf16>
    %44 = vector.shape_cast %43 : vector<8x8xbf16> to vector<1x8x8xbf16>
    "tpu.trace_start"() <{level = 10 : i32, message = "bqd,bkd->bqk"}> : () -> ()
    %cst_21 = arith.constant dense<0.000000e+00> : vector<1x8x8xf32>
    %45 = tpu.matmul %38, %41, %cst_21 {dimension_numbers = #tpu.dot_dimension_numbers<[2], [2], [1], [1], [0, 0, 0, 1, 1, 1], [0], [0]>} : vector<1x8x8xbf16>, vector<1x8x8xbf16>, vector<1x8x8xf32> -> vector<1x8x8xf32>
    "tpu.trace_stop"() : () -> ()
    %cst_22 = arith.constant dense<0xFF800000> : vector<1x8xf32>
    %46 = vector.multi_reduction <maximumf>, %45, %cst_22 [2] : vector<1x8x8xf32> to vector<1x8xf32>
    %47 = vector.shape_cast %46 : vector<1x8xf32> to vector<1x8x1xf32>
    %48 = vector.broadcast %47 : vector<1x8x1xf32> to vector<1x8x8xf32>
    %49 = arith.subf %45, %48 : vector<1x8x8xf32>
    %50 = math.exp %49 : vector<1x8x8xf32>
    %cst_23 = arith.constant dense<0.000000e+00> : vector<1x8xf32>
    %51 = vector.multi_reduction <add>, %50, %cst_23 [2] : vector<1x8x8xf32> to vector<1x8xf32>
    %52 = vector.shape_cast %51 : vector<1x8xf32> to vector<1x8x1xf32>
    %53 = tpu.reciprocal %52 {approx = true} : vector<1x8x1xf32> -> vector<1x8x1xf32>
    %54 = vector.broadcast %53 : vector<1x8x1xf32> to vector<1x8x8xf32>
    %55 = arith.mulf %50, %54 : vector<1x8x8xf32>
    %56 = arith.truncf %55 : vector<1x8x8xf32> to vector<1x8x8xbf16>
    "tpu.trace_start"() <{level = 10 : i32, message = "bqk,bkd->bqd"}> : () -> ()
    %cst_24 = arith.constant dense<0.000000e+00> : vector<1x8x8xf32>
    %57 = tpu.matmul %56, %44, %cst_24 {dimension_numbers = #tpu.dot_dimension_numbers<[2], [1], [1], [2], [0, 0, 0, 1, 1, 2], [0], [0]>} : vector<1x8x8xbf16>, vector<1x8x8xbf16>, vector<1x8x8xf32> -> vector<1x8x8xf32>
    "tpu.trace_stop"() : () -> ()
    %58 = vector.shape_cast %57 : vector<1x8x8xf32> to vector<8x8xf32>
    %c0_25 = arith.constant 0 : index
    %c0_26 = arith.constant 0 : index
    %59 = vector.load %arg21[%c0_25, %c0_26] : memref<8x32xf32, #tpu.memory_space<vmem>>, vector<8x8xf32>
    tpu.vector_store %arg21[%c0_25, %c0_26], %58 {strides = array<i32>} : memref<8x32xf32, #tpu.memory_space<vmem>>, vector<8x8xf32>,
    %60 = vector.extract_strided_slice %17 {offsets = [0, 8], sizes = [8, 8], strides = [1, 1]} : vector<8x32xf32> to vector<8x8xf32>
    %61 = arith.truncf %60 : vector<8x8xf32> to vector<8x8xbf16>
    %62 = vector.shape_cast %61 : vector<8x8xbf16> to vector<1x8x8xbf16>
    %63 = vector.extract_strided_slice %26 {offsets = [0, 8], sizes = [8, 8], strides = [1, 1]} : vector<8x32xf32> to vector<8x8xf32>
    %64 = arith.truncf %63 : vector<8x8xf32> to vector<8x8xbf16>
    %65 = vector.shape_cast %64 : vector<8x8xbf16> to vector<1x8x8xbf16>
    %66 = vector.extract_strided_slice %35 {offsets = [0, 8], sizes = [8, 8], strides = [1, 1]} : vector<8x32xf32> to vector<8x8xf32>
    %67 = arith.truncf %66 : vector<8x8xf32> to vector<8x8xbf16>
    %68 = vector.shape_cast %67 : vector<8x8xbf16> to vector<1x8x8xbf16>
    "tpu.trace_start"() <{level = 10 : i32, message = "bqd,bkd->bqk"}> : () -> ()
    %cst_27 = arith.constant dense<0.000000e+00> : vector<1x8x8xf32>
    %69 = tpu.matmul %62, %65, %cst_27 {dimension_numbers = #tpu.dot_dimension_numbers<[2], [2], [1], [1], [0, 0, 0, 1, 1, 1], [0], [0]>} : vector<1x8x8xbf16>, vector<1x8x8xbf16>, vector<1x8x8xf32> -> vector<1x8x8xf32>
    "tpu.trace_stop"() : () -> ()
    %cst_28 = arith.constant dense<0xFF800000> : vector<1x8xf32>
    %70 = vector.multi_reduction <maximumf>, %69, %cst_28 [2] : vector<1x8x8xf32> to vector<1x8xf32>
    %71 = vector.shape_cast %70 : vector<1x8xf32> to vector<1x8x1xf32>
    %72 = vector.broadcast %71 : vector<1x8x1xf32> to vector<1x8x8xf32>
    %73 = arith.subf %69, %72 : vector<1x8x8xf32>
    %74 = math.exp %73 : vector<1x8x8xf32>
    %cst_29 = arith.constant dense<0.000000e+00> : vector<1x8xf32>
    %75 = vector.multi_reduction <add>, %74, %cst_29 [2] : vector<1x8x8xf32> to vector<1x8xf32>
    %76 = vector.shape_cast %75 : vector<1x8xf32> to vector<1x8x1xf32>
    %77 = tpu.reciprocal %76 {approx = true} : vector<1x8x1xf32> -> vector<1x8x1xf32>
    %78 = vector.broadcast %77 : vector<1x8x1xf32> to vector<1x8x8xf32>
    %79 = arith.mulf %74, %78 : vector<1x8x8xf32>
    %80 = arith.truncf %79 : vector<1x8x8xf32> to vector<1x8x8xbf16>
    "tpu.trace_start"() <{level = 10 : i32, message = "bqk,bkd->bqd"}> : () -> ()
    %cst_30 = arith.constant dense<0.000000e+00> : vector<1x8x8xf32>
    %81 = tpu.matmul %80, %68, %cst_30 {dimension_numbers = #tpu.dot_dimension_numbers<[2], [1], [1], [2], [0, 0, 0, 1, 1, 2], [0], [0]>} : vector<1x8x8xbf16>, vector<1x8x8xbf16>, vector<1x8x8xf32> -> vector<1x8x8xf32>
    "tpu.trace_stop"() : () -> ()
    %82 = vector.shape_cast %81 : vector<1x8x8xf32> to vector<8x8xf32>
    %c0_31 = arith.constant 0 : index
    %c8 = arith.constant 8 : index
    %83 = vector.load %arg21[%c0_31, %c8] : memref<8x32xf32, #tpu.memory_space<vmem>>, vector<8x8xf32>
    tpu.vector_store %arg21[%c0_31, %c8], %82 {strides = array<i32>} : memref<8x32xf32, #tpu.memory_space<vmem>>, vector<8x8xf32>,
    %84 = vector.extract_strided_slice %17 {offsets = [0, 16], sizes = [8, 8], strides = [1, 1]} : vector<8x32xf32> to vector<8x8xf32>
    %85 = arith.truncf %84 : vector<8x8xf32> to vector<8x8xbf16>
    %86 = vector.shape_cast %85 : vector<8x8xbf16> to vector<1x8x8xbf16>
    %87 = vector.extract_strided_slice %26 {offsets = [0, 16], sizes = [8, 8], strides = [1, 1]} : vector<8x32xf32> to vector<8x8xf32>
    %88 = arith.truncf %87 : vector<8x8xf32> to vector<8x8xbf16>
    %89 = vector.shape_cast %88 : vector<8x8xbf16> to vector<1x8x8xbf16>
    %90 = vector.extract_strided_slice %35 {offsets = [0, 16], sizes = [8, 8], strides = [1, 1]} : vector<8x32xf32> to vector<8x8xf32>
    %91 = arith.truncf %90 : vector<8x8xf32> to vector<8x8xbf16>
    %92 = vector.shape_cast %91 : vector<8x8xbf16> to vector<1x8x8xbf16>
    "tpu.trace_start"() <{level = 10 : i32, message = "bqd,bkd->bqk"}> : () -> ()
    %cst_32 = arith.constant dense<0.000000e+00> : vector<1x8x8xf32>
    %93 = tpu.matmul %86, %89, %cst_32 {dimension_numbers = #tpu.dot_dimension_numbers<[2], [2], [1], [1], [0, 0, 0, 1, 1, 1], [0], [0]>} : vector<1x8x8xbf16>, vector<1x8x8xbf16>, vector<1x8x8xf32> -> vector<1x8x8xf32>
    "tpu.trace_stop"() : () -> ()
    %cst_33 = arith.constant dense<0xFF800000> : vector<1x8xf32>
    %94 = vector.multi_reduction <maximumf>, %93, %cst_33 [2] : vector<1x8x8xf32> to vector<1x8xf32>
    %95 = vector.shape_cast %94 : vector<1x8xf32> to vector<1x8x1xf32>
    %96 = vector.broadcast %95 : vector<1x8x1xf32> to vector<1x8x8xf32>
    %97 = arith.subf %93, %96 : vector<1x8x8xf32>
    %98 = math.exp %97 : vector<1x8x8xf32>
    %cst_34 = arith.constant dense<0.000000e+00> : vector<1x8xf32>
    %99 = vector.multi_reduction <add>, %98, %cst_34 [2] : vector<1x8x8xf32> to vector<1x8xf32>
    %100 = vector.shape_cast %99 : vector<1x8xf32> to vector<1x8x1xf32>
    %101 = tpu.reciprocal %100 {approx = true} : vector<1x8x1xf32> -> vector<1x8x1xf32>
    %102 = vector.broadcast %101 : vector<1x8x1xf32> to vector<1x8x8xf32>
    %103 = arith.mulf %98, %102 : vector<1x8x8xf32>
    %104 = arith.truncf %103 : vector<1x8x8xf32> to vector<1x8x8xbf16>
    "tpu.trace_start"() <{level = 10 : i32, message = "bqk,bkd->bqd"}> : () -> ()
    %cst_35 = arith.constant dense<0.000000e+00> : vector<1x8x8xf32>
    %105 = tpu.matmul %104, %92, %cst_35 {dimension_numbers = #tpu.dot_dimension_numbers<[2], [1], [1], [2], [0, 0, 0, 1, 1, 2], [0], [0]>} : vector<1x8x8xbf16>, vector<1x8x8xbf16>, vector<1x8x8xf32> -> vector<1x8x8xf32>
    "tpu.trace_stop"() : () -> ()
    %106 = vector.shape_cast %105 : vector<1x8x8xf32> to vector<8x8xf32>
    %c0_36 = arith.constant 0 : index
    %c16 = arith.constant 16 : index
    %107 = vector.load %arg21[%c0_36, %c16] : memref<8x32xf32, #tpu.memory_space<vmem>>, vector<8x8xf32>
    tpu.vector_store %arg21[%c0_36, %c16], %106 {strides = array<i32>} : memref<8x32xf32, #tpu.memory_space<vmem>>, vector<8x8xf32>,
    %108 = vector.extract_strided_slice %17 {offsets = [0, 24], sizes = [8, 8], strides = [1, 1]} : vector<8x32xf32> to vector<8x8xf32>
    %109 = arith.truncf %108 : vector<8x8xf32> to vector<8x8xbf16>
    %110 = vector.shape_cast %109 : vector<8x8xbf16> to vector<1x8x8xbf16>
    %111 = vector.extract_strided_slice %26 {offsets = [0, 24], sizes = [8, 8], strides = [1, 1]} : vector<8x32xf32> to vector<8x8xf32>
    %112 = arith.truncf %111 : vector<8x8xf32> to vector<8x8xbf16>
    %113 = vector.shape_cast %112 : vector<8x8xbf16> to vector<1x8x8xbf16>
    %114 = vector.extract_strided_slice %35 {offsets = [0, 24], sizes = [8, 8], strides = [1, 1]} : vector<8x32xf32> to vector<8x8xf32>
    %115 = arith.truncf %114 : vector<8x8xf32> to vector<8x8xbf16>
    %116 = vector.shape_cast %115 : vector<8x8xbf16> to vector<1x8x8xbf16>
    "tpu.trace_start"() <{level = 10 : i32, message = "bqd,bkd->bqk"}> : () -> ()
    %cst_37 = arith.constant dense<0.000000e+00> : vector<1x8x8xf32>
    %117 = tpu.matmul %110, %113, %cst_37 {dimension_numbers = #tpu.dot_dimension_numbers<[2], [2], [1], [1], [0, 0, 0, 1, 1, 1], [0], [0]>} : vector<1x8x8xbf16>, vector<1x8x8xbf16>, vector<1x8x8xf32> -> vector<1x8x8xf32>
    "tpu.trace_stop"() : () -> ()
    %cst_38 = arith.constant dense<0xFF800000> : vector<1x8xf32>
    %118 = vector.multi_reduction <maximumf>, %117, %cst_38 [2] : vector<1x8x8xf32> to vector<1x8xf32>
    %119 = vector.shape_cast %118 : vector<1x8xf32> to vector<1x8x1xf32>
    %120 = vector.broadcast %119 : vector<1x8x1xf32> to vector<1x8x8xf32>
    %121 = arith.subf %117, %120 : vector<1x8x8xf32>
    %122 = math.exp %121 : vector<1x8x8xf32>
    %cst_39 = arith.constant dense<0.000000e+00> : vector<1x8xf32>
    %123 = vector.multi_reduction <add>, %122, %cst_39 [2] : vector<1x8x8xf32> to vector<1x8xf32>
    %124 = vector.shape_cast %123 : vector<1x8xf32> to vector<1x8x1xf32>
    %125 = tpu.reciprocal %124 {approx = true} : vector<1x8x1xf32> -> vector<1x8x1xf32>
    %126 = vector.broadcast %125 : vector<1x8x1xf32> to vector<1x8x8xf32>
    %127 = arith.mulf %122, %126 : vector<1x8x8xf32>
    %128 = arith.truncf %127 : vector<1x8x8xf32> to vector<1x8x8xbf16>
    "tpu.trace_start"() <{level = 10 : i32, message = "bqk,bkd->bqd"}> : () -> ()
    %cst_40 = arith.constant dense<0.000000e+00> : vector<1x8x8xf32>
    %129 = tpu.matmul %128, %116, %cst_40 {dimension_numbers = #tpu.dot_dimension_numbers<[2], [1], [1], [2], [0, 0, 0, 1, 1, 2], [0], [0]>} : vector<1x8x8xbf16>, vector<1x8x8xbf16>, vector<1x8x8xf32> -> vector<1x8x8xf32>
    "tpu.trace_stop"() : () -> ()
    %130 = vector.shape_cast %129 : vector<1x8x8xf32> to vector<8x8xf32>
    %c0_41 = arith.constant 0 : index
    %c24 = arith.constant 24 : index
    %131 = vector.load %arg21[%c0_41, %c24] : memref<8x32xf32, #tpu.memory_space<vmem>>, vector<8x8xf32>
    tpu.vector_store %arg21[%c0_41, %c24], %130 {strides = array<i32>} : memref<8x32xf32, #tpu.memory_space<vmem>>, vector<8x8xf32>,
    %c0_42 = arith.constant 0 : index
    %c0_43 = arith.constant 0 : index
    %132 = vector.load %arg21[%c0_42, %c0_43] : memref<8x32xf32, #tpu.memory_space<vmem>>, vector<8x32xf32>
    %133 = arith.truncf %132 : vector<8x32xf32> to vector<8x32xbf16>
    %134 = arith.index_cast %c0_i32 : i32 to index
    %c0_44 = arith.constant 0 : index
    %c0_45 = arith.constant 0 : index
    %135 = vector.load %arg10[%134, %c0_44, %c0_45] : memref<1x32x32xbf16, #tpu.memory_space<vmem>>, vector<1x32x32xbf16>
    %136 = vector.shape_cast %135 : vector<1x32x32xbf16> to vector<32x32xbf16>
    %cst_46 = arith.constant dense<0.000000e+00> : vector<8x32xf32>
    %137 = tpu.matmul %133, %136, %cst_46 {dimension_numbers = #tpu.dot_dimension_numbers<[1], [0], [0], [1], [0, 0, 1, 1], [], []>} : vector<8x32xbf16>, vector<32x32xbf16>, vector<8x32xf32> -> vector<8x32xf32>
    %138 = arith.addf %8, %137 : vector<8x32xf32>
    %c1_i32 = arith.constant 1 : i32
    %139 = arith.addf %0, %138 : vector<8x32xf32>
    %c0_47 = arith.constant 0 : index
    %c0_48 = arith.constant 0 : index
    %140 = vector.load %arg12[%c0_47, %c0_48] : memref<1x32xf32, #tpu.memory_space<vmem>>, vector<1x32xf32>
    %c0_49 = arith.constant 0 : index
    %c0_50 = arith.constant 0 : index
    %141 = vector.load %arg13[%c0_49, %c0_50] : memref<1x32xf32, #tpu.memory_space<vmem>>, vector<1x32xf32>
    %cst_51 = arith.constant dense<0.000000e+00> : vector<8xf32>
    %142 = vector.multi_reduction <add>, %139, %cst_51 [1] : vector<8x32xf32> to vector<8xf32>
    %143 = vector.shape_cast %142 : vector<8xf32> to vector<8x1xf32>
    %cst_52 = arith.constant 3.200000e+01 : f32
    %144 = vector.broadcast %cst_52 : f32 to vector<8x1xf32>
    %145 = arith.divf %143, %144 : vector<8x1xf32>
    %146 = arith.mulf %139, %139 : vector<8x32xf32>
    %cst_53 = arith.constant dense<0.000000e+00> : vector<8xf32>
    %147 = vector.multi_reduction <add>, %146, %cst_53 [1] : vector<8x32xf32> to vector<8xf32>
    %148 = vector.shape_cast %147 : vector<8xf32> to vector<8x1xf32>
    %cst_54 = arith.constant 3.200000e+01 : f32
    %149 = vector.broadcast %cst_54 : f32 to vector<8x1xf32>
    %150 = arith.divf %148, %149 : vector<8x1xf32>
    %151 = arith.mulf %145, %145 : vector<8x1xf32>
    %152 = arith.subf %150, %151 : vector<8x1xf32>
    %153 = vector.broadcast %145 : vector<8x1xf32> to vector<8x32xf32>
    %154 = arith.subf %139, %153 : vector<8x32xf32>
    %cst_55 = arith.constant 9.99999974E-6 : f32
    %155 = vector.broadcast %cst_55 : f32 to vector<8x1xf32>
    %156 = arith.addf %152, %155 : vector<8x1xf32>
    %157 = math.rsqrt %156 : vector<8x1xf32>
    %158 = vector.broadcast %157 : vector<8x1xf32> to vector<8x32xf32>
    %159 = arith.mulf %154, %158 : vector<8x32xf32>
    %160 = vector.broadcast %140 : vector<1x32xf32> to vector<8x32xf32>
    %161 = arith.mulf %159, %160 : vector<8x32xf32>
    %162 = vector.broadcast %141 : vector<1x32xf32> to vector<8x32xf32>
    %163 = arith.addf %161, %162 : vector<8x32xf32>
    %164 = arith.truncf %163 : vector<8x32xf32> to vector<8x32xbf16>
    %c0_56 = arith.constant 0 : index
    %c0_57 = arith.constant 0 : index
    %165 = vector.load %arg14[%c0_56, %c0_57] : memref<32x64xbf16, #tpu.memory_space<vmem>>, vector<32x64xbf16>
    %cst_58 = arith.constant dense<0.000000e+00> : vector<8x64xf32>
    %166 = tpu.matmul %164, %165, %cst_58 {dimension_numbers = #tpu.dot_dimension_numbers<[1], [0], [0], [1], [0, 0, 1, 1], [], []>} : vector<8x32xbf16>, vector<32x64xbf16>, vector<8x64xf32> -> vector<8x64xf32>
    %c0_59 = arith.constant 0 : index
    %c0_60 = arith.constant 0 : index
    %167 = vector.load %arg15[%c0_59, %c0_60] : memref<1x64xf32, #tpu.memory_space<vmem>>, vector<1x64xf32>
    %168 = vector.broadcast %167 : vector<1x64xf32> to vector<8x64xf32>
    %169 = arith.addf %166, %168 : vector<8x64xf32>
    %cst_61 = arith.constant 0.000000e+00 : f32
    %170 = vector.broadcast %cst_61 : f32 to vector<8x64xf32>
    %171 = arith.cmpf oge, %169, %170 : vector<8x64xf32>
    %cst_62 = arith.constant 0.00999999977 : f32
    %172 = vector.broadcast %cst_62 : f32 to vector<8x64xf32>
    %173 = arith.mulf %172, %169 : vector<8x64xf32>
    %174 = arith.select %171, %169, %173 : vector<8x64xi1>, vector<8x64xf32>
    %175 = arith.truncf %174 : vector<8x64xf32> to vector<8x64xbf16>
    %c0_63 = arith.constant 0 : index
    %c0_64 = arith.constant 0 : index
    %176 = vector.load %arg16[%c0_63, %c0_64] : memref<64x32xbf16, #tpu.memory_space<vmem>>, vector<64x32xbf16>
    %cst_65 = arith.constant dense<0.000000e+00> : vector<8x32xf32>
    %177 = tpu.matmul %175, %176, %cst_65 {dimension_numbers = #tpu.dot_dimension_numbers<[1], [0], [0], [1], [0, 0, 1, 1], [], []>} : vector<8x64xbf16>, vector<64x32xbf16>, vector<8x32xf32> -> vector<8x32xf32>
    %c0_66 = arith.constant 0 : index
    %c0_67 = arith.constant 0 : index
    %178 = vector.load %arg17[%c0_66, %c0_67] : memref<1x32xf32, #tpu.memory_space<vmem>>, vector<1x32xf32>
    %179 = vector.broadcast %178 : vector<1x32xf32> to vector<8x32xf32>
    %180 = arith.addf %177, %179 : vector<8x32xf32>
    %181 = arith.addf %163, %180 : vector<8x32xf32>
    %c0_68 = arith.constant 0 : index
    %c0_69 = arith.constant 0 : index
    %182 = vector.load %arg18[%c0_68, %c0_69] : memref<1x32xf32, #tpu.memory_space<vmem>>, vector<1x32xf32>
    %c0_70 = arith.constant 0 : index
    %c0_71 = arith.constant 0 : index
    %183 = vector.load %arg19[%c0_70, %c0_71] : memref<1x32xf32, #tpu.memory_space<vmem>>, vector<1x32xf32>
    %cst_72 = arith.constant dense<0.000000e+00> : vector<8xf32>
    %184 = vector.multi_reduction <add>, %181, %cst_72 [1] : vector<8x32xf32> to vector<8xf32>
    %185 = vector.shape_cast %184 : vector<8xf32> to vector<8x1xf32>
    %cst_73 = arith.constant 3.200000e+01 : f32
    %186 = vector.broadcast %cst_73 : f32 to vector<8x1xf32>
    %187 = arith.divf %185, %186 : vector<8x1xf32>
    %188 = arith.mulf %181, %181 : vector<8x32xf32>
    %cst_74 = arith.constant dense<0.000000e+00> : vector<8xf32>
    %189 = vector.multi_reduction <add>, %188, %cst_74 [1] : vector<8x32xf32> to vector<8xf32>
    %190 = vector.shape_cast %189 : vector<8xf32> to vector<8x1xf32>
    %cst_75 = arith.constant 3.200000e+01 : f32
    %191 = vector.broadcast %cst_75 : f32 to vector<8x1xf32>
    %192 = arith.divf %190, %191 : vector<8x1xf32>
    %193 = arith.mulf %187, %187 : vector<8x1xf32>
    %194 = arith.subf %192, %193 : vector<8x1xf32>
    %195 = vector.broadcast %187 : vector<8x1xf32> to vector<8x32xf32>
    %196 = arith.subf %181, %195 : vector<8x32xf32>
    %cst_76 = arith.constant 9.99999974E-6 : f32
    %197 = vector.broadcast %cst_76 : f32 to vector<8x1xf32>
    %198 = arith.addf %194, %197 : vector<8x1xf32>
    %199 = math.rsqrt %198 : vector<8x1xf32>
    %200 = vector.broadcast %199 : vector<8x1xf32> to vector<8x32xf32>
    %201 = arith.mulf %196, %200 : vector<8x32xf32>
    %202 = vector.broadcast %182 : vector<1x32xf32> to vector<8x32xf32>
    %203 = arith.mulf %201, %202 : vector<8x32xf32>
    %204 = vector.broadcast %183 : vector<1x32xf32> to vector<8x32xf32>
    %205 = arith.addf %203, %204 : vector<8x32xf32>
    %c0_77 = arith.constant 0 : index
    %c0_78 = arith.constant 0 : index
    %206 = vector.load %arg20[%c0_77, %c0_78] : memref<8x32xf32, #tpu.memory_space<vmem>>, vector<8x32xf32>
    tpu.vector_store %arg20[%c0_77, %c0_78], %205 {strides = array<i32>} : memref<8x32xf32, #tpu.memory_space<vmem>>, vector<8x32xf32>,
    return
  }
  func.func @transform_0(%arg0: i32) -> (i32, i32) {
    %c0_i32 = arith.constant 0 : i32
    %c0_i32_0 = arith.constant 0 : i32
    return %arg0, %c0_i32 : i32, i32
  }
  func.func @transform_1(%arg0: i32) -> (i32, i32) {
    %c0_i32 = arith.constant 0 : i32
    %c0_i32_0 = arith.constant 0 : i32
    return %arg0, %c0_i32 : i32, i32
  }
  func.func @transform_2(%arg0: i32) -> (i32, i32) {
    %c0_i32 = arith.constant 0 : i32
    %c0_i32_0 = arith.constant 0 : i32
    return %arg0, %c0_i32 : i32, i32
  }
  func.func @transform_3(%arg0: i32) -> (i32, i32, i32) {
    %c0_i32 = arith.constant 0 : i32
    %c0_i32_0 = arith.constant 0 : i32
    %c0_i32_1 = arith.constant 0 : i32
    %c0_i32_2 = arith.constant 0 : i32
    return %c0_i32, %c0_i32_0, %c0_i32_1 : i32, i32, i32
  }
  func.func @transform_4(%arg0: i32) -> (i32, i32, i32) {
    %c0_i32 = arith.constant 0 : i32
    %c0_i32_0 = arith.constant 0 : i32
    %c0_i32_1 = arith.constant 0 : i32
    %c0_i32_2 = arith.constant 0 : i32
    return %c0_i32, %c0_i32_0, %c0_i32_1 : i32, i32, i32
  }
  func.func @transform_5(%arg0: i32) -> (i32, i32, i32) {
    %c0_i32 = arith.constant 0 : i32
    %c0_i32_0 = arith.constant 0 : i32
    %c0_i32_1 = arith.constant 0 : i32
    %c0_i32_2 = arith.constant 0 : i32
    return %c0_i32, %c0_i32_0, %c0_i32_1 : i32, i32, i32
  }
  func.func @transform_6(%arg0: i32) -> (i32, i32, i32) {
    %c0_i32 = arith.constant 0 : i32
    %c0_i32_0 = arith.constant 0 : i32
    %c0_i32_1 = arith.constant 0 : i32
    %c0_i32_2 = arith.constant 0 : i32
    return %c0_i32, %c0_i32_0, %c0_i32_1 : i32, i32, i32
  }
  func.func @transform_7(%arg0: i32) -> (i32, i32, i32) {
    %c0_i32 = arith.constant 0 : i32
    %c0_i32_0 = arith.constant 0 : i32
    %c0_i32_1 = arith.constant 0 : i32
    %c0_i32_2 = arith.constant 0 : i32
    return %c0_i32, %c0_i32_0, %c0_i32_1 : i32, i32, i32
  }
  func.func @transform_8(%arg0: i32) -> (i32, i32, i32) {
    %c0_i32 = arith.constant 0 : i32
    %c0_i32_0 = arith.constant 0 : i32
    %c0_i32_1 = arith.constant 0 : i32
    %c0_i32_2 = arith.constant 0 : i32
    return %c0_i32, %c0_i32_0, %c0_i32_1 : i32, i32, i32
  }
  func.func @transform_9(%arg0: i32) -> (i32, i32, i32) {
    %c0_i32 = arith.constant 0 : i32
    %c0_i32_0 = arith.constant 0 : i32
    %c0_i32_1 = arith.constant 0 : i32
    %c0_i32_2 = arith.constant 0 : i32
    return %c0_i32, %c0_i32_0, %c0_i32_1 : i32, i32, i32
  }
  func.func @transform_10(%arg0: i32) -> (i32, i32) {
    %c0_i32 = arith.constant 0 : i32
    %c0_i32_0 = arith.constant 0 : i32
    %c0_i32_1 = arith.constant 0 : i32
    return %c0_i32, %c0_i32_0 : i32, i32
  }
  func.func @transform_11(%arg0: i32) -> (i32, i32) {
    %c0_i32 = arith.constant 0 : i32
    %c0_i32_0 = arith.constant 0 : i32
    %c0_i32_1 = arith.constant 0 : i32
    return %c0_i32, %c0_i32_0 : i32, i32
  }
  func.func @transform_12(%arg0: i32) -> (i32, i32) {
    %c0_i32 = arith.constant 0 : i32
    %c0_i32_0 = arith.constant 0 : i32
    %c0_i32_1 = arith.constant 0 : i32
    return %c0_i32, %c0_i32_0 : i32, i32
  }
  func.func @transform_13(%arg0: i32) -> (i32, i32) {
    %c0_i32 = arith.constant 0 : i32
    %c0_i32_0 = arith.constant 0 : i32
    %c0_i32_1 = arith.constant 0 : i32
    return %c0_i32, %c0_i32_0 : i32, i32
  }
  func.func @transform_14(%arg0: i32) -> (i32, i32) {
    %c0_i32 = arith.constant 0 : i32
    %c0_i32_0 = arith.constant 0 : i32
    %c0_i32_1 = arith.constant 0 : i32
    return %c0_i32, %c0_i32_0 : i32, i32
  }
  func.func @transform_15(%arg0: i32) -> (i32, i32) {
    %c0_i32 = arith.constant 0 : i32
    %c0_i32_0 = arith.constant 0 : i32
    %c0_i32_1 = arith.constant 0 : i32
    return %c0_i32, %c0_i32_0 : i32, i32
  }
  func.func @transform_16(%arg0: i32) -> (i32, i32) {
    %c0_i32 = arith.constant 0 : i32
    %c0_i32_0 = arith.constant 0 : i32
    %c0_i32_1 = arith.constant 0 : i32
    return %c0_i32, %c0_i32_0 : i32, i32
  }
  func.func @transform_17(%arg0: i32) -> (i32, i32) {
    %c0_i32 = arith.constant 0 : i32
    %c0_i32_0 = arith.constant 0 : i32
    %c0_i32_1 = arith.constant 0 : i32
    return %c0_i32, %c0_i32_0 : i32, i32
  }
  func.func @transform_18(%arg0: i32) -> (i32, i32) {
    %c0_i32 = arith.constant 0 : i32
    %c0_i32_0 = arith.constant 0 : i32
    %c0_i32_1 = arith.constant 0 : i32
    return %c0_i32, %c0_i32_0 : i32, i32
  }
  func.func @transform_19(%arg0: i32) -> (i32, i32) {
    %c0_i32 = arith.constant 0 : i32
    %c0_i32_0 = arith.constant 0 : i32
    return %arg0, %c0_i32 : i32, i32
  }
}

</mosaic_0001>

<llo_original>
// kernel: tpu_custom_call.1
$region0: #{tpu_custom_call.1}
  #allocation0 [shape = 'u32[]', space=smem, size = 0x4, offset = 0x4, fixed_abs, tag = 'smem constant byte address 0x4 - core index']
  #allocation1 [shape = 'u32[72,128]{1,0:T(1,128)}', space=vmem, size = 0x9000, scoped, tag = 'internal scratch']
  #allocation2 [shape = 'f32[8,32]{1,0:T(8,128)}', space=vmem, size = 0x1000, scoped, tag = 'scratch operand']
  %s0 = inlined_call_operand.vmem [shape: f32[16,32], index: 0, kind: input, shape index: {}]
  %s1 = inlined_call_operand.vmem [shape: f32[16,32], index: 1, kind: input, shape index: {}]
  %s2 = inlined_call_operand.vmem [shape: f32[16,32], index: 2, kind: input, shape index: {}]
  %s3 = inlined_call_operand.hbm [shape: bf16[1,32,32], index: 3, kind: input, shape index: {}]
  %s4 = inlined_call_operand.vmem [shape: f32[1,1,32], index: 4, kind: input, shape index: {}]
  %s5 = inlined_call_operand.hbm [shape: bf16[1,32,32], index: 5, kind: input, shape index: {}]
  %s6 = inlined_call_operand.vmem [shape: f32[1,1,32], index: 6, kind: input, shape index: {}]
  %s7 = inlined_call_operand.hbm [shape: bf16[1,32,32], index: 7, kind: input, shape index: {}]
  %s8 = inlined_call_operand.vmem [shape: f32[1,1,32], index: 8, kind: input, shape index: {}]
  %s9 = inlined_call_operand.hbm [shape: bf16[1,32,32], index: 9, kind: input, shape index: {}]
  %s10 = inlined_call_operand.vmem [shape: f32[1,32], index: 10, kind: input, shape index: {}]
  %s11 = inlined_call_operand.vmem [shape: f32[1,32], index: 11, kind: input, shape index: {}]
  %s12 = inlined_call_operand.vmem [shape: f32[1,32], index: 12, kind: input, shape index: {}]
  %s13 = inlined_call_operand.hbm [shape: bf16[32,64], index: 13, kind: input, shape index: {}]
  %s14 = inlined_call_operand.vmem [shape: f32[1,64], index: 14, kind: input, shape index: {}]
  %s15 = inlined_call_operand.vmem [shape: bf16[64,32], index: 15, kind: input, shape index: {}]
  %s16 = inlined_call_operand.vmem [shape: f32[1,32], index: 16, kind: input, shape index: {}]
  %s17 = inlined_call_operand.vmem [shape: f32[1,32], index: 17, kind: input, shape index: {}]
  %s18 = inlined_call_operand.vmem [shape: f32[1,32], index: 18, kind: input, shape index: {}]
  %s19 = inlined_call_operand.hbm [shape: f32[16,32], index: 19, kind: output, shape index: {}]
  %s20 = sld [smem:[#allocation0]]
  $region129: #{tpu_custom_call.1} parent=0
    _
  %s22 = ssub.s32 1, %s20
  %s23 = scalar_select 0, %s22, %s20
  $region1: #{tpu_custom_call.1} parent=0
    #allocation3 [shape = 'u8[8192]{0}', space=vmem, size = 0x2000, scoped, tag = 'input window, operand 3, single buffered']
    #allocation4 [shape = 's32[2]{0}', space=sflag, size = 0x8, scoped, tag = 'scoped memory for tpu_custom_call.1']
    #allocation5 [shape = 's32[2]{0}', space=sflag, size = 0x8, scoped, tag = 'scoped memory for tpu_custom_call.1']
    #allocation6 [shape = 'u8[8192]{0}', space=vmem, size = 0x2000, scoped, tag = 'input window, operand 5, single buffered']
    #allocation7 [shape = 's32[1]{0}', space=sflag, size = 0x4, scoped, tag = 'scoped memory for tpu_custom_call.1']
    #allocation8 [shape = 'u8[8192]{0}', space=vmem, size = 0x2000, scoped, tag = 'input window, operand 7, single buffered']
    #allocation9 [shape = 'u8[8192]{0}', space=vmem, size = 0x2000, scoped, tag = 'input window, operand 9, single buffered']
    #allocation10 [shape = 's32[1]{0}', space=sflag, size = 0x4, scoped, tag = 'scoped memory for tpu_custom_call.1']
    #allocation11 [shape = 'u8[8192]{0}', space=vmem, size = 0x2000, scoped, tag = 'input window, operand 13, single buffered']
    #allocation12 [shape = 'u8[8192]{0}', space=vmem, size = 0x2000, scoped, tag = 'output window, operand 0']
    %24 = vsyncpa [#allocation4], 0
    %25 = vsyncpa [#allocation7], 0
    %26 = vsyncpa [#allocation10], 0
    %27 = vsyncpa [#allocation5], 0
    %s28 = scalar_lea.sflag [#allocation5], 1
    %29 = vsyncpa %s28, 0
    loop: start=0, step=1, limit=4
    $region2: #{tpu_custom_call.1} parent=1 // loop_pre_header
      _
    $region3: #{tpu_custom_call.1} parent=1 // loop_header
      %s31 = sphi 0, %s35
      %p32 = scmp.ge.s32.totalorder %s31, 4
      %s41 = sphi 0, %s43
      %s44 = sphi 0, %s41
      %s45 = sphi 0, %s44
      %s61 = sphi 0, %s45
      %s67 = sphi 0, %s69
      %s70 = sphi 0, %s67
      %s71 = sphi 0, %s70
      %s87 = sphi 0, %s71
      %s93 = sphi 0, %s95
      %s96 = sphi 0, %s93
      %s97 = sphi 0, %s96
      %s113 = sphi 0, %s97
      %s117 = sphi 0, %s117
      %s119 = sphi 0, %s117
      %s120 = sphi 0, %s119
      %s134 = sphi 0, %s120
      %s138 = sphi 0, %s138
      %s140 = sphi 0, %s138
      %s141 = sphi 0, %s140
      %s155 = sphi 0, %s141
      %s159 = sphi 0, %s159
      %s161 = sphi 0, %s159
      %s162 = sphi 0, %s161
      %s176 = sphi 0, %s162
      %s180 = sphi 0, %s180
      %s182 = sphi 0, %s180
      %s183 = sphi 0, %s182
      %s197 = sphi 0, %s183
      %s201 = sphi 0, %s201
      %s203 = sphi 0, %s201
      %s204 = sphi 0, %s203
      %s218 = sphi 0, %s204
      %s222 = sphi 0, %s222
      %s224 = sphi 0, %s222
      %s225 = sphi 0, %s224
      %s239 = sphi 0, %s225
      %s243 = sphi 0, %s243
      %s245 = sphi 0, %s243
      %s246 = sphi 0, %s245
      %s260 = sphi 0, %s246
      %s264 = sphi 0, %s264
      %s266 = sphi 0, %s264
      %s267 = sphi 0, %s266
      %s281 = sphi 0, %s267
      %s285 = sphi 0, %s285
      %s287 = sphi 0, %s285
      %s288 = sphi 0, %s287
      %s302 = sphi 0, %s288
      %s306 = sphi 0, %s306
      %s308 = sphi 0, %s306
      %s309 = sphi 0, %s308
      %s323 = sphi 0, %s309
      %s327 = sphi 0, %s327
      %s329 = sphi 0, %s327
      %s330 = sphi 0, %s329
      %s344 = sphi 0, %s330
      %s348 = sphi 0, %s348
      %s350 = sphi 0, %s348
      %s351 = sphi 0, %s350
      %s365 = sphi 0, %s351
      %s369 = sphi 0, %s369
      %s371 = sphi 0, %s369
      %s372 = sphi 0, %s371
      %s386 = sphi 0, %s372
      %s390 = sphi 0, %s390
      %s392 = sphi 0, %s390
      %s393 = sphi 0, %s392
      %s407 = sphi 0, %s393
      %s411 = sphi 0, %s411
      %s413 = sphi 0, %s411
      %s414 = sphi 0, %s413
      %s428 = sphi 0, %s414
      %s432 = sphi 0, %s432
      %s434 = sphi 0, %s432
      %s435 = sphi 0, %s434
      %s449 = sphi 0, %s435
      %s455 = sphi 0, %s457
      %s458 = sphi 0, %s455
      %s459 = sphi 0, %s458
      %s475 = sphi 0, %s459
    $region4: #{tpu_custom_call.1} parent=1 // loop_header_branch
      %34 = sbr.rel (%p32) target = $region8
    $region5: #{tpu_custom_call.1} parent=1 // loop_body
      %s36 = ssub.s32 %s31, 1
      %s37 = ssub.s32 %s31, 2
      %s38 = sadd.s32 %s31, 1
      %s39 = ssub.s32 %s31, %s38
      %p40 = scmp.eq.s32.totalorder %s39, 0
      %s42 = sadd.s32 %s41, 1
      %s43 = scalar_select %p40, %s41, %s42
      %p46 = pneg %p40
      %p47 = scmp.eq.s32.totalorder %s31, 1
      %p48 = por %p46, %p47
      %p49 = scmp.ne.s32.totalorder %s41, %s44
      %p50 = scmp.eq.s32.totalorder %s31, 0
      %p51 = por %p49, %p50
      %p52 = scmp.ne.s32.totalorder %s41, %s44
      %p53 = scmp.eq.s32.totalorder %s36, 1
      %p54 = por %p52, %p53
      %p55 = scmp.ne.s32.totalorder %s44, %s45
      %p56 = scmp.eq.s32.totalorder %s36, 0
      %p57 = por %p55, %p56
      %p58 = scmp.ne.s32.totalorder %s44, %s45
      %p59 = scmp.eq.s32.totalorder %s37, 1
      %p60 = por %p58, %p59
      %p62 = scmp.ne.s32.totalorder %s45, %s61
      %p63 = scmp.eq.s32.totalorder %s37, 0
      %p64 = por %p62, %p63
      %s65 = ssub.s32 %s31, %s38
      %p66 = scmp.eq.s32.totalorder %s65, 0
      %s68 = sadd.s32 %s67, 1
      %s69 = scalar_select %p66, %s67, %s68
      %p72 = pneg %p66
      %p73 = scmp.eq.s32.totalorder %s31, 1
      %p74 = por %p72, %p73
      %p75 = scmp.ne.s32.totalorder %s67, %s70
      %p76 = scmp.eq.s32.totalorder %s31, 0
      %p77 = por %p75, %p76
      %p78 = scmp.ne.s32.totalorder %s67, %s70
      %p79 = scmp.eq.s32.totalorder %s36, 1
      %p80 = por %p78, %p79
      %p81 = scmp.ne.s32.totalorder %s70, %s71
      %p82 = scmp.eq.s32.totalorder %s36, 0
      %p83 = por %p81, %p82
      %p84 = scmp.ne.s32.totalorder %s70, %s71
      %p85 = scmp.eq.s32.totalorder %s37, 1
      %p86 = por %p84, %p85
      %p88 = scmp.ne.s32.totalorder %s71, %s87
      %p89 = scmp.eq.s32.totalorder %s37, 0
      %p90 = por %p88, %p89
      %s91 = ssub.s32 %s31, %s38
      %p92 = scmp.eq.s32.totalorder %s91, 0
      %s94 = sadd.s32 %s93, 1
      %s95 = scalar_select %p92, %s93, %s94
      %p98 = pneg %p92
      %p99 = scmp.eq.s32.totalorder %s31, 1
      %p100 = por %p98, %p99
      %p101 = scmp.ne.s32.totalorder %s93, %s96
      %p102 = scmp.eq.s32.totalorder %s31, 0
      %p103 = por %p101, %p102
      %p104 = scmp.ne.s32.totalorder %s93, %s96
      %p105 = scmp.eq.s32.totalorder %s36, 1
      %p106 = por %p104, %p105
      %p107 = scmp.ne.s32.totalorder %s96, %s97
      %p108 = scmp.eq.s32.totalorder %s36, 0
      %p109 = por %p107, %p108
      %p110 = scmp.ne.s32.totalorder %s96, %s97
      %p111 = scmp.eq.s32.totalorder %s37, 1
      %p112 = por %p110, %p111
      %p114 = scmp.ne.s32.totalorder %s97, %s113
      %p115 = scmp.eq.s32.totalorder %s37, 0
      %p116 = por %p114, %p115
      %s118 = sadd.s32 %s117, 1
      %p121 = scmp.eq.s32.totalorder %s31, 1
      %p122 = scmp.ne.s32.totalorder %s117, %s119
      %p123 = scmp.eq.s32.totalorder %s31, 0
      %p124 = por %p122, %p123
      %p125 = scmp.ne.s32.totalorder %s117, %s119
      %p126 = scmp.eq.s32.totalorder %s36, 1
      %p127 = por %p125, %p126
      %p128 = scmp.ne.s32.totalorder %s119, %s120
      %p129 = scmp.eq.s32.totalorder %s36, 0
      %p130 = por %p128, %p129
      %p131 = scmp.ne.s32.totalorder %s119, %s120
      %p132 = scmp.eq.s32.totalorder %s37, 1
      %p133 = por %p131, %p132
      %p135 = scmp.ne.s32.totalorder %s120, %s134
      %p136 = scmp.eq.s32.totalorder %s37, 0
      %p137 = por %p135, %p136
      %s139 = sadd.s32 %s138, 1
      %p142 = scmp.eq.s32.totalorder %s31, 1
      %p143 = scmp.ne.s32.totalorder %s138, %s140
      %p144 = scmp.eq.s32.totalorder %s31, 0
      %p145 = por %p143, %p144
      %p146 = scmp.ne.s32.totalorder %s138, %s140
      %p147 = scmp.eq.s32.totalorder %s36, 1
      %p148 = por %p146, %p147
      %p149 = scmp.ne.s32.totalorder %s140, %s141
      %p150 = scmp.eq.s32.totalorder %s36, 0
      %p151 = por %p149, %p150
      %p152 = scmp.ne.s32.totalorder %s140, %s141
      %p153 = scmp.eq.s32.totalorder %s37, 1
      %p154 = por %p152, %p153
      %p156 = scmp.ne.s32.totalorder %s141, %s155
      %p157 = scmp.eq.s32.totalorder %s37, 0
      %p158 = por %p156, %p157
      %s160 = sadd.s32 %s159, 1
      %p163 = scmp.eq.s32.totalorder %s31, 1
      %p164 = scmp.ne.s32.totalorder %s159, %s161
      %p165 = scmp.eq.s32.totalorder %s31, 0
      %p166 = por %p164, %p165
      %p167 = scmp.ne.s32.totalorder %s159, %s161
      %p168 = scmp.eq.s32.totalorder %s36, 1
      %p169 = por %p167, %p168
      %p170 = scmp.ne.s32.totalorder %s161, %s162
      %p171 = scmp.eq.s32.totalorder %s36, 0
      %p172 = por %p170, %p171
      %p173 = scmp.ne.s32.totalorder %s161, %s162
      %p174 = scmp.eq.s32.totalorder %s37, 1
      %p175 = por %p173, %p174
      %p177 = scmp.ne.s32.totalorder %s162, %s176
      %p178 = scmp.eq.s32.totalorder %s37, 0
      %p179 = por %p177, %p178
      %s181 = sadd.s32 %s180, 1
      %p184 = scmp.eq.s32.totalorder %s31, 1
      %p185 = scmp.ne.s32.totalorder %s180, %s182
      %p186 = scmp.eq.s32.totalorder %s31, 0
      %p187 = por %p185, %p186
      %p188 = scmp.ne.s32.totalorder %s180, %s182
      %p189 = scmp.eq.s32.totalorder %s36, 1
      %p190 = por %p188, %p189
      %p191 = scmp.ne.s32.totalorder %s182, %s183
      %p192 = scmp.eq.s32.totalorder %s36, 0
      %p193 = por %p191, %p192
      %p194 = scmp.ne.s32.totalorder %s182, %s183
      %p195 = scmp.eq.s32.totalorder %s37, 1
      %p196 = por %p194, %p195
      %p198 = scmp.ne.s32.totalorder %s183, %s197
      %p199 = scmp.eq.s32.totalorder %s37, 0
      %p200 = por %p198, %p199
      %s202 = sadd.s32 %s201, 1
      %p205 = scmp.eq.s32.totalorder %s31, 1
      %p206 = scmp.ne.s32.totalorder %s201, %s203
      %p207 = scmp.eq.s32.totalorder %s31, 0
      %p208 = por %p206, %p207
      %p209 = scmp.ne.s32.totalorder %s201, %s203
      %p210 = scmp.eq.s32.totalorder %s36, 1
      %p211 = por %p209, %p210
      %p212 = scmp.ne.s32.totalorder %s203, %s204
      %p213 = scmp.eq.s32.totalorder %s36, 0
      %p214 = por %p212, %p213
      %p215 = scmp.ne.s32.totalorder %s203, %s204
      %p216 = scmp.eq.s32.totalorder %s37, 1
      %p217 = por %p215, %p216
      %p219 = scmp.ne.s32.totalorder %s204, %s218
      %p220 = scmp.eq.s32.totalorder %s37, 0
      %p221 = por %p219, %p220
      %s223 = sadd.s32 %s222, 1
      %p226 = scmp.eq.s32.totalorder %s31, 1
      %p227 = scmp.ne.s32.totalorder %s222, %s224
      %p228 = scmp.eq.s32.totalorder %s31, 0
      %p229 = por %p227, %p228
      %p230 = scmp.ne.s32.totalorder %s222, %s224
      %p231 = scmp.eq.s32.totalorder %s36, 1
      %p232 = por %p230, %p231
      %p233 = scmp.ne.s32.totalorder %s224, %s225
      %p234 = scmp.eq.s32.totalorder %s36, 0
      %p235 = por %p233, %p234
      %p236 = scmp.ne.s32.totalorder %s224, %s225
      %p237 = scmp.eq.s32.totalorder %s37, 1
      %p238 = por %p236, %p237
      %p240 = scmp.ne.s32.totalorder %s225, %s239
      %p241 = scmp.eq.s32.totalorder %s37, 0
      %p242 = por %p240, %p241
      %s244 = sadd.s32 %s243, 1
      %p247 = scmp.eq.s32.totalorder %s31, 1
      %p248 = scmp.ne.s32.totalorder %s243, %s245
      %p249 = scmp.eq.s32.totalorder %s31, 0
      %p250 = por %p248, %p249
      %p251 = scmp.ne.s32.totalorder %s243, %s245
      %p252 = scmp.eq.s32.totalorder %s36, 1
      %p253 = por %p251, %p252
      %p254 = scmp.ne.s32.totalorder %s245, %s246
      %p255 = scmp.eq.s32.totalorder %s36, 0
      %p256 = por %p254, %p255
      %p257 = scmp.ne.s32.totalorder %s245, %s246
      %p258 = scmp.eq.s32.totalorder %s37, 1
      %p259 = por %p257, %p258
      %p261 = scmp.ne.s32.totalorder %s246, %s260
      %p262 = scmp.eq.s32.totalorder %s37, 0
      %p263 = por %p261, %p262
      %s265 = sadd.s32 %s264, 1
      %p268 = scmp.eq.s32.totalorder %s31, 1
      %p269 = scmp.ne.s32.totalorder %s264, %s266
      %p270 = scmp.eq.s32.totalorder %s31, 0
      %p271 = por %p269, %p270
      %p272 = scmp.ne.s32.totalorder %s264, %s266
      %p273 = scmp.eq.s32.totalorder %s36, 1
      %p274 = por %p272, %p273
      %p275 = scmp.ne.s32.totalorder %s266, %s267
      %p276 = scmp.eq.s32.totalorder %s36, 0
      %p277 = por %p275, %p276
      %p278 = scmp.ne.s32.totalorder %s266, %s267
      %p279 = scmp.eq.s32.totalorder %s37, 1
      %p280 = por %p278, %p279
      %p282 = scmp.ne.s32.totalorder %s267, %s281
      %p283 = scmp.eq.s32.totalorder %s37, 0
      %p284 = por %p282, %p283
      %s286 = sadd.s32 %s285, 1
      %p289 = scmp.eq.s32.totalorder %s31, 1
      %p290 = scmp.ne.s32.totalorder %s285, %s287
      %p291 = scmp.eq.s32.totalorder %s31, 0
      %p292 = por %p290, %p291
      %p293 = scmp.ne.s32.totalorder %s285, %s287
      %p294 = scmp.eq.s32.totalorder %s36, 1
      %p295 = por %p293, %p294
      %p296 = scmp.ne.s32.totalorder %s287, %s288
      %p297 = scmp.eq.s32.totalorder %s36, 0
      %p298 = por %p296, %p297
      %p299 = scmp.ne.s32.totalorder %s287, %s288
      %p300 = scmp.eq.s32.totalorder %s37, 1
      %p301 = por %p299, %p300
      %p303 = scmp.ne.s32.totalorder %s288, %s302
      %p304 = scmp.eq.s32.totalorder %s37, 0
      %p305 = por %p303, %p304
      %s307 = sadd.s32 %s306, 1
      %p310 = scmp.eq.s32.totalorder %s31, 1
      %p311 = scmp.ne.s32.totalorder %s306, %s308
      %p312 = scmp.eq.s32.totalorder %s31, 0
      %p313 = por %p311, %p312
      %p314 = scmp.ne.s32.totalorder %s306, %s308
      %p315 = scmp.eq.s32.totalorder %s36, 1
      %p316 = por %p314, %p315
      %p317 = scmp.ne.s32.totalorder %s308, %s309
      %p318 = scmp.eq.s32.totalorder %s36, 0
      %p319 = por %p317, %p318
      %p320 = scmp.ne.s32.totalorder %s308, %s309
      %p321 = scmp.eq.s32.totalorder %s37, 1
      %p322 = por %p320, %p321
      %p324 = scmp.ne.s32.totalorder %s309, %s323
      %p325 = scmp.eq.s32.totalorder %s37, 0
      %p326 = por %p324, %p325
      %s328 = sadd.s32 %s327, 1
      %p331 = scmp.eq.s32.totalorder %s31, 1
      %p332 = scmp.ne.s32.totalorder %s327, %s329
      %p333 = scmp.eq.s32.totalorder %s31, 0
      %p334 = por %p332, %p333
      %p335 = scmp.ne.s32.totalorder %s327, %s329
      %p336 = scmp.eq.s32.totalorder %s36, 1
      %p337 = por %p335, %p336
      %p338 = scmp.ne.s32.totalorder %s329, %s330
      %p339 = scmp.eq.s32.totalorder %s36, 0
      %p340 = por %p338, %p339
      %p341 = scmp.ne.s32.totalorder %s329, %s330
      %p342 = scmp.eq.s32.totalorder %s37, 1
      %p343 = por %p341, %p342
      %p345 = scmp.ne.s32.totalorder %s330, %s344
      %p346 = scmp.eq.s32.totalorder %s37, 0
      %p347 = por %p345, %p346
      %s349 = sadd.s32 %s348, 1
      %p352 = scmp.eq.s32.totalorder %s31, 1
      %p353 = scmp.ne.s32.totalorder %s348, %s350
      %p354 = scmp.eq.s32.totalorder %s31, 0
      %p355 = por %p353, %p354
      %p356 = scmp.ne.s32.totalorder %s348, %s350
      %p357 = scmp.eq.s32.totalorder %s36, 1
      %p358 = por %p356, %p357
      %p359 = scmp.ne.s32.totalorder %s350, %s351
      %p360 = scmp.eq.s32.totalorder %s36, 0
      %p361 = por %p359, %p360
      %p362 = scmp.ne.s32.totalorder %s350, %s351
      %p363 = scmp.eq.s32.totalorder %s37, 1
      %p364 = por %p362, %p363
      %p366 = scmp.ne.s32.totalorder %s351, %s365
      %p367 = scmp.eq.s32.totalorder %s37, 0
      %p368 = por %p366, %p367
      %s370 = sadd.s32 %s369, 1
      %p373 = scmp.eq.s32.totalorder %s31, 1
      %p374 = scmp.ne.s32.totalorder %s369, %s371
      %p375 = scmp.eq.s32.totalorder %s31, 0
      %p376 = por %p374, %p375
      %p377 = scmp.ne.s32.totalorder %s369, %s371
      %p378 = scmp.eq.s32.totalorder %s36, 1
      %p379 = por %p377, %p378
      %p380 = scmp.ne.s32.totalorder %s371, %s372
      %p381 = scmp.eq.s32.totalorder %s36, 0
      %p382 = por %p380, %p381
      %p383 = scmp.ne.s32.totalorder %s371, %s372
      %p384 = scmp.eq.s32.totalorder %s37, 1
      %p385 = por %p383, %p384
      %p387 = scmp.ne.s32.totalorder %s372, %s386
      %p388 = scmp.eq.s32.totalorder %s37, 0
      %p389 = por %p387, %p388
      %s391 = sadd.s32 %s390, 1
      %p394 = scmp.eq.s32.totalorder %s31, 1
      %p395 = scmp.ne.s32.totalorder %s390, %s392
      %p396 = scmp.eq.s32.totalorder %s31, 0
      %p397 = por %p395, %p396
      %p398 = scmp.ne.s32.totalorder %s390, %s392
      %p399 = scmp.eq.s32.totalorder %s36, 1
      %p400 = por %p398, %p399
      %p401 = scmp.ne.s32.totalorder %s392, %s393
      %p402 = scmp.eq.s32.totalorder %s36, 0
      %p403 = por %p401, %p402
      %p404 = scmp.ne.s32.totalorder %s392, %s393
      %p405 = scmp.eq.s32.totalorder %s37, 1
      %p406 = por %p404, %p405
      %p408 = scmp.ne.s32.totalorder %s393, %s407
      %p409 = scmp.eq.s32.totalorder %s37, 0
      %p410 = por %p408, %p409
      %s412 = sadd.s32 %s411, 1
      %p415 = scmp.eq.s32.totalorder %s31, 1
      %p416 = scmp.ne.s32.totalorder %s411, %s413
      %p417 = scmp.eq.s32.totalorder %s31, 0
      %p418 = por %p416, %p417
      %p419 = scmp.ne.s32.totalorder %s411, %s413
      %p420 = scmp.eq.s32.totalorder %s36, 1
      %p421 = por %p419, %p420
      %p422 = scmp.ne.s32.totalorder %s413, %s414
      %p423 = scmp.eq.s32.totalorder %s36, 0
      %p424 = por %p422, %p423
      %p425 = scmp.ne.s32.totalorder %s413, %s414
      %p426 = scmp.eq.s32.totalorder %s37, 1
      %p427 = por %p425, %p426
      %p429 = scmp.ne.s32.totalorder %s414, %s428
      %p430 = scmp.eq.s32.totalorder %s37, 0
      %p431 = por %p429, %p430
      %s433 = sadd.s32 %s432, 1
      %p436 = scmp.eq.s32.totalorder %s31, 1
      %p437 = scmp.ne.s32.totalorder %s432, %s434
      %p438 = scmp.eq.s32.totalorder %s31, 0
      %p439 = por %p437, %p438
      %p440 = scmp.ne.s32.totalorder %s432, %s434
      %p441 = scmp.eq.s32.totalorder %s36, 1
      %p442 = por %p440, %p441
      %p443 = scmp.ne.s32.totalorder %s434, %s435
      %p444 = scmp.eq.s32.totalorder %s36, 0
      %p445 = por %p443, %p444
      %p446 = scmp.ne.s32.totalorder %s434, %s435
      %p447 = scmp.eq.s32.totalorder %s37, 1
      %p448 = por %p446, %p447
      %p450 = scmp.ne.s32.totalorder %s435, %s449
      %p451 = scmp.eq.s32.totalorder %s37, 0
      %p452 = por %p450, %p451
      %s453 = ssub.s32 %s31, %s38
      %p454 = scmp.eq.s32.totalorder %s453, 0
      %s456 = sadd.s32 %s455, 1
      %s457 = scalar_select %p454, %s455, %s456
      %p460 = pneg %p454
      %p461 = scmp.eq.s32.totalorder %s31, 1
      %p462 = por %p460, %p461
      %p463 = scmp.ne.s32.totalorder %s455, %s458
      %p464 = scmp.eq.s32.totalorder %s31, 0
      %p465 = por %p463, %p464
      %p466 = scmp.ne.s32.totalorder %s455, %s458
      %p467 = scmp.eq.s32.totalorder %s36, 1
      %p468 = por %p466, %p467
      %p469 = scmp.ne.s32.totalorder %s458, %s459
      %p470 = scmp.eq.s32.totalorder %s36, 0
      %p471 = por %p469, %p470
      %p472 = scmp.ne.s32.totalorder %s458, %s459
      %p473 = scmp.eq.s32.totalorder %s37, 1
      %p474 = por %p472, %p473
      %p476 = scmp.ne.s32.totalorder %s459, %s475
      %p477 = scmp.eq.s32.totalorder %s37, 0
      %p478 = por %p476, %p477
      %p479 = scmp.le.s32.totalorder 1, %s31
      %p480 = scmp.lt.s32.totalorder %s31, 3
      %p481 = pnand %p479, %p480
      %p482 = pneg %p481
      // Predicated region
      $region9: #{tpu_custom_call.1} parent=5 // pred_check
        _
      $region10: #{tpu_custom_call.1} parent=5 // pred_check_branch
        %484 = sbr.rel (%p481) target = $region12
      $region11: #{tpu_custom_call.1} parent=5 // pred_region
        %s485 = ssub.s32 %s31, 1
        // Predicated region
        $region13: #{tpu_custom_call.1} parent=11 // pred_check
          %p486 = pneg %p130
        $region14: #{tpu_custom_call.1} parent=11 // pred_check_branch
          %488 = sbr.rel (%p486) target = $region16
        $region15: #{tpu_custom_call.1} parent=11 // pred_region
          %490 = vsyncadd [#allocation4], 0
          %s491 = sshll.u32 %s3, 4
          %s492 = int_to_ptr.hbm [resolvable:$true] %s491
          %s493 = sshll.u32 [#allocation3], 4
          %s494 = int_to_ptr.vmem [resolvable:$true] %s493
          %499 = dma.hbm_to_vmem [thread:$0]  %s492, 256, %s494, [#allocation4], 64, 64, 4
        $region16: #{tpu_custom_call.1} parent=11 // pred_fallthru
          _
        // Predicated region
        $region17: #{tpu_custom_call.1} parent=11 // pred_check
          %p500 = pneg %p151
        $region18: #{tpu_custom_call.1} parent=11 // pred_check_branch
          %502 = sbr.rel (%p500) target = $region20
        $region19: #{tpu_custom_call.1} parent=11 // pred_region
          _
        $region20: #{tpu_custom_call.1} parent=11 // pred_fallthru
          _
        // Predicated region
        $region21: #{tpu_custom_call.1} parent=11 // pred_check
          %p503 = pneg %p172
        $region22: #{tpu_custom_call.1} parent=11 // pred_check_branch
          %505 = sbr.rel (%p503) target = $region24
        $region23: #{tpu_custom_call.1} parent=11 // pred_region
          %507 = vsyncadd [#allocation7], 0
          %s508 = sshll.u32 %s5, 4
          %s509 = int_to_ptr.hbm [resolvable:$true] %s508
          %s510 = sshll.u32 [#allocation6], 4
          %s511 = int_to_ptr.vmem [resolvable:$true] %s510
          %516 = dma.hbm_to_vmem [thread:$0]  %s509, 256, %s511, [#allocation7], 64, 64, 4
        $region24: #{tpu_custom_call.1} parent=11 // pred_fallthru
          _
        // Predicated region
        $region25: #{tpu_custom_call.1} parent=11 // pred_check
          %p517 = pneg %p193
        $region26: #{tpu_custom_call.1} parent=11 // pred_check_branch
          %519 = sbr.rel (%p517) target = $region28
        $region27: #{tpu_custom_call.1} parent=11 // pred_region
          _
        $region28: #{tpu_custom_call.1} parent=11 // pred_fallthru
          _
        // Predicated region
        $region29: #{tpu_custom_call.1} parent=11 // pred_check
          %p520 = pneg %p214
        $region30: #{tpu_custom_call.1} parent=11 // pred_check_branch
          %522 = sbr.rel (%p520) target = $region32
        $region31: #{tpu_custom_call.1} parent=11 // pred_region
          %524 = vsyncadd [#allocation7], 0
          %s525 = sshll.u32 %s7, 4
          %s526 = int_to_ptr.hbm [resolvable:$true] %s525
          %s527 = sshll.u32 [#allocation8], 4
          %s528 = int_to_ptr.vmem [resolvable:$true] %s527
          %533 = dma.hbm_to_vmem [thread:$0]  %s526, 256, %s528, [#allocation7], 64, 64, 4
        $region32: #{tpu_custom_call.1} parent=11 // pred_fallthru
          _
        // Predicated region
        $region33: #{tpu_custom_call.1} parent=11 // pred_check
          %p534 = pneg %p235
        $region34: #{tpu_custom_call.1} parent=11 // pred_check_branch
          %536 = sbr.rel (%p534) target = $region36
        $region35: #{tpu_custom_call.1} parent=11 // pred_region
          _
        $region36: #{tpu_custom_call.1} parent=11 // pred_fallthru
          _
        // Predicated region
        $region37: #{tpu_custom_call.1} parent=11 // pred_check
          %p537 = pneg %p256
        $region38: #{tpu_custom_call.1} parent=11 // pred_check_branch
          %539 = sbr.rel (%p537) target = $region40
        $region39: #{tpu_custom_call.1} parent=11 // pred_region
          %541 = vsyncadd [#allocation10], 0
          %s542 = sshll.u32 %s9, 4
          %s543 = int_to_ptr.hbm [resolvable:$true] %s542
          %s544 = sshll.u32 [#allocation9], 4
          %s545 = int_to_ptr.vmem [resolvable:$true] %s544
          %550 = dma.hbm_to_vmem [thread:$0]  %s543, 256, %s545, [#allocation10], 64, 64, 4
        $region40: #{tpu_custom_call.1} parent=11 // pred_fallthru
          _
        // Predicated region
        $region41: #{tpu_custom_call.1} parent=11 // pred_check
          %p551 = pneg %p277
        $region42: #{tpu_custom_call.1} parent=11 // pred_check_branch
          %553 = sbr.rel (%p551) target = $region44
        $region43: #{tpu_custom_call.1} parent=11 // pred_region
          _
        $region44: #{tpu_custom_call.1} parent=11 // pred_fallthru
          _
        // Predicated region
        $region45: #{tpu_custom_call.1} parent=11 // pred_check
          %p554 = pneg %p298
        $region46: #{tpu_custom_call.1} parent=11 // pred_check_branch
          %556 = sbr.rel (%p554) target = $region48
        $region47: #{tpu_custom_call.1} parent=11 // pred_region
          _
        $region48: #{tpu_custom_call.1} parent=11 // pred_fallthru
          _
        // Predicated region
        $region49: #{tpu_custom_call.1} parent=11 // pred_check
          %p557 = pneg %p319
        $region50: #{tpu_custom_call.1} parent=11 // pred_check_branch
          %559 = sbr.rel (%p557) target = $region52
        $region51: #{tpu_custom_call.1} parent=11 // pred_region
          _
        $region52: #{tpu_custom_call.1} parent=11 // pred_fallthru
          _
        // Predicated region
        $region53: #{tpu_custom_call.1} parent=11 // pred_check
          %p560 = pneg %p340
        $region54: #{tpu_custom_call.1} parent=11 // pred_check_branch
          %562 = sbr.rel (%p560) target = $region56
        $region55: #{tpu_custom_call.1} parent=11 // pred_region
          %564 = vsyncadd [#allocation10], 0
          %s565 = sshll.u32 %s13, 4
          %s566 = int_to_ptr.hbm [resolvable:$true] %s565
          %s567 = sshll.u32 [#allocation11], 4
          %s568 = int_to_ptr.vmem [resolvable:$true] %s567
          %573 = dma.hbm_to_vmem [thread:$0]  %s566, 256, %s568, [#allocation10], 64, 64, 4
        $region56: #{tpu_custom_call.1} parent=11 // pred_fallthru
          _
        // Predicated region
        $region57: #{tpu_custom_call.1} parent=11 // pred_check
          %p574 = pneg %p361
        $region58: #{tpu_custom_call.1} parent=11 // pred_check_branch
          %576 = sbr.rel (%p574) target = $region60
        $region59: #{tpu_custom_call.1} parent=11 // pred_region
          _
        $region60: #{tpu_custom_call.1} parent=11 // pred_fallthru
          _
        // Predicated region
        $region61: #{tpu_custom_call.1} parent=11 // pred_check
          %p577 = pneg %p382
        $region62: #{tpu_custom_call.1} parent=11 // pred_check_branch
          %579 = sbr.rel (%p577) target = $region64
        $region63: #{tpu_custom_call.1} parent=11 // pred_region
          _
        $region64: #{tpu_custom_call.1} parent=11 // pred_fallthru
          _
        // Predicated region
        $region65: #{tpu_custom_call.1} parent=11 // pred_check
          %p580 = pneg %p403
        $region66: #{tpu_custom_call.1} parent=11 // pred_check_branch
          %582 = sbr.rel (%p580) target = $region68
        $region67: #{tpu_custom_call.1} parent=11 // pred_region
          _
        $region68: #{tpu_custom_call.1} parent=11 // pred_fallthru
          _
        // Predicated region
        $region69: #{tpu_custom_call.1} parent=11 // pred_check
          %p583 = pneg %p424
        $region70: #{tpu_custom_call.1} parent=11 // pred_check_branch
          %585 = sbr.rel (%p583) target = $region72
        $region71: #{tpu_custom_call.1} parent=11 // pred_region
          _
        $region72: #{tpu_custom_call.1} parent=11 // pred_fallthru
          _
        // Predicated region
        $region73: #{tpu_custom_call.1} parent=11 // pred_check
          %p586 = pneg %p445
        $region74: #{tpu_custom_call.1} parent=11 // pred_check_branch
          %588 = sbr.rel (%p586) target = $region76
        $region75: #{tpu_custom_call.1} parent=11 // pred_region
          _
        $region76: #{tpu_custom_call.1} parent=11 // pred_fallthru
          _
      $region12: #{tpu_custom_call.1} parent=5 // pred_fallthru
        _
      %p589 = scmp.lt.s32.totalorder %s31, 2
      // Predicated region
      $region77: #{tpu_custom_call.1} parent=5 // pred_check
        %p590 = pneg %p589
      $region78: #{tpu_custom_call.1} parent=5 // pred_check_branch
        %592 = sbr.rel (%p590) target = $region80
      $region79: #{tpu_custom_call.1} parent=5 // pred_region
        // Predicated region
        $region81: #{tpu_custom_call.1} parent=79 // pred_check
          %p593 = pneg %p51
        $region82: #{tpu_custom_call.1} parent=79 // pred_check_branch
          %595 = sbr.rel (%p593) target = $region84
        $region83: #{tpu_custom_call.1} parent=79 // pred_region
          %p596 = scmp.lt.s32.totalorder %s31, 1
          %s597 = scalar_select %p596, %s31, 1
          %s598 = smul.addr %s597, 8
          %s599 = scalar_lea.vmem %s0, %s598
        $region84: #{tpu_custom_call.1} parent=79 // pred_fallthru
          _
        // Predicated region
        $region85: #{tpu_custom_call.1} parent=79 // pred_check
          %p600 = pneg %p77
        $region86: #{tpu_custom_call.1} parent=79 // pred_check_branch
          %602 = sbr.rel (%p600) target = $region88
        $region87: #{tpu_custom_call.1} parent=79 // pred_region
          %p603 = scmp.lt.s32.totalorder %s31, 1
          %s604 = scalar_select %p603, %s31, 1
          %s605 = smul.addr %s604, 8
          %s606 = scalar_lea.vmem %s1, %s605
        $region88: #{tpu_custom_call.1} parent=79 // pred_fallthru
          _
        // Predicated region
        $region89: #{tpu_custom_call.1} parent=79 // pred_check
          %p607 = pneg %p103
        $region90: #{tpu_custom_call.1} parent=79 // pred_check_branch
          %609 = sbr.rel (%p607) target = $region92
        $region91: #{tpu_custom_call.1} parent=79 // pred_region
          %p610 = scmp.lt.s32.totalorder %s31, 1
          %s611 = scalar_select %p610, %s31, 1
          %s612 = smul.addr %s611, 8
          %s613 = scalar_lea.vmem %s2, %s612
        $region92: #{tpu_custom_call.1} parent=79 // pred_fallthru
          _
      $region80: #{tpu_custom_call.1} parent=5 // pred_fallthru
        _
      %p614 = scmp.le.s32.totalorder 1, %s31
      %p615 = scmp.lt.s32.totalorder %s31, 3
      %p616 = pnand %p614, %p615
      %p617 = pneg %p616
      // Predicated region
      $region93: #{tpu_custom_call.1} parent=5 // pred_check
        _
      $region94: #{tpu_custom_call.1} parent=5 // pred_check_branch
        %619 = sbr.rel (%p616) target = $region96
      $region95: #{tpu_custom_call.1} parent=5 // pred_region
        %s620 = ssub.s32 %s31, 1
        // Predicated region
        $region97: #{tpu_custom_call.1} parent=95 // pred_check
          %p621 = pneg %p130
        $region98: #{tpu_custom_call.1} parent=95 // pred_check_branch
          %623 = sbr.rel (%p621) target = $region100
        $region99: #{tpu_custom_call.1} parent=95 // pred_region
          %625 = dma.done [#allocation4], 256
        $region100: #{tpu_custom_call.1} parent=95 // pred_fallthru
          _
        // Predicated region
        $region101: #{tpu_custom_call.1} parent=95 // pred_check
          %p626 = pneg %p172
        $region102: #{tpu_custom_call.1} parent=95 // pred_check_branch
          %628 = sbr.rel (%p626) target = $region104
        $region103: #{tpu_custom_call.1} parent=95 // pred_region
          %630 = dma.done [#allocation7], 256
        $region104: #{tpu_custom_call.1} parent=95 // pred_fallthru
          _
        // Predicated region
        $region105: #{tpu_custom_call.1} parent=95 // pred_check
          %p631 = pneg %p214
        $region106: #{tpu_custom_call.1} parent=95 // pred_check_branch
          %633 = sbr.rel (%p631) target = $region108
        $region107: #{tpu_custom_call.1} parent=95 // pred_region
          %635 = dma.done [#allocation7], 256
        $region108: #{tpu_custom_call.1} parent=95 // pred_fallthru
          _
        // Predicated region
        $region109: #{tpu_custom_call.1} parent=95 // pred_check
          %p636 = pneg %p256
        $region110: #{tpu_custom_call.1} parent=95 // pred_check_branch
          %638 = sbr.rel (%p636) target = $region112
        $region111: #{tpu_custom_call.1} parent=95 // pred_region
          %640 = dma.done [#allocation10], 256
        $region112: #{tpu_custom_call.1} parent=95 // pred_fallthru
          _
        // Predicated region
        $region113: #{tpu_custom_call.1} parent=95 // pred_check
          %p641 = pneg %p340
        $region114: #{tpu_custom_call.1} parent=95 // pred_check_branch
          %643 = sbr.rel (%p641) target = $region116
        $region115: #{tpu_custom_call.1} parent=95 // pred_region
          %645 = dma.done [#allocation10], 256
        $region116: #{tpu_custom_call.1} parent=95 // pred_fallthru
          _
        %p646 = scmp.lt.s32.totalorder %s36, 1
        %s647 = scalar_select %p646, %s36, 1
        %s648 = smul.addr %s647, 8
        %s649 = scalar_lea.vmem %s0, %s648
        %p650 = pneg %p57
        %p651 = pneg %p54
        %p652 = scmp.lt.s32.totalorder %s36, 1
        %s653 = scalar_select %p652, %s36, 1
        %s654 = smul.addr %s653, 8
        %s655 = scalar_lea.vmem %s1, %s654
        %p656 = pneg %p83
        %p657 = pneg %p80
        %p658 = scmp.lt.s32.totalorder %s36, 1
        %s659 = scalar_select %p658, %s36, 1
        %s660 = smul.addr %s659, 8
        %s661 = scalar_lea.vmem %s2, %s660
        %p662 = pneg %p109
        %p663 = pneg %p106
        %p664 = pneg %p130
        %p665 = pneg %p127
        %p666 = pneg %p151
        %p667 = pneg %p148
        %p668 = pneg %p172
        %p669 = pneg %p169
        %p670 = pneg %p193
        %p671 = pneg %p190
        %p672 = pneg %p214
        %p673 = pneg %p211
        %p674 = pneg %p235
        %p675 = pneg %p232
        %p676 = pneg %p256
        %p677 = pneg %p253
        %p678 = pneg %p277
        %p679 = pneg %p274
        %p680 = pneg %p298
        %p681 = pneg %p295
        %p682 = pneg %p319
        %p683 = pneg %p316
        %p684 = pneg %p340
        %p685 = pneg %p337
        %p686 = pneg %p361
        %p687 = pneg %p358
        %p688 = pneg %p382
        %p689 = pneg %p379
        %p690 = pneg %p403
        %p691 = pneg %p400
        %p692 = pneg %p424
        %p693 = pneg %p421
        %p694 = pneg %p445
        %p695 = pneg %p442
        %p696 = pneg %p471
        %p697 = pneg %p468
        %s698 = sand.u32 %s458, 1
        %s699 = scalar_lea.sflag [#allocation5], %s698
        %s700 = sand.u32 %s458, 1
        %s701 = smul.addr %s700, 8
        %s702 = scalar_lea.vmem [#allocation12], %s701
        %p703 = scmp.lt.s32.totalorder %s36, 1
        %s704 = scalar_select %p703, %s36, 1
        %s705 = smul.addr %s704, 8
        %s706 = scalar_lea.vmem %s0, %s705
        %p707 = scmp.lt.s32.totalorder %s36, 1
        %s708 = scalar_select %p707, %s36, 1
        %s709 = smul.addr %s708, 8
        %s710 = scalar_lea.vmem %s1, %s709
        %p711 = scmp.lt.s32.totalorder %s36, 1
        %s712 = scalar_select %p711, %s36, 1
        %s713 = smul.addr %s712, 8
        %s714 = scalar_lea.vmem %s2, %s713
        %v716 = vld [vmem:[%s706] sm:$0xff]
        %v717 = vpack.c.bf16 %v716, %v716
        %v718 = vld [vmem:[%s710] sm:$0xff]
        %v719 = vpack.c.bf16 %v718, %v718
        %v720 = vld [vmem:[%s714] sm:$0xff]
        %v721 = vpack.c.bf16 %v720, %v720
        %v722 = vld [vmem:[%s10] sm:$0x1]
        %v724 = vperm.slane %v722, 0
        %v726 = vld [vmem:[#allocation3] sm:$0xf]
        %v727 = vld [vmem:[#allocation3 + $0x4] sm:$0xf]
        %v728 = vld [vmem:[#allocation3 + $0x8] sm:$0xf]
        %v729 = vld [vmem:[#allocation3 + $0xc] sm:$0xf]
        %v730 = vld [vmem:[%s4] sm:$0x1]
        %v732 = vperm.slane %v730, 0
        %v738 = vunpack.c.l.b16 %v726
        %v739 = vunpack.c.l.b16 %v727
        %v740 = vunpack.c.l.b16 %v728
        %v741 = vunpack.c.l.b16 %v729
        %v742 = vpack.c.b16 %v739, %v738
        %v743 = vpack.c.b16 %v741, %v740
        %vm746 = vcmask 261120
        %v748 = vsel %vm746, %v717, 0
        %750 = vmatpush.bf16.msra.mxu0 0
        %751 = vmatpush.bf16.msra.mxu0 0
        %752 = vmatpush.bf16.msra.mxu0 0
        %753 = vmatpush.bf16.msra.mxu0 0
        %754 = vmatpush.bf16.msra.mxu0 0
        %755 = vmatpush.bf16.msra.mxu0 0
        %756 = vmatpush.bf16.msra.mxu0 %v743
        %757 = vmatpush.bf16.msra.mxu0 %v742
        %758 = vmatmul.bf16.gmra.mxu0 %v748
        %v759 = vpop.f32.mrf.mxu0
        %v760 = vadd.f32 %v732, %v759
        %v761 = vpop.f32.mrf.mxu0
        %762 = vdwg.mxu0
        %v763 = vld [vmem:[#allocation6] sm:$0xf]
        %v764 = vld [vmem:[#allocation6 + $0x4] sm:$0xf]
        %v765 = vld [vmem:[#allocation6 + $0x8] sm:$0xf]
        %v766 = vld [vmem:[#allocation6 + $0xc] sm:$0xf]
        %v767 = vld [vmem:[%s6] sm:$0x1]
        %v769 = vperm.slane %v767, 0
        %v775 = vunpack.c.l.b16 %v763
        %v776 = vunpack.c.l.b16 %v764
        %v777 = vunpack.c.l.b16 %v765
        %v778 = vunpack.c.l.b16 %v766
        %v779 = vpack.c.b16 %v776, %v775
        %v780 = vpack.c.b16 %v778, %v777
        %v784 = vsel %vm746, %v719, 0
        %786 = vmatpush.bf16.msra.mxu0 0
        %787 = vmatpush.bf16.msra.mxu0 0
        %788 = vmatpush.bf16.msra.mxu0 0
        %789 = vmatpush.bf16.msra.mxu0 0
        %790 = vmatpush.bf16.msra.mxu0 0
        %791 = vmatpush.bf16.msra.mxu0 0
        %792 = vmatpush.bf16.msra.mxu0 %v780
        %793 = vmatpush.bf16.msra.mxu0 %v779
        %794 = vmatmul.bf16.gmra.mxu0 %v784
        %v795 = vpop.f32.mrf.mxu0
        %v796 = vadd.f32 %v769, %v795
        %v797 = vpop.f32.mrf.mxu0
        %798 = vdwg.mxu0
        %v799 = vld [vmem:[#allocation8] sm:$0xf]
        %v800 = vld [vmem:[#allocation8 + $0x4] sm:$0xf]
        %v801 = vld [vmem:[#allocation8 + $0x8] sm:$0xf]
        %v802 = vld [vmem:[#allocation8 + $0xc] sm:$0xf]
        %v803 = vld [vmem:[%s8] sm:$0x1]
        %v805 = vperm.slane %v803, 0
        %v811 = vunpack.c.l.b16 %v799
        %v812 = vunpack.c.l.b16 %v800
        %v813 = vunpack.c.l.b16 %v801
        %v814 = vunpack.c.l.b16 %v802
        %v815 = vpack.c.b16 %v812, %v811
        %v816 = vpack.c.b16 %v814, %v813
        %v820 = vsel %vm746, %v721, 0
        %822 = vmatpush.bf16.msra.mxu0 0
        %823 = vmatpush.bf16.msra.mxu0 0
        %824 = vmatpush.bf16.msra.mxu0 0
        %825 = vmatpush.bf16.msra.mxu0 0
        %826 = vmatpush.bf16.msra.mxu0 0
        %827 = vmatpush.bf16.msra.mxu0 0
        %828 = vmatpush.bf16.msra.mxu0 %v816
        %829 = vmatpush.bf16.msra.mxu0 %v815
        %830 = vmatmul.bf16.gmra.mxu0 %v820
        %v831 = vpop.f32.mrf.mxu0
        %v832 = vadd.f32 %v805, %v831
        %v833 = vpop.f32.mrf.mxu0
        %834 = vdwg.mxu0
        %v835 = vpack.c.bf16 %v760, %v760
        %v836 = vpack.c.bf16 %v796, %v796
        %v837 = vpack.c.bf16 %v832, %v832
        %vm838 = vcmask 64512
        %v840 = vsel %vm838, %v835, 0
        %v843 = vsel %vm838, %v836, 0
        %845 = vmatpush.bf16.xpose.msra.mxu0 0
        %846 = vmatpush.bf16.xpose.msra.mxu0 0
        %847 = vmatpush.bf16.xpose.msra.mxu0 0
        %848 = vmatpush.bf16.xpose.msra.mxu0 0
        %849 = vmatpush.bf16.xpose.msra.mxu0 0
        %850 = vmatpush.bf16.xpose.msra.mxu0 0
        %851 = vmatpush.bf16.xpose.msra.mxu0 0
        %852 = vmatpush.bf16.xpose.msra.mxu0 %v843
        %853 = vmatmul.bf16.gmra.mxu0 %v840
        %v854 = vpop.f32.mrf.mxu0
        %v855 = vadd.f32 0.0, %v854
        %v856 = vpop.f32.mrf.mxu0
        %857 = vdwg.mxu0
        %v858 = vsel %vm838, %v855, -inf
        %859 = vmax.xlane.f32.xlu0 %v858
        %v860 = vpop.xlane.xlu0 %859
        %v861 = vsub.f32 %v855, %v860
        %v862 = vmul.f32 %v861, 1.442695
        %v863 = vpow.pop %v862
        %v864 = vsel %vm838, %v863, 0.0
        %865 = vadd.xlane.f32.xlu0 %v864
        %v866 = vpop.xlane.xlu0 %865
        %v867 = vrcp.pop %v866
        %v868 = vmul.f32 %v863, %v867
        %v869 = vpack.c.bf16 %v868, %v868
        %v871 = vsel %vm838, %v869, 0
        %vm873 = vcmask 1043456
        %v875 = vsel %vm873, %v837, 0
        %877 = vmatpush.bf16.msra.mxu0 0
        %878 = vmatpush.bf16.msra.mxu0 0
        %879 = vmatpush.bf16.msra.mxu0 0
        %880 = vmatpush.bf16.msra.mxu0 0
        %881 = vmatpush.bf16.msra.mxu0 0
        %882 = vmatpush.bf16.msra.mxu0 0
        %883 = vmatpush.bf16.msra.mxu0 0
        %884 = vmatpush.bf16.msra.mxu0 %v875
        %885 = vmatmul.bf16.gmra.mxu0 %v871
        %v886 = vpop.f32.mrf.mxu0
        %v887 = vadd.f32 0.0, %v886
        %v888 = vpop.f32.mrf.mxu0
        %889 = vdwg.mxu0
        %890 = vst.msk [vmem:[#allocation2] sm:$0xff] %vm838, %v887
        %v892 = vunpack.c.l.b16 %v835
        %v893 = vpack.c.b16 %v892, %v892
        %894 = vrot.lane.b32.xlu0 %v893, 120
        %v895 = vpop.permute.xlu0 %894
        %v897 = vunpack.c.l.b16 %v836
        %v898 = vpack.c.b16 %v897, %v897
        %899 = vrot.lane.b32.xlu0 %v898, 120
        %v900 = vpop.permute.xlu0 %899
        %v902 = vsel %vm838, %v895, 0
        %v905 = vsel %vm838, %v900, 0
        %907 = vmatpush.bf16.xpose.msra.mxu0 0
        %908 = vmatpush.bf16.xpose.msra.mxu0 0
        %909 = vmatpush.bf16.xpose.msra.mxu0 0
        %910 = vmatpush.bf16.xpose.msra.mxu0 0
        %911 = vmatpush.bf16.xpose.msra.mxu0 0
        %912 = vmatpush.bf16.xpose.msra.mxu0 0
        %913 = vmatpush.bf16.xpose.msra.mxu0 0
        %914 = vmatpush.bf16.xpose.msra.mxu0 %v905
        %915 = vmatmul.bf16.gmra.mxu0 %v902
        %v916 = vpop.f32.mrf.mxu0
        %v917 = vadd.f32 0.0, %v916
        %v918 = vpop.f32.mrf.mxu0
        %919 = vdwg.mxu0
        %v920 = vsel %vm838, %v917, -inf
        %921 = vmax.xlane.f32.xlu0 %v920
        %v922 = vpop.xlane.xlu0 %921
        %v923 = vsub.f32 %v917, %v922
        %v924 = vmul.f32 %v923, 1.442695
        %v925 = vpow.pop %v924
        %v926 = vsel %vm838, %v925, 0.0
        %927 = vadd.xlane.f32.xlu0 %v926
        %v928 = vpop.xlane.xlu0 %927
        %v929 = vrcp.pop %v928
        %v930 = vmul.f32 %v925, %v929
        %v931 = vpack.c.bf16 %v930, %v930
        %v933 = vunpack.c.l.b16 %v837
        %v934 = vpack.c.b16 %v933, %v933
        %935 = vrot.lane.b32.xlu0 %v934, 120
        %v936 = vpop.permute.xlu0 %935
        %v938 = vsel %vm838, %v931, 0
        %v941 = vsel %vm873, %v936, 0
        %943 = vmatpush.bf16.msra.mxu0 0
        %944 = vmatpush.bf16.msra.mxu0 0
        %945 = vmatpush.bf16.msra.mxu0 0
        %946 = vmatpush.bf16.msra.mxu0 0
        %947 = vmatpush.bf16.msra.mxu0 0
        %948 = vmatpush.bf16.msra.mxu0 0
        %949 = vmatpush.bf16.msra.mxu0 0
        %950 = vmatpush.bf16.msra.mxu0 %v941
        %951 = vmatmul.bf16.gmra.mxu0 %v938
        %v952 = vpop.f32.mrf.mxu0
        %v953 = vadd.f32 0.0, %v952
        %v954 = vpop.f32.mrf.mxu0
        %955 = vdwg.mxu0
        %957 = vrot.lane.b32.xlu0 %v953, 8
        %v958 = vpop.permute.xlu0 %957
        %vm960 = vcmask 130112
        %961 = vst.msk [vmem:[#allocation2] sm:$0xff] %vm960, %v958
        %962 = vrot.lane.b32.xlu0 %v893, 112
        %v963 = vpop.permute.xlu0 %962
        %964 = vrot.lane.b32.xlu0 %v898, 112
        %v965 = vpop.permute.xlu0 %964
        %v967 = vsel %vm838, %v963, 0
        %v970 = vsel %vm838, %v965, 0
        %972 = vmatpush.bf16.xpose.msra.mxu0 0
        %973 = vmatpush.bf16.xpose.msra.mxu0 0
        %974 = vmatpush.bf16.xpose.msra.mxu0 0
        %975 = vmatpush.bf16.xpose.msra.mxu0 0
        %976 = vmatpush.bf16.xpose.msra.mxu0 0
        %977 = vmatpush.bf16.xpose.msra.mxu0 0
        %978 = vmatpush.bf16.xpose.msra.mxu0 0
        %979 = vmatpush.bf16.xpose.msra.mxu0 %v970
        %980 = vmatmul.bf16.gmra.mxu0 %v967
        %v981 = vpop.f32.mrf.mxu0
        %v982 = vadd.f32 0.0, %v981
        %v983 = vpop.f32.mrf.mxu0
        %984 = vdwg.mxu0
        %v985 = vsel %vm838, %v982, -inf
        %986 = vmax.xlane.f32.xlu0 %v985
        %v987 = vpop.xlane.xlu0 %986
        %v988 = vsub.f32 %v982, %v987
        %v989 = vmul.f32 %v988, 1.442695
        %v990 = vpow.pop %v989
        %v991 = vsel %vm838, %v990, 0.0
        %992 = vadd.xlane.f32.xlu0 %v991
        %v993 = vpop.xlane.xlu0 %992
        %v994 = vrcp.pop %v993
        %v995 = vmul.f32 %v990, %v994
        %v996 = vpack.c.bf16 %v995, %v995
        %997 = vrot.lane.b32.xlu0 %v934, 112
        %v998 = vpop.permute.xlu0 %997
        %v1000 = vsel %vm838, %v996, 0
        %v1003 = vsel %vm873, %v998, 0
        %1005 = vmatpush.bf16.msra.mxu0 0
        %1006 = vmatpush.bf16.msra.mxu0 0
        %1007 = vmatpush.bf16.msra.mxu0 0
        %1008 = vmatpush.bf16.msra.mxu0 0
        %1009 = vmatpush.bf16.msra.mxu0 0
        %1010 = vmatpush.bf16.msra.mxu0 0
        %1011 = vmatpush.bf16.msra.mxu0 0
        %1012 = vmatpush.bf16.msra.mxu0 %v1003
        %1013 = vmatmul.bf16.gmra.mxu0 %v1000
        %v1014 = vpop.f32.mrf.mxu0
        %v1015 = vadd.f32 0.0, %v1014
        %v1016 = vpop.f32.mrf.mxu0
        %1017 = vdwg.mxu0
        %1019 = vrot.lane.b32.xlu0 %v1015, 16
        %v1020 = vpop.permute.xlu0 %1019
        %vm1022 = vcmask 195712
        %1023 = vst.msk [vmem:[#allocation2] sm:$0xff] %vm1022, %v1020
        %1024 = vrot.lane.b32.xlu0 %v893, 104
        %v1025 = vpop.permute.xlu0 %1024
        %1026 = vrot.lane.b32.xlu0 %v898, 104
        %v1027 = vpop.permute.xlu0 %1026
        %v1029 = vsel %vm838, %v1025, 0
        %v1032 = vsel %vm838, %v1027, 0
        %1034 = vmatpush.bf16.xpose.msra.mxu0 0
        %1035 = vmatpush.bf16.xpose.msra.mxu0 0
        %1036 = vmatpush.bf16.xpose.msra.mxu0 0
        %1037 = vmatpush.bf16.xpose.msra.mxu0 0
        %1038 = vmatpush.bf16.xpose.msra.mxu0 0
        %1039 = vmatpush.bf16.xpose.msra.mxu0 0
        %1040 = vmatpush.bf16.xpose.msra.mxu0 0
        %1041 = vmatpush.bf16.xpose.msra.mxu0 %v1032
        %1042 = vmatmul.bf16.gmra.mxu0 %v1029
        %v1043 = vpop.f32.mrf.mxu0
        %v1044 = vadd.f32 0.0, %v1043
        %v1045 = vpop.f32.mrf.mxu0
        %1046 = vdwg.mxu0
        %v1047 = vsel %vm838, %v1044, -inf
        %1048 = vmax.xlane.f32.xlu0 %v1047
        %v1049 = vpop.xlane.xlu0 %1048
        %v1050 = vsub.f32 %v1044, %v1049
        %v1051 = vmul.f32 %v1050, 1.442695
        %v1052 = vpow.pop %v1051
        %v1053 = vsel %vm838, %v1052, 0.0
        %1054 = vadd.xlane.f32.xlu0 %v1053
        %v1055 = vpop.xlane.xlu0 %1054
        %v1056 = vrcp.pop %v1055
        %v1057 = vmul.f32 %v1052, %v1056
        %v1058 = vpack.c.bf16 %v1057, %v1057
        %1059 = vrot.lane.b32.xlu0 %v934, 104
        %v1060 = vpop.permute.xlu0 %1059
        %v1062 = vsel %vm838, %v1058, 0
        %v1065 = vsel %vm873, %v1060, 0
        %1067 = vmatpush.bf16.msra.mxu0 0
        %1068 = vmatpush.bf16.msra.mxu0 0
        %1069 = vmatpush.bf16.msra.mxu0 0
        %1070 = vmatpush.bf16.msra.mxu0 0
        %1071 = vmatpush.bf16.msra.mxu0 0
        %1072 = vmatpush.bf16.msra.mxu0 0
        %1073 = vmatpush.bf16.msra.mxu0 0
        %1074 = vmatpush.bf16.msra.mxu0 %v1065
        %1075 = vmatmul.bf16.gmra.mxu0 %v1062
        %v1076 = vpop.f32.mrf.mxu0
        %v1077 = vadd.f32 0.0, %v1076
        %v1078 = vpop.f32.mrf.mxu0
        %1079 = vdwg.mxu0
        %1081 = vrot.lane.b32.xlu0 %v1077, 24
        %v1082 = vpop.permute.xlu0 %1081
        %vm1084 = vcmask 261312
        %1085 = vst.msk [vmem:[#allocation2] sm:$0xff] %vm1084, %v1082
        %v1086 = vld [vmem:[#allocation2] sm:$0xff]
        %v1087 = vpack.c.bf16 %v1086, %v1086
        %v1088 = vld [vmem:[#allocation9] sm:$0xf]
        %v1089 = vld [vmem:[#allocation9 + $0x4] sm:$0xf]
        %v1090 = vld [vmem:[#allocation9 + $0x8] sm:$0xf]
        %v1091 = vld [vmem:[#allocation9 + $0xc] sm:$0xf]
        %v1096 = vunpack.c.l.b16 %v1088
        %v1097 = vunpack.c.l.b16 %v1089
        %v1098 = vunpack.c.l.b16 %v1090
        %v1099 = vunpack.c.l.b16 %v1091
        %v1100 = vpack.c.b16 %v1097, %v1096
        %v1101 = vpack.c.b16 %v1099, %v1098
        %v1105 = vsel %vm746, %v1087, 0
        %1107 = vmatpush.bf16.msra.mxu0 0
        %1108 = vmatpush.bf16.msra.mxu0 0
        %1109 = vmatpush.bf16.msra.mxu0 0
        %1110 = vmatpush.bf16.msra.mxu0 0
        %1111 = vmatpush.bf16.msra.mxu0 0
        %1112 = vmatpush.bf16.msra.mxu0 0
        %1113 = vmatpush.bf16.msra.mxu0 %v1101
        %1114 = vmatpush.bf16.msra.mxu0 %v1100
        %1115 = vmatmul.bf16.gmra.mxu0 %v1105
        %v1116 = vpop.f32.mrf.mxu0
        %v1117 = vadd.f32 0.0, %v1116
        %v1118 = vpop.f32.mrf.mxu0
        %1119 = vdwg.mxu0
        %v1120 = vadd.f32 %v724, %v1117
        %v1121 = vadd.f32 %v716, %v1120
        %v1122 = vld [vmem:[%s11] sm:$0x1]
        %v1123 = vld [vmem:[%s12] sm:$0x1]
        %v1124 = vsel %vm746, %v1121, 0.0
        %1125 = vadd.xlane.f32.xlu0 %v1124
        %v1126 = vpop.xlane.xlu0 %1125
        %v1127 = vrcp.pop 32.0
        %v1128 = vmul.f32 32.0, %v1127
        %v1129 = vsub.f32 1.0, %v1128
        %v1130 = vmul.f32 %v1127, %v1129
        %v1131 = vadd.f32 %v1127, %v1130
        %vm1132 = vweird.f32 %v1127
        %v1133 = vsel %vm1132, %v1127, %v1131
        %v1134 = vmul.f32 %v1126, %v1133
        %v1135 = vmul.f32 %v1121, %v1121
        %v1136 = vsel %vm746, %v1135, 0.0
        %1137 = vadd.xlane.f32.xlu0 %v1136
        %v1138 = vpop.xlane.xlu0 %1137
        %v1139 = vmul.f32 %v1138, %v1133
        %v1140 = vmul.f32 %v1134, %v1134
        %v1141 = vsub.f32 %v1139, %v1140
        %v1142 = vsub.f32 %v1121, %v1134
        %v1143 = vadd.f32 %v1141, 1e-05
        %v1144 = vrsqrt.pop %v1143
        %v1145 = vmul.f32 %v1144, %v1143
        %v1146 = vmul.f32 %v1145, %v1144
        %v1147 = vmul.f32 0.5, %v1146
        %v1148 = vsub.f32 1.5, %v1147
        %v1149 = vmul.f32 %v1144, %v1148
        %vm1150 = vweird.f32 %v1143
        %vm1151 = vweird.f32 %v1144
        %vm1152 = vmor %vm1150, %vm1151
        %v1153 = vsel %vm1152, %v1144, %v1149
        %v1154 = vmul.f32 %v1142, %v1153
        %v1156 = vperm.slane %v1122, 0
        %v1158 = vmul.f32 %v1154, %v1156
        %v1160 = vperm.slane %v1123, 0
        %v1162 = vadd.f32 %v1158, %v1160
        %v1163 = vpack.c.bf16 %v1162, %v1162
        %v1164 = vld [vmem:[#allocation11] sm:$0xf]
        %v1165 = vld [vmem:[#allocation11 + $0x4] sm:$0xf]
        %v1166 = vld [vmem:[#allocation11 + $0x8] sm:$0xf]
        %v1167 = vld [vmem:[#allocation11 + $0xc] sm:$0xf]
        %v1168 = vld [vmem:[%s14] sm:$0x1]
        %v1170 = vperm.slane %v1168, 0
        %v1176 = vunpack.c.l.b16 %v1164
        %v1177 = vunpack.c.l.b16 %v1165
        %v1178 = vunpack.c.l.b16 %v1166
        %v1179 = vunpack.c.l.b16 %v1167
        %v1180 = vpack.c.b16 %v1177, %v1176
        %v1181 = vpack.c.b16 %v1179, %v1178
        %v1185 = vsel %vm746, %v1163, 0
        %1187 = vmatpush.bf16.msra.mxu0 0
        %1188 = vmatpush.bf16.msra.mxu0 0
        %1189 = vmatpush.bf16.msra.mxu0 0
        %1190 = vmatpush.bf16.msra.mxu0 0
        %1191 = vmatpush.bf16.msra.mxu0 0
        %1192 = vmatpush.bf16.msra.mxu0 0
        %1193 = vmatpush.bf16.msra.mxu0 %v1181
        %1194 = vmatpush.bf16.msra.mxu0 %v1180
        %1195 = vmatmul.bf16.gmra.mxu0 %v1185
        %v1196 = vpop.f32.mrf.mxu0
        %v1197 = vadd.f32 %v1170, %v1196
        %v1198 = vpop.f32.mrf.mxu0
        %1199 = vdwg.mxu0
        %vm1200 = vcmp.ge.f32.partialorder %v1197, 0.0
        %v1201 = vmul.f32 %v1197, 0.01
        %v1202 = vsel %vm1200, %v1197, %v1201
        %v1203 = vpack.c.bf16 %v1202, %v1202
        %v1204 = vld [vmem:[%s15] sm:$0xf]
        %v1205 = vld [vmem:[%s15 + $0x4] sm:$0xf]
        %v1206 = vld [vmem:[%s15 + $0x8] sm:$0xf]
        %v1207 = vld [vmem:[%s15 + $0xc] sm:$0xf]
        %v1208 = vld [vmem:[%s15 + $0x10] sm:$0xf]
        %v1209 = vld [vmem:[%s15 + $0x14] sm:$0xf]
        %v1210 = vld [vmem:[%s15 + $0x18] sm:$0xf]
        %v1211 = vld [vmem:[%s15 + $0x1c] sm:$0xf]
        %v1212 = vld [vmem:[%s16] sm:$0x1]
        %v1214 = vperm.slane %v1212, 0
        %v1224 = vunpack.c.l.b16 %v1204
        %v1225 = vunpack.c.l.b16 %v1205
        %v1226 = vunpack.c.l.b16 %v1206
        %v1227 = vunpack.c.l.b16 %v1207
        %v1228 = vunpack.c.l.b16 %v1208
        %v1229 = vunpack.c.l.b16 %v1209
        %v1230 = vunpack.c.l.b16 %v1210
        %v1231 = vunpack.c.l.b16 %v1211
        %v1232 = vpack.c.b16 %v1225, %v1224
        %v1233 = vpack.c.b16 %v1227, %v1226
        %v1234 = vpack.c.b16 %v1229, %v1228
        %v1235 = vpack.c.b16 %v1231, %v1230
        %vm1240 = vcmask 523264
        %v1242 = vsel %vm1240, %v1203, 0
        %1244 = vmatpush.bf16.msra.mxu0 0
        %1245 = vmatpush.bf16.msra.mxu0 0
        %1246 = vmatpush.bf16.msra.mxu0 0
        %1247 = vmatpush.bf16.msra.mxu0 0
        %1248 = vmatpush.bf16.msra.mxu0 %v1235
        %1249 = vmatpush.bf16.msra.mxu0 %v1234
        %1250 = vmatpush.bf16.msra.mxu0 %v1233
        %1251 = vmatpush.bf16.msra.mxu0 %v1232
        %1252 = vmatmul.bf16.gmra.mxu0 %v1242
        %v1253 = vpop.f32.mrf.mxu0
        %v1254 = vadd.f32 %v1214, %v1253
        %v1255 = vpop.f32.mrf.mxu0
        %1256 = vdwg.mxu0
        %v1257 = vadd.f32 %v1162, %v1254
        %v1258 = vld [vmem:[%s17] sm:$0x1]
        %v1259 = vld [vmem:[%s18] sm:$0x1]
        %v1260 = vsel %vm746, %v1257, 0.0
        %1261 = vadd.xlane.f32.xlu0 %v1260
        %v1262 = vpop.xlane.xlu0 %1261
        %v1263 = vmul.f32 %v1262, %v1133
        %v1264 = vmul.f32 %v1257, %v1257
        %v1265 = vsel %vm746, %v1264, 0.0
        %1266 = vadd.xlane.f32.xlu0 %v1265
        %v1267 = vpop.xlane.xlu0 %1266
        %v1268 = vmul.f32 %v1267, %v1133
        %v1269 = vmul.f32 %v1263, %v1263
        %v1270 = vsub.f32 %v1268, %v1269
        %v1271 = vsub.f32 %v1257, %v1263
        %v1272 = vadd.f32 %v1270, 1e-05
        %v1273 = vrsqrt.pop %v1272
        %v1274 = vmul.f32 %v1273, %v1272
        %v1275 = vmul.f32 %v1274, %v1273
        %v1276 = vmul.f32 0.5, %v1275
        %v1277 = vsub.f32 1.5, %v1276
        %v1278 = vmul.f32 %v1273, %v1277
        %vm1279 = vweird.f32 %v1272
        %vm1280 = vweird.f32 %v1273
        %vm1281 = vmor %vm1279, %vm1280
        %v1282 = vsel %vm1281, %v1273, %v1278
        %v1283 = vmul.f32 %v1271, %v1282
        %v1285 = vperm.slane %v1258, 0
        %v1287 = vmul.f32 %v1283, %v1285
        %v1289 = vperm.slane %v1259, 0
        %v1291 = vadd.f32 %v1287, %v1289
        %1292 = vst.msk [vmem:[%s702] sm:$0xff] %vm746, %v1291
        %s1293 = sand.u32 %s458, 1
        %s1294 = scalar_lea.sflag [#allocation5], %s1293
        %s1295 = sand.u32 %s458, 1
        %s1296 = smul.addr %s1295, 8
        %s1297 = scalar_lea.vmem [#allocation12], %s1296
        // Predicated region
        $region117: #{tpu_custom_call.1} parent=95 // pred_check
          %p1298 = pneg %p468
        $region118: #{tpu_custom_call.1} parent=95 // pred_check_branch
          %1300 = sbr.rel (%p1298) target = $region120
        $region119: #{tpu_custom_call.1} parent=95 // pred_region
          %1302 = vsyncadd %s1294, 0
          %s1303 = smul.addr %s36, 8
          %s1304 = scalar_lea.hbm %s19, %s1303
          %s1306 = sshll.u32 %s1297, 4
          %s1307 = int_to_ptr.vmem [resolvable:$true] %s1306
          %s1308 = sshll.u32 %s1304, 4
          %s1309 = int_to_ptr.hbm [resolvable:$true] %s1308
          %1311 = dma.vmem_to_hbm [thread:$0]  %s1307, 128, %s1309, %s1294
        $region120: #{tpu_custom_call.1} parent=95 // pred_fallthru
          _
      $region96: #{tpu_custom_call.1} parent=5 // pred_fallthru
        _
      %p1312 = scmp.le.s32.totalorder 2, %s31
      // Predicated region
      $region121: #{tpu_custom_call.1} parent=5 // pred_check
        %p1313 = pneg %p1312
      $region122: #{tpu_custom_call.1} parent=5 // pred_check_branch
        %1315 = sbr.rel (%p1313) target = $region124
      $region123: #{tpu_custom_call.1} parent=5 // pred_region
        %s1316 = ssub.s32 %s31, 2
        // Predicated region
        $region125: #{tpu_custom_call.1} parent=123 // pred_check
          %p1317 = pneg %p474
        $region126: #{tpu_custom_call.1} parent=123 // pred_check_branch
          %1319 = sbr.rel (%p1317) target = $region128
        $region127: #{tpu_custom_call.1} parent=123 // pred_region
          %s1320 = sand.u32 %s459, 1
          %s1321 = scalar_lea.sflag [#allocation5], %s1320
          %s1322 = sand.u32 %s459, 1
          %s1323 = smul.addr %s1322, 8
          %s1324 = scalar_lea.vmem [#allocation12], %s1323
          %1326 = dma.done %s1321, 128
        $region128: #{tpu_custom_call.1} parent=123 // pred_fallthru
          _
      $region124: #{tpu_custom_call.1} parent=5 // pred_fallthru
        _
    $region6: #{tpu_custom_call.1} parent=1 // loop_footer
      %s35 = sadd.s32 1, %s31
    $region7: #{tpu_custom_call.1} parent=1 // loop_footer_branch
      %30 = sbr.rel target = $region3
    $region8: #{tpu_custom_call.1} parent=1 // loop_exit
      _
    %1327 = vsyncpa [#allocation4], 1
    %s1328 = scalar_lea.sflag [#allocation4], 1
    %1329 = vsyncpa %s1328, 1
    %1330 = vsyncpa [#allocation7], 1
    %1331 = vsyncpa [#allocation10], 1
    %1332 = vsyncpa [#allocation5], 1
    %s1333 = scalar_lea.sflag [#allocation5], 1
    %1334 = vsyncpa %s1333, 1

// kernel: tpu_custom_call.1
$region0: #{tpu_custom_call.1}
  #allocation0 [shape = 'u32[]', space=smem, size = 0x4, offset = 0x4, fixed_abs, tag = 'smem constant byte address 0x4 - core index']
  #allocation1 [shape = 'u32[72,128]{1,0:T(1,128)}', space=vmem, size = 0x9000, scoped, tag = 'internal scratch']
  #allocation2 [shape = 'f32[8,32]{1,0:T(8,128)}', space=vmem, size = 0x1000, scoped, tag = 'scratch operand']
  %s0 = inlined_call_operand.vmem [shape: f32[16,32], index: 0, kind: input, shape index: {}]
  %s1 = inlined_call_operand.vmem [shape: f32[16,32], index: 1, kind: input, shape index: {}]
  %s2 = inlined_call_operand.vmem [shape: f32[16,32], index: 2, kind: input, shape index: {}]
  %s3 = inlined_call_operand.hbm [shape: bf16[1,32,32], index: 3, kind: input, shape index: {}]
  %s4 = inlined_call_operand.vmem [shape: f32[1,1,32], index: 4, kind: input, shape index: {}]
  %s5 = inlined_call_operand.hbm [shape: bf16[1,32,32], index: 5, kind: input, shape index: {}]
  %s6 = inlined_call_operand.vmem [shape: f32[1,1,32], index: 6, kind: input, shape index: {}]
  %s7 = inlined_call_operand.hbm [shape: bf16[1,32,32], index: 7, kind: input, shape index: {}]
  %s8 = inlined_call_operand.vmem [shape: f32[1,1,32], index: 8, kind: input, shape index: {}]
  %s9 = inlined_call_operand.hbm [shape: bf16[1,32,32], index: 9, kind: input, shape index: {}]
  %s10 = inlined_call_operand.vmem [shape: f32[1,32], index: 10, kind: input, shape index: {}]
  %s11 = inlined_call_operand.vmem [shape: f32[1,32], index: 11, kind: input, shape index: {}]
  %s12 = inlined_call_operand.vmem [shape: f32[1,32], index: 12, kind: input, shape index: {}]
  %s13 = inlined_call_operand.hbm [shape: bf16[32,64], index: 13, kind: input, shape index: {}]
  %s14 = inlined_call_operand.vmem [shape: f32[1,64], index: 14, kind: input, shape index: {}]
  %s15 = inlined_call_operand.vmem [shape: bf16[64,32], index: 15, kind: input, shape index: {}]
  %s16 = inlined_call_operand.vmem [shape: f32[1,32], index: 16, kind: input, shape index: {}]
  %s17 = inlined_call_operand.vmem [shape: f32[1,32], index: 17, kind: input, shape index: {}]
  %s18 = inlined_call_operand.vmem [shape: f32[1,32], index: 18, kind: input, shape index: {}]
  %s19 = inlined_call_operand.hbm [shape: f32[16,32], index: 19, kind: output, shape index: {}]
  %s20 = sld [smem:[#allocation0]]
  $region129: #{tpu_custom_call.1} parent=0
    _
  %s22 = ssub.s32 1, %s20
  %s23 = scalar_select 0, %s22, %s20
  $region1: #{tpu_custom_call.1} parent=0
    #allocation3 [shape = 'u8[8192]{0}', space=vmem, size = 0x2000, scoped, tag = 'input window, operand 3, single buffered']
    #allocation4 [shape = 's32[2]{0}', space=sflag, size = 0x8, scoped, tag = 'scoped memory for tpu_custom_call.1']
    #allocation5 [shape = 's32[2]{0}', space=sflag, size = 0x8, scoped, tag = 'scoped memory for tpu_custom_call.1']
    #allocation6 [shape = 'u8[8192]{0}', space=vmem, size = 0x2000, scoped, tag = 'input window, operand 5, single buffered']
    #allocation7 [shape = 's32[1]{0}', space=sflag, size = 0x4, scoped, tag = 'scoped memory for tpu_custom_call.1']
    #allocation8 [shape = 'u8[8192]{0}', space=vmem, size = 0x2000, scoped, tag = 'input window, operand 7, single buffered']
    #allocation9 [shape = 'u8[8192]{0}', space=vmem, size = 0x2000, scoped, tag = 'input window, operand 9, single buffered']
    #allocation10 [shape = 's32[1]{0}', space=sflag, size = 0x4, scoped, tag = 'scoped memory for tpu_custom_call.1']
    #allocation11 [shape = 'u8[8192]{0}', space=vmem, size = 0x2000, scoped, tag = 'input window, operand 13, single buffered']
    #allocation12 [shape = 'u8[8192]{0}', space=vmem, size = 0x2000, scoped, tag = 'output window, operand 0']
    %24 = vsyncpa [#allocation4], 0
    %25 = vsyncpa [#allocation7], 0
    %26 = vsyncpa [#allocation10], 0
    %27 = vsyncpa [#allocation5], 0
    %s28 = scalar_lea.sflag [#allocation5], 1
    %29 = vsyncpa %s28, 0
    loop: start=0, step=1, limit=4
    $region2: #{tpu_custom_call.1} parent=1 // loop_pre_header
      _
    $region3: #{tpu_custom_call.1} parent=1 // loop_header
      %s31 = sphi 0, %s35
      %p32 = scmp.ge.s32.totalorder %s31, 4
      %s41 = sphi 0, %s43
      %s44 = sphi 0, %s41
      %s45 = sphi 0, %s44
      %s61 = sphi 0, %s45
      %s67 = sphi 0, %s69
      %s70 = sphi 0, %s67
      %s71 = sphi 0, %s70
      %s87 = sphi 0, %s71
      %s93 = sphi 0, %s95
      %s96 = sphi 0, %s93
      %s97 = sphi 0, %s96
      %s113 = sphi 0, %s97
      %s117 = sphi 0, %s117
      %s119 = sphi 0, %s117
      %s120 = sphi 0, %s119
      %s134 = sphi 0, %s120
      %s138 = sphi 0, %s138
      %s140 = sphi 0, %s138
      %s141 = sphi 0, %s140
      %s155 = sphi 0, %s141
      %s159 = sphi 0, %s159
      %s161 = sphi 0, %s159
      %s162 = sphi 0, %s161
      %s176 = sphi 0, %s162
      %s180 = sphi 0, %s180
      %s182 = sphi 0, %s180
      %s183 = sphi 0, %s182
      %s197 = sphi 0, %s183
      %s201 = sphi 0, %s201
      %s203 = sphi 0, %s201
      %s204 = sphi 0, %s203
      %s218 = sphi 0, %s204
      %s222 = sphi 0, %s222
      %s224 = sphi 0, %s222
      %s225 = sphi 0, %s224
      %s239 = sphi 0, %s225
      %s243 = sphi 0, %s243
      %s245 = sphi 0, %s243
      %s246 = sphi 0, %s245
      %s260 = sphi 0, %s246
      %s264 = sphi 0, %s264
      %s266 = sphi 0, %s264
      %s267 = sphi 0, %s266
      %s281 = sphi 0, %s267
      %s285 = sphi 0, %s285
      %s287 = sphi 0, %s285
      %s288 = sphi 0, %s287
      %s302 = sphi 0, %s288
      %s306 = sphi 0, %s306
      %s308 = sphi 0, %s306
      %s309 = sphi 0, %s308
      %s323 = sphi 0, %s309
      %s327 = sphi 0, %s327
      %s329 = sphi 0, %s327
      %s330 = sphi 0, %s329
      %s344 = sphi 0, %s330
      %s348 = sphi 0, %s348
      %s350 = sphi 0, %s348
      %s351 = sphi 0, %s350
      %s365 = sphi 0, %s351
      %s369 = sphi 0, %s369
      %s371 = sphi 0, %s369
      %s372 = sphi 0, %s371
      %s386 = sphi 0, %s372
      %s390 = sphi 0, %s390
      %s392 = sphi 0, %s390
      %s393 = sphi 0, %s392
      %s407 = sphi 0, %s393
      %s411 = sphi 0, %s411
      %s413 = sphi 0, %s411
      %s414 = sphi 0, %s413
      %s428 = sphi 0, %s414
      %s432 = sphi 0, %s432
      %s434 = sphi 0, %s432
      %s435 = sphi 0, %s434
      %s449 = sphi 0, %s435
      %s455 = sphi 0, %s457
      %s458 = sphi 0, %s455
      %s459 = sphi 0, %s458
      %s475 = sphi 0, %s459
    $region4: #{tpu_custom_call.1} parent=1 // loop_header_branch
      %34 = sbr.rel (%p32) target = $region8
    $region5: #{tpu_custom_call.1} parent=1 // loop_body
      %s36 = ssub.s32 %s31, 1
      %s37 = ssub.s32 %s31, 2
      %s38 = sadd.s32 %s31, 1
      %s39 = ssub.s32 %s31, %s38
      %p40 = scmp.eq.s32.totalorder %s39, 0
      %s42 = sadd.s32 %s41, 1
      %s43 = scalar_select %p40, %s41, %s42
      %p46 = pneg %p40
      %p47 = scmp.eq.s32.totalorder %s31, 1
      %p48 = por %p46, %p47
      %p49 = scmp.ne.s32.totalorder %s41, %s44
      %p50 = scmp.eq.s32.totalorder %s31, 0
      %p51 = por %p49, %p50
      %p52 = scmp.ne.s32.totalorder %s41, %s44
      %p53 = scmp.eq.s32.totalorder %s36, 1
      %p54 = por %p52, %p53
      %p55 = scmp.ne.s32.totalorder %s44, %s45
      %p56 = scmp.eq.s32.totalorder %s36, 0
      %p57 = por %p55, %p56
      %p58 = scmp.ne.s32.totalorder %s44, %s45
      %p59 = scmp.eq.s32.totalorder %s37, 1
      %p60 = por %p58, %p59
      %p62 = scmp.ne.s32.totalorder %s45, %s61
      %p63 = scmp.eq.s32.totalorder %s37, 0
      %p64 = por %p62, %p63
      %s65 = ssub.s32 %s31, %s38
      %p66 = scmp.eq.s32.totalorder %s65, 0
      %s68 = sadd.s32 %s67, 1
      %s69 = scalar_select %p66, %s67, %s68
      %p72 = pneg %p66
      %p73 = scmp.eq.s32.totalorder %s31, 1
      %p74 = por %p72, %p73
      %p75 = scmp.ne.s32.totalorder %s67, %s70
      %p76 = scmp.eq.s32.totalorder %s31, 0
      %p77 = por %p75, %p76
      %p78 = scmp.ne.s32.totalorder %s67, %s70
      %p79 = scmp.eq.s32.totalorder %s36, 1
      %p80 = por %p78, %p79
      %p81 = scmp.ne.s32.totalorder %s70, %s71
      %p82 = scmp.eq.s32.totalorder %s36, 0
      %p83 = por %p81, %p82
      %p84 = scmp.ne.s32.totalorder %s70, %s71
      %p85 = scmp.eq.s32.totalorder %s37, 1
      %p86 = por %p84, %p85
      %p88 = scmp.ne.s32.totalorder %s71, %s87
      %p89 = scmp.eq.s32.totalorder %s37, 0
      %p90 = por %p88, %p89
      %s91 = ssub.s32 %s31, %s38
      %p92 = scmp.eq.s32.totalorder %s91, 0
      %s94 = sadd.s32 %s93, 1
      %s95 = scalar_select %p92, %s93, %s94
      %p98 = pneg %p92
      %p99 = scmp.eq.s32.totalorder %s31, 1
      %p100 = por %p98, %p99
      %p101 = scmp.ne.s32.totalorder %s93, %s96
      %p102 = scmp.eq.s32.totalorder %s31, 0
      %p103 = por %p101, %p102
      %p104 = scmp.ne.s32.totalorder %s93, %s96
      %p105 = scmp.eq.s32.totalorder %s36, 1
      %p106 = por %p104, %p105
      %p107 = scmp.ne.s32.totalorder %s96, %s97
      %p108 = scmp.eq.s32.totalorder %s36, 0
      %p109 = por %p107, %p108
      %p110 = scmp.ne.s32.totalorder %s96, %s97
      %p111 = scmp.eq.s32.totalorder %s37, 1
      %p112 = por %p110, %p111
      %p114 = scmp.ne.s32.totalorder %s97, %s113
      %p115 = scmp.eq.s32.totalorder %s37, 0
      %p116 = por %p114, %p115
      %s118 = sadd.s32 %s117, 1
      %p121 = scmp.eq.s32.totalorder %s31, 1
      %p122 = scmp.ne.s32.totalorder %s117, %s119
      %p123 = scmp.eq.s32.totalorder %s31, 0
      %p124 = por %p122, %p123
      %p125 = scmp.ne.s32.totalorder %s117, %s119
      %p126 = scmp.eq.s32.totalorder %s36, 1
      %p127 = por %p125, %p126
      %p128 = scmp.ne.s32.totalorder %s119, %s120
      %p129 = scmp.eq.s32.totalorder %s36, 0
      %p130 = por %p128, %p129
      %p131 = scmp.ne.s32.totalorder %s119, %s120
      %p132 = scmp.eq.s32.totalorder %s37, 1
      %p133 = por %p131, %p132
      %p135 = scmp.ne.s32.totalorder %s120, %s134
      %p136 = scmp.eq.s32.totalorder %s37, 0
      %p137 = por %p135, %p136
      %s139 = sadd.s32 %s138, 1
      %p142 = scmp.eq.s32.totalorder %s31, 1
      %p143 = scmp.ne.s32.totalorder %s138, %s140
      %p144 = scmp.eq.s32.totalorder %s31, 0
      %p145 = por %p143, %p144
      %p146 = scmp.ne.s32.totalorder %s138, %s140
      %p147 = scmp.eq.s32.totalorder %s36, 1
      %p148 = por %p146, %p147
      %p149 = scmp.ne.s32.totalorder %s140, %s141
      %p150 = scmp.eq.s32.totalorder %s36, 0
      %p151 = por %p149, %p150
      %p152 = scmp.ne.s32.totalorder %s140, %s141
      %p153 = scmp.eq.s32.totalorder %s37, 1
      %p154 = por %p152, %p153
      %p156 = scmp.ne.s32.totalorder %s141, %s155
      %p157 = scmp.eq.s32.totalorder %s37, 0
      %p158 = por %p156, %p157
      %s160 = sadd.s32 %s159, 1
      %p163 = scmp.eq.s32.totalorder %s31, 1
      %p164 = scmp.ne.s32.totalorder %s159, %s161
      %p165 = scmp.eq.s32.totalorder %s31, 0
      %p166 = por %p164, %p165
      %p167 = scmp.ne.s32.totalorder %s159, %s161
      %p168 = scmp.eq.s32.totalorder %s36, 1
      %p169 = por %p167, %p168
      %p170 = scmp.ne.s32.totalorder %s161, %s162
      %p171 = scmp.eq.s32.totalorder %s36, 0
      %p172 = por %p170, %p171
      %p173 = scmp.ne.s32.totalorder %s161, %s162
      %p174 = scmp.eq.s32.totalorder %s37, 1
      %p175 = por %p173, %p174
      %p177 = scmp.ne.s32.totalorder %s162, %s176
      %p178 = scmp.eq.s32.totalorder %s37, 0
      %p179 = por %p177, %p178
      %s181 = sadd.s32 %s180, 1
      %p184 = scmp.eq.s32.totalorder %s31, 1
      %p185 = scmp.ne.s32.totalorder %s180, %s182
      %p186 = scmp.eq.s32.totalorder %s31, 0
      %p187 = por %p185, %p186
      %p188 = scmp.ne.s32.totalorder %s180, %s182
      %p189 = scmp.eq.s32.totalorder %s36, 1
      %p190 = por %p188, %p189
      %p191 = scmp.ne.s32.totalorder %s182, %s183
      %p192 = scmp.eq.s32.totalorder %s36, 0
      %p193 = por %p191, %p192
      %p194 = scmp.ne.s32.totalorder %s182, %s183
      %p195 = scmp.eq.s32.totalorder %s37, 1
      %p196 = por %p194, %p195
      %p198 = scmp.ne.s32.totalorder %s183, %s197
      %p199 = scmp.eq.s32.totalorder %s37, 0
      %p200 = por %p198, %p199
      %s202 = sadd.s32 %s201, 1
      %p205 = scmp.eq.s32.totalorder %s31, 1
      %p206 = scmp.ne.s32.totalorder %s201, %s203
      %p207 = scmp.eq.s32.totalorder %s31, 0
      %p208 = por %p206, %p207
      %p209 = scmp.ne.s32.totalorder %s201, %s203
      %p210 = scmp.eq.s32.totalorder %s36, 1
      %p211 = por %p209, %p210
      %p212 = scmp.ne.s32.totalorder %s203, %s204
      %p213 = scmp.eq.s32.totalorder %s36, 0
      %p214 = por %p212, %p213
      %p215 = scmp.ne.s32.totalorder %s203, %s204
      %p216 = scmp.eq.s32.totalorder %s37, 1
      %p217 = por %p215, %p216
      %p219 = scmp.ne.s32.totalorder %s204, %s218
      %p220 = scmp.eq.s32.totalorder %s37, 0
      %p221 = por %p219, %p220
      %s223 = sadd.s32 %s222, 1
      %p226 = scmp.eq.s32.totalorder %s31, 1
      %p227 = scmp.ne.s32.totalorder %s222, %s224
      %p228 = scmp.eq.s32.totalorder %s31, 0
      %p229 = por %p227, %p228
      %p230 = scmp.ne.s32.totalorder %s222, %s224
      %p231 = scmp.eq.s32.totalorder %s36, 1
      %p232 = por %p230, %p231
      %p233 = scmp.ne.s32.totalorder %s224, %s225
      %p234 = scmp.eq.s32.totalorder %s36, 0
      %p235 = por %p233, %p234
      %p236 = scmp.ne.s32.totalorder %s224, %s225
      %p237 = scmp.eq.s32.totalorder %s37, 1
      %p238 = por %p236, %p237
      %p240 = scmp.ne.s32.totalorder %s225, %s239
      %p241 = scmp.eq.s32.totalorder %s37, 0
      %p242 = por %p240, %p241
      %s244 = sadd.s32 %s243, 1
      %p247 = scmp.eq.s32.totalorder %s31, 1
      %p248 = scmp.ne.s32.totalorder %s243, %s245
      %p249 = scmp.eq.s32.totalorder %s31, 0
      %p250 = por %p248, %p249
      %p251 = scmp.ne.s32.totalorder %s243, %s245
      %p252 = scmp.eq.s32.totalorder %s36, 1
      %p253 = por %p251, %p252
      %p254 = scmp.ne.s32.totalorder %s245, %s246
      %p255 = scmp.eq.s32.totalorder %s36, 0
      %p256 = por %p254, %p255
      %p257 = scmp.ne.s32.totalorder %s245, %s246
      %p258 = scmp.eq.s32.totalorder %s37, 1
      %p259 = por %p257, %p258
      %p261 = scmp.ne.s32.totalorder %s246, %s260
      %p262 = scmp.eq.s32.totalorder %s37, 0
      %p263 = por %p261, %p262
      %s265 = sadd.s32 %s264, 1
      %p268 = scmp.eq.s32.totalorder %s31, 1
      %p269 = scmp.ne.s32.totalorder %s264, %s266
      %p270 = scmp.eq.s32.totalorder %s31, 0
      %p271 = por %p269, %p270
      %p272 = scmp.ne.s32.totalorder %s264, %s266
      %p273 = scmp.eq.s32.totalorder %s36, 1
      %p274 = por %p272, %p273
      %p275 = scmp.ne.s32.totalorder %s266, %s267
      %p276 = scmp.eq.s32.totalorder %s36, 0
      %p277 = por %p275, %p276
      %p278 = scmp.ne.s32.totalorder %s266, %s267
      %p279 = scmp.eq.s32.totalorder %s37, 1
      %p280 = por %p278, %p279
      %p282 = scmp.ne.s32.totalorder %s267, %s281
      %p283 = scmp.eq.s32.totalorder %s37, 0
      %p284 = por %p282, %p283
      %s286 = sadd.s32 %s285, 1
      %p289 = scmp.eq.s32.totalorder %s31, 1
      %p290 = scmp.ne.s32.totalorder %s285, %s287
      %p291 = scmp.eq.s32.totalorder %s31, 0
      %p292 = por %p290, %p291
      %p293 = scmp.ne.s32.totalorder %s285, %s287
      %p294 = scmp.eq.s32.totalorder %s36, 1
      %p295 = por %p293, %p294
      %p296 = scmp.ne.s32.totalorder %s287, %s288
      %p297 = scmp.eq.s32.totalorder %s36, 0
      %p298 = por %p296, %p297
      %p299 = scmp.ne.s32.totalorder %s287, %s288
      %p300 = scmp.eq.s32.totalorder %s37, 1
      %p301 = por %p299, %p300
      %p303 = scmp.ne.s32.totalorder %s288, %s302
      %p304 = scmp.eq.s32.totalorder %s37, 0
      %p305 = por %p303, %p304
      %s307 = sadd.s32 %s306, 1
      %p310 = scmp.eq.s32.totalorder %s31, 1
      %p311 = scmp.ne.s32.totalorder %s306, %s308
      %p312 = scmp.eq.s32.totalorder %s31, 0
      %p313 = por %p311, %p312
      %p314 = scmp.ne.s32.totalorder %s306, %s308
      %p315 = scmp.eq.s32.totalorder %s36, 1
      %p316 = por %p314, %p315
      %p317 = scmp.ne.s32.totalorder %s308, %s309
      %p318 = scmp.eq.s32.totalorder %s36, 0
      %p319 = por %p317, %p318
      %p320 = scmp.ne.s32.totalorder %s308, %s309
      %p321 = scmp.eq.s32.totalorder %s37, 1
      %p322 = por %p320, %p321
      %p324 = scmp.ne.s32.totalorder %s309, %s323
      %p325 = scmp.eq.s32.totalorder %s37, 0
      %p326 = por %p324, %p325
      %s328 = sadd.s32 %s327, 1
      %p331 = scmp.eq.s32.totalorder %s31, 1
      %p332 = scmp.ne.s32.totalorder %s327, %s329
      %p333 = scmp.eq.s32.totalorder %s31, 0
      %p334 = por %p332, %p333
      %p335 = scmp.ne.s32.totalorder %s327, %s329
      %p336 = scmp.eq.s32.totalorder %s36, 1
      %p337 = por %p335, %p336
      %p338 = scmp.ne.s32.totalorder %s329, %s330
      %p339 = scmp.eq.s32.totalorder %s36, 0
      %p340 = por %p338, %p339
      %p341 = scmp.ne.s32.totalorder %s329, %s330
      %p342 = scmp.eq.s32.totalorder %s37, 1
      %p343 = por %p341, %p342
      %p345 = scmp.ne.s32.totalorder %s330, %s344
      %p346 = scmp.eq.s32.totalorder %s37, 0
      %p347 = por %p345, %p346
      %s349 = sadd.s32 %s348, 1
      %p352 = scmp.eq.s32.totalorder %s31, 1
      %p353 = scmp.ne.s32.totalorder %s348, %s350
      %p354 = scmp.eq.s32.totalorder %s31, 0
      %p355 = por %p353, %p354
      %p356 = scmp.ne.s32.totalorder %s348, %s350
      %p357 = scmp.eq.s32.totalorder %s36, 1
      %p358 = por %p356, %p357
      %p359 = scmp.ne.s32.totalorder %s350, %s351
      %p360 = scmp.eq.s32.totalorder %s36, 0
      %p361 = por %p359, %p360
      %p362 = scmp.ne.s32.totalorder %s350, %s351
      %p363 = scmp.eq.s32.totalorder %s37, 1
      %p364 = por %p362, %p363
      %p366 = scmp.ne.s32.totalorder %s351, %s365
      %p367 = scmp.eq.s32.totalorder %s37, 0
      %p368 = por %p366, %p367
      %s370 = sadd.s32 %s369, 1
      %p373 = scmp.eq.s32.totalorder %s31, 1
      %p374 = scmp.ne.s32.totalorder %s369, %s371
      %p375 = scmp.eq.s32.totalorder %s31, 0
      %p376 = por %p374, %p375
      %p377 = scmp.ne.s32.totalorder %s369, %s371
      %p378 = scmp.eq.s32.totalorder %s36, 1
      %p379 = por %p377, %p378
      %p380 = scmp.ne.s32.totalorder %s371, %s372
      %p381 = scmp.eq.s32.totalorder %s36, 0
      %p382 = por %p380, %p381
      %p383 = scmp.ne.s32.totalorder %s371, %s372
      %p384 = scmp.eq.s32.totalorder %s37, 1
      %p385 = por %p383, %p384
      %p387 = scmp.ne.s32.totalorder %s372, %s386
      %p388 = scmp.eq.s32.totalorder %s37, 0
      %p389 = por %p387, %p388
      %s391 = sadd.s32 %s390, 1
      %p394 = scmp.eq.s32.totalorder %s31, 1
      %p395 = scmp.ne.s32.totalorder %s390, %s392
      %p396 = scmp.eq.s32.totalorder %s31, 0
      %p397 = por %p395, %p396
      %p398 = scmp.ne.s32.totalorder %s390, %s392
      %p399 = scmp.eq.s32.totalorder %s36, 1
      %p400 = por %p398, %p399
      %p401 = scmp.ne.s32.totalorder %s392, %s393
      %p402 = scmp.eq.s32.totalorder %s36, 0
      %p403 = por %p401, %p402
      %p404 = scmp.ne.s32.totalorder %s392, %s393
      %p405 = scmp.eq.s32.totalorder %s37, 1
      %p406 = por %p404, %p405
      %p408 = scmp.ne.s32.totalorder %s393, %s407
      %p409 = scmp.eq.s32.totalorder %s37, 0
      %p410 = por %p408, %p409
      %s412 = sadd.s32 %s411, 1
      %p415 = scmp.eq.s32.totalorder %s31, 1
      %p416 = scmp.ne.s32.totalorder %s411, %s413
      %p417 = scmp.eq.s32.totalorder %s31, 0
      %p418 = por %p416, %p417
      %p419 = scmp.ne.s32.totalorder %s411, %s413
      %p420 = scmp.eq.s32.totalorder %s36, 1
      %p421 = por %p419, %p420
      %p422 = scmp.ne.s32.totalorder %s413, %s414
      %p423 = scmp.eq.s32.totalorder %s36, 0
      %p424 = por %p422, %p423
      %p425 = scmp.ne.s32.totalorder %s413, %s414
      %p426 = scmp.eq.s32.totalorder %s37, 1
      %p427 = por %p425, %p426
      %p429 = scmp.ne.s32.totalorder %s414, %s428
      %p430 = scmp.eq.s32.totalorder %s37, 0
      %p431 = por %p429, %p430
      %s433 = sadd.s32 %s432, 1
      %p436 = scmp.eq.s32.totalorder %s31, 1
      %p437 = scmp.ne.s32.totalorder %s432, %s434
      %p438 = scmp.eq.s32.totalorder %s31, 0
      %p439 = por %p437, %p438
      %p440 = scmp.ne.s32.totalorder %s432, %s434
      %p441 = scmp.eq.s32.totalorder %s36, 1
      %p442 = por %p440, %p441
      %p443 = scmp.ne.s32.totalorder %s434, %s435
      %p444 = scmp.eq.s32.totalorder %s36, 0
      %p445 = por %p443, %p444
      %p446 = scmp.ne.s32.totalorder %s434, %s435
      %p447 = scmp.eq.s32.totalorder %s37, 1
      %p448 = por %p446, %p447
      %p450 = scmp.ne.s32.totalorder %s435, %s449
      %p451 = scmp.eq.s32.totalorder %s37, 0
      %p452 = por %p450, %p451
      %s453 = ssub.s32 %s31, %s38
      %p454 = scmp.eq.s32.totalorder %s453, 0
      %s456 = sadd.s32 %s455, 1
      %s457 = scalar_select %p454, %s455, %s456
      %p460 = pneg %p454
      %p461 = scmp.eq.s32.totalorder %s31, 1
      %p462 = por %p460, %p461
      %p463 = scmp.ne.s32.totalorder %s455, %s458
      %p464 = scmp.eq.s32.totalorder %s31, 0
      %p465 = por %p463, %p464
      %p466 = scmp.ne.s32.totalorder %s455, %s458
      %p467 = scmp.eq.s32.totalorder %s36, 1
      %p468 = por %p466, %p467
      %p469 = scmp.ne.s32.totalorder %s458, %s459
      %p470 = scmp.eq.s32.totalorder %s36, 0
      %p471 = por %p469, %p470
      %p472 = scmp.ne.s32.totalorder %s458, %s459
      %p473 = scmp.eq.s32.totalorder %s37, 1
      %p474 = por %p472, %p473
      %p476 = scmp.ne.s32.totalorder %s459, %s475
      %p477 = scmp.eq.s32.totalorder %s37, 0
      %p478 = por %p476, %p477
      %p479 = scmp.le.s32.totalorder 1, %s31
      %p480 = scmp.lt.s32.totalorder %s31, 3
      %p481 = pnand %p479, %p480
      %p482 = pneg %p481
      // Predicated region
      $region9: #{tpu_custom_call.1} parent=5 // pred_check
        _
      $region10: #{tpu_custom_call.1} parent=5 // pred_check_branch
        %484 = sbr.rel (%p481) target = $region12
      $region11: #{tpu_custom_call.1} parent=5 // pred_region
        %s485 = ssub.s32 %s31, 1
        // Predicated region
        $region13: #{tpu_custom_call.1} parent=11 // pred_check
          %p486 = pneg %p130
        $region14: #{tpu_custom_call.1} parent=11 // pred_check_branch
          %488 = sbr.rel (%p486) target = $region16
        $region15: #{tpu_custom_call.1} parent=11 // pred_region
          %490 = vsyncadd [#allocation4], 0
          %s491 = sshll.u32 %s3, 4
          %s492 = int_to_ptr.hbm [resolvable:$true] %s491
          %s493 = sshll.u32 [#allocation3], 4
          %s494 = int_to_ptr.vmem [resolvable:$true] %s493
          %499 = dma.hbm_to_vmem [thread:$0]  %s492, 256, %s494, [#allocation4], 64, 64, 4
        $region16: #{tpu_custom_call.1} parent=11 // pred_fallthru
          _
        // Predicated region
        $region17: #{tpu_custom_call.1} parent=11 // pred_check
          %p500 = pneg %p151
        $region18: #{tpu_custom_call.1} parent=11 // pred_check_branch
          %502 = sbr.rel (%p500) target = $region20
        $region19: #{tpu_custom_call.1} parent=11 // pred_region
          _
        $region20: #{tpu_custom_call.1} parent=11 // pred_fallthru
          _
        // Predicated region
        $region21: #{tpu_custom_call.1} parent=11 // pred_check
          %p503 = pneg %p172
        $region22: #{tpu_custom_call.1} parent=11 // pred_check_branch
          %505 = sbr.rel (%p503) target = $region24
        $region23: #{tpu_custom_call.1} parent=11 // pred_region
          %507 = vsyncadd [#allocation7], 0
          %s508 = sshll.u32 %s5, 4
          %s509 = int_to_ptr.hbm [resolvable:$true] %s508
          %s510 = sshll.u32 [#allocation6], 4
          %s511 = int_to_ptr.vmem [resolvable:$true] %s510
          %516 = dma.hbm_to_vmem [thread:$0]  %s509, 256, %s511, [#allocation7], 64, 64, 4
        $region24: #{tpu_custom_call.1} parent=11 // pred_fallthru
          _
        // Predicated region
        $region25: #{tpu_custom_call.1} parent=11 // pred_check
          %p517 = pneg %p193
        $region26: #{tpu_custom_call.1} parent=11 // pred_check_branch
          %519 = sbr.rel (%p517) target = $region28
        $region27: #{tpu_custom_call.1} parent=11 // pred_region
          _
        $region28: #{tpu_custom_call.1} parent=11 // pred_fallthru
          _
        // Predicated region
        $region29: #{tpu_custom_call.1} parent=11 // pred_check
          %p520 = pneg %p214
        $region30: #{tpu_custom_call.1} parent=11 // pred_check_branch
          %522 = sbr.rel (%p520) target = $region32
        $region31: #{tpu_custom_call.1} parent=11 // pred_region
          %524 = vsyncadd [#allocation7], 0
          %s525 = sshll.u32 %s7, 4
          %s526 = int_to_ptr.hbm [resolvable:$true] %s525
          %s527 = sshll.u32 [#allocation8], 4
          %s528 = int_to_ptr.vmem [resolvable:$true] %s527
          %533 = dma.hbm_to_vmem [thread:$0]  %s526, 256, %s528, [#allocation7], 64, 64, 4
        $region32: #{tpu_custom_call.1} parent=11 // pred_fallthru
          _
        // Predicated region
        $region33: #{tpu_custom_call.1} parent=11 // pred_check
          %p534 = pneg %p235
        $region34: #{tpu_custom_call.1} parent=11 // pred_check_branch
          %536 = sbr.rel (%p534) target = $region36
        $region35: #{tpu_custom_call.1} parent=11 // pred_region
          _
        $region36: #{tpu_custom_call.1} parent=11 // pred_fallthru
          _
        // Predicated region
        $region37: #{tpu_custom_call.1} parent=11 // pred_check
          %p537 = pneg %p256
        $region38: #{tpu_custom_call.1} parent=11 // pred_check_branch
          %539 = sbr.rel (%p537) target = $region40
        $region39: #{tpu_custom_call.1} parent=11 // pred_region
          %541 = vsyncadd [#allocation10], 0
          %s542 = sshll.u32 %s9, 4
          %s543 = int_to_ptr.hbm [resolvable:$true] %s542
          %s544 = sshll.u32 [#allocation9], 4
          %s545 = int_to_ptr.vmem [resolvable:$true] %s544
          %550 = dma.hbm_to_vmem [thread:$0]  %s543, 256, %s545, [#allocation10], 64, 64, 4
        $region40: #{tpu_custom_call.1} parent=11 // pred_fallthru
          _
        // Predicated region
        $region41: #{tpu_custom_call.1} parent=11 // pred_check
          %p551 = pneg %p277
        $region42: #{tpu_custom_call.1} parent=11 // pred_check_branch
          %553 = sbr.rel (%p551) target = $region44
        $region43: #{tpu_custom_call.1} parent=11 // pred_region
          _
        $region44: #{tpu_custom_call.1} parent=11 // pred_fallthru
          _
        // Predicated region
        $region45: #{tpu_custom_call.1} parent=11 // pred_check
          %p554 = pneg %p298
        $region46: #{tpu_custom_call.1} parent=11 // pred_check_branch
          %556 = sbr.rel (%p554) target = $region48
        $region47: #{tpu_custom_call.1} parent=11 // pred_region
          _
        $region48: #{tpu_custom_call.1} parent=11 // pred_fallthru
          _
        // Predicated region
        $region49: #{tpu_custom_call.1} parent=11 // pred_check
          %p557 = pneg %p319
        $region50: #{tpu_custom_call.1} parent=11 // pred_check_branch
          %559 = sbr.rel (%p557) target = $region52
        $region51: #{tpu_custom_call.1} parent=11 // pred_region
          _
        $region52: #{tpu_custom_call.1} parent=11 // pred_fallthru
          _
        // Predicated region
        $region53: #{tpu_custom_call.1} parent=11 // pred_check
          %p560 = pneg %p340
        $region54: #{tpu_custom_call.1} parent=11 // pred_check_branch
          %562 = sbr.rel (%p560) target = $region56
        $region55: #{tpu_custom_call.1} parent=11 // pred_region
          %564 = vsyncadd [#allocation10], 0
          %s565 = sshll.u32 %s13, 4
          %s566 = int_to_ptr.hbm [resolvable:$true] %s565
          %s567 = sshll.u32 [#allocation11], 4
          %s568 = int_to_ptr.vmem [resolvable:$true] %s567
          %573 = dma.hbm_to_vmem [thread:$0]  %s566, 256, %s568, [#allocation10], 64, 64, 4
        $region56: #{tpu_custom_call.1} parent=11 // pred_fallthru
          _
        // Predicated region
        $region57: #{tpu_custom_call.1} parent=11 // pred_check
          %p574 = pneg %p361
        $region58: #{tpu_custom_call.1} parent=11 // pred_check_branch
          %576 = sbr.rel (%p574) target = $region60
        $region59: #{tpu_custom_call.1} parent=11 // pred_region
          _
        $region60: #{tpu_custom_call.1} parent=11 // pred_fallthru
          _
        // Predicated region
        $region61: #{tpu_custom_call.1} parent=11 // pred_check
          %p577 = pneg %p382
        $region62: #{tpu_custom_call.1} parent=11 // pred_check_branch
          %579 = sbr.rel (%p577) target = $region64
        $region63: #{tpu_custom_call.1} parent=11 // pred_region
          _
        $region64: #{tpu_custom_call.1} parent=11 // pred_fallthru
          _
        // Predicated region
        $region65: #{tpu_custom_call.1} parent=11 // pred_check
          %p580 = pneg %p403
        $region66: #{tpu_custom_call.1} parent=11 // pred_check_branch
          %582 = sbr.rel (%p580) target = $region68
        $region67: #{tpu_custom_call.1} parent=11 // pred_region
          _
        $region68: #{tpu_custom_call.1} parent=11 // pred_fallthru
          _
        // Predicated region
        $region69: #{tpu_custom_call.1} parent=11 // pred_check
          %p583 = pneg %p424
        $region70: #{tpu_custom_call.1} parent=11 // pred_check_branch
          %585 = sbr.rel (%p583) target = $region72
        $region71: #{tpu_custom_call.1} parent=11 // pred_region
          _
        $region72: #{tpu_custom_call.1} parent=11 // pred_fallthru
          _
        // Predicated region
        $region73: #{tpu_custom_call.1} parent=11 // pred_check
          %p586 = pneg %p445
        $region74: #{tpu_custom_call.1} parent=11 // pred_check_branch
          %588 = sbr.rel (%p586) target = $region76
        $region75: #{tpu_custom_call.1} parent=11 // pred_region
          _
        $region76: #{tpu_custom_call.1} parent=11 // pred_fallthru
          _
      $region12: #{tpu_custom_call.1} parent=5 // pred_fallthru
        _
      %p589 = scmp.lt.s32.totalorder %s31, 2
      // Predicated region
      $region77: #{tpu_custom_call.1} parent=5 // pred_check
        %p590 = pneg %p589
      $region78: #{tpu_custom_call.1} parent=5 // pred_check_branch
        %592 = sbr.rel (%p590) target = $region80
      $region79: #{tpu_custom_call.1} parent=5 // pred_region
        // Predicated region
        $region81: #{tpu_custom_call.1} parent=79 // pred_check
          %p593 = pneg %p51
        $region82: #{tpu_custom_call.1} parent=79 // pred_check_branch
          %595 = sbr.rel (%p593) target = $region84
        $region83: #{tpu_custom_call.1} parent=79 // pred_region
          %p596 = scmp.lt.s32.totalorder %s31, 1
          %s597 = scalar_select %p596, %s31, 1
          %s598 = smul.addr %s597, 8
          %s599 = scalar_lea.vmem %s0, %s598
        $region84: #{tpu_custom_call.1} parent=79 // pred_fallthru
          _
        // Predicated region
        $region85: #{tpu_custom_call.1} parent=79 // pred_check
          %p600 = pneg %p77
        $region86: #{tpu_custom_call.1} parent=79 // pred_check_branch
          %602 = sbr.rel (%p600) target = $region88
        $region87: #{tpu_custom_call.1} parent=79 // pred_region
          %p603 = scmp.lt.s32.totalorder %s31, 1
          %s604 = scalar_select %p603, %s31, 1
          %s605 = smul.addr %s604, 8
          %s606 = scalar_lea.vmem %s1, %s605
        $region88: #{tpu_custom_call.1} parent=79 // pred_fallthru
          _
        // Predicated region
        $region89: #{tpu_custom_call.1} parent=79 // pred_check
          %p607 = pneg %p103
        $region90: #{tpu_custom_call.1} parent=79 // pred_check_branch
          %609 = sbr.rel (%p607) target = $region92
        $region91: #{tpu_custom_call.1} parent=79 // pred_region
          %p610 = scmp.lt.s32.totalorder %s31, 1
          %s611 = scalar_select %p610, %s31, 1
          %s612 = smul.addr %s611, 8
          %s613 = scalar_lea.vmem %s2, %s612
        $region92: #{tpu_custom_call.1} parent=79 // pred_fallthru
          _
      $region80: #{tpu_custom_call.1} parent=5 // pred_fallthru
        _
      %p614 = scmp.le.s32.totalorder 1, %s31
      %p615 = scmp.lt.s32.totalorder %s31, 3
      %p616 = pnand %p614, %p615
      %p617 = pneg %p616
      // Predicated region
      $region93: #{tpu_custom_call.1} parent=5 // pred_check
        _
      $region94: #{tpu_custom_call.1} parent=5 // pred_check_branch
        %619 = sbr.rel (%p616) target = $region96
      $region95: #{tpu_custom_call.1} parent=5 // pred_region
        %s620 = ssub.s32 %s31, 1
        // Predicated region
        $region97: #{tpu_custom_call.1} parent=95 // pred_check
          %p621 = pneg %p130
        $region98: #{tpu_custom_call.1} parent=95 // pred_check_branch
          %623 = sbr.rel (%p621) target = $region100
        $region99: #{tpu_custom_call.1} parent=95 // pred_region
          %625 = dma.done [#allocation4], 256
        $region100: #{tpu_custom_call.1} parent=95 // pred_fallthru
          _
        // Predicated region
        $region101: #{tpu_custom_call.1} parent=95 // pred_check
          %p626 = pneg %p172
        $region102: #{tpu_custom_call.1} parent=95 // pred_check_branch
          %628 = sbr.rel (%p626) target = $region104
        $region103: #{tpu_custom_call.1} parent=95 // pred_region
          %630 = dma.done [#allocation7], 256
        $region104: #{tpu_custom_call.1} parent=95 // pred_fallthru
          _
        // Predicated region
        $region105: #{tpu_custom_call.1} parent=95 // pred_check
          %p631 = pneg %p214
        $region106: #{tpu_custom_call.1} parent=95 // pred_check_branch
          %633 = sbr.rel (%p631) target = $region108
        $region107: #{tpu_custom_call.1} parent=95 // pred_region
          %635 = dma.done [#allocation7], 256
        $region108: #{tpu_custom_call.1} parent=95 // pred_fallthru
          _
        // Predicated region
        $region109: #{tpu_custom_call.1} parent=95 // pred_check
          %p636 = pneg %p256
        $region110: #{tpu_custom_call.1} parent=95 // pred_check_branch
          %638 = sbr.rel (%p636) target = $region112
        $region111: #{tpu_custom_call.1} parent=95 // pred_region
          %640 = dma.done [#allocation10], 256
        $region112: #{tpu_custom_call.1} parent=95 // pred_fallthru
          _
        // Predicated region
        $region113: #{tpu_custom_call.1} parent=95 // pred_check
          %p641 = pneg %p340
        $region114: #{tpu_custom_call.1} parent=95 // pred_check_branch
          %643 = sbr.rel (%p641) target = $region116
        $region115: #{tpu_custom_call.1} parent=95 // pred_region
          %645 = dma.done [#allocation10], 256
        $region116: #{tpu_custom_call.1} parent=95 // pred_fallthru
          _
        %p646 = scmp.lt.s32.totalorder %s36, 1
        %s647 = scalar_select %p646, %s36, 1
        %s648 = smul.addr %s647, 8
        %s649 = scalar_lea.vmem %s0, %s648
        %p650 = pneg %p57
        %p651 = pneg %p54
        %p652 = scmp.lt.s32.totalorder %s36, 1
        %s653 = scalar_select %p652, %s36, 1
        %s654 = smul.addr %s653, 8
        %s655 = scalar_lea.vmem %s1, %s654
        %p656 = pneg %p83
        %p657 = pneg %p80
        %p658 = scmp.lt.s32.totalorder %s36, 1
        %s659 = scalar_select %p658, %s36, 1
        %s660 = smul.addr %s659, 8
        %s661 = scalar_lea.vmem %s2, %s660
        %p662 = pneg %p109
        %p663 = pneg %p106
        %p664 = pneg %p130
        %p665 = pneg %p127
        %p666 = pneg %p151
        %p667 = pneg %p148
        %p668 = pneg %p172
        %p669 = pneg %p169
        %p670 = pneg %p193
        %p671 = pneg %p190
        %p672 = pneg %p214
        %p673 = pneg %p211
        %p674 = pneg %p235
        %p675 = pneg %p232
        %p676 = pneg %p256
        %p677 = pneg %p253
        %p678 = pneg %p277
        %p679 = pneg %p274
        %p680 = pneg %p298
        %p681 = pneg %p295
        %p682 = pneg %p319
        %p683 = pneg %p316
        %p684 = pneg %p340
        %p685 = pneg %p337
        %p686 = pneg %p361
        %p687 = pneg %p358
        %p688 = pneg %p382
        %p689 = pneg %p379
        %p690 = pneg %p403
        %p691 = pneg %p400
        %p692 = pneg %p424
        %p693 = pneg %p421
        %p694 = pneg %p445
        %p695 = pneg %p442
        %p696 = pneg %p471
        %p697 = pneg %p468
        %s698 = sand.u32 %s458, 1
        %s699 = scalar_lea.sflag [#allocation5], %s698
        %s700 = sand.u32 %s458, 1
        %s701 = smul.addr %s700, 8
        %s702 = scalar_lea.vmem [#allocation12], %s701
        %p703 = scmp.lt.s32.totalorder %s36, 1
        %s704 = scalar_select %p703, %s36, 1
        %s705 = smul.addr %s704, 8
        %s706 = scalar_lea.vmem %s0, %s705
        %p707 = scmp.lt.s32.totalorder %s36, 1
        %s708 = scalar_select %p707, %s36, 1
        %s709 = smul.addr %s708, 8
        %s710 = scalar_lea.vmem %s1, %s709
        %p711 = scmp.lt.s32.totalorder %s36, 1
        %s712 = scalar_select %p711, %s36, 1
        %s713 = smul.addr %s712, 8
        %s714 = scalar_lea.vmem %s2, %s713
        %v716 = vld [vmem:[%s706] sm:$0xff]
        %v717 = vpack.c.bf16 %v716, %v716
        %v718 = vld [vmem:[%s710] sm:$0xff]
        %v719 = vpack.c.bf16 %v718, %v718
        %v720 = vld [vmem:[%s714] sm:$0xff]
        %v721 = vpack.c.bf16 %v720, %v720
        %v722 = vld [vmem:[%s10] sm:$0x1]
        %v724 = vperm.slane %v722, 0
        %v726 = vld [vmem:[#allocation3] sm:$0xf]
        %v727 = vld [vmem:[#allocation3 + $0x4] sm:$0xf]
        %v728 = vld [vmem:[#allocation3 + $0x8] sm:$0xf]
        %v729 = vld [vmem:[#allocation3 + $0xc] sm:$0xf]
        %v730 = vld [vmem:[%s4] sm:$0x1]
        %v732 = vperm.slane %v730, 0
        %v738 = vunpack.c.l.b16 %v726
        %v739 = vunpack.c.l.b16 %v727
        %v740 = vunpack.c.l.b16 %v728
        %v741 = vunpack.c.l.b16 %v729
        %v742 = vpack.c.b16 %v739, %v738
        %v743 = vpack.c.b16 %v741, %v740
        %vm746 = vcmask 261120
        %v748 = vsel %vm746, %v717, 0
        %750 = vmatpush.bf16.msra.mxu0 0
        %751 = vmatpush.bf16.msra.mxu0 0
        %752 = vmatpush.bf16.msra.mxu0 0
        %753 = vmatpush.bf16.msra.mxu0 0
        %754 = vmatpush.bf16.msra.mxu0 0
        %755 = vmatpush.bf16.msra.mxu0 0
        %756 = vmatpush.bf16.msra.mxu0 %v743
        %757 = vmatpush.bf16.msra.mxu0 %v742
        %758 = vmatmul.bf16.gmra.mxu0 %v748
        %v759 = vpop.f32.mrf.mxu0
        %v760 = vadd.f32 %v732, %v759
        %v761 = vpop.f32.mrf.mxu0
        %762 = vdwg.mxu0
        %v763 = vld [vmem:[#allocation6] sm:$0xf]
        %v764 = vld [vmem:[#allocation6 + $0x4] sm:$0xf]
        %v765 = vld [vmem:[#allocation6 + $0x8] sm:$0xf]
        %v766 = vld [vmem:[#allocation6 + $0xc] sm:$0xf]
        %v767 = vld [vmem:[%s6] sm:$0x1]
        %v769 = vperm.slane %v767, 0
        %v775 = vunpack.c.l.b16 %v763
        %v776 = vunpack.c.l.b16 %v764
        %v777 = vunpack.c.l.b16 %v765
        %v778 = vunpack.c.l.b16 %v766
        %v779 = vpack.c.b16 %v776, %v775
        %v780 = vpack.c.b16 %v778, %v777
        %v784 = vsel %vm746, %v719, 0
        %786 = vmatpush.bf16.msra.mxu0 0
        %787 = vmatpush.bf16.msra.mxu0 0
        %788 = vmatpush.bf16.msra.mxu0 0
        %789 = vmatpush.bf16.msra.mxu0 0
        %790 = vmatpush.bf16.msra.mxu0 0
        %791 = vmatpush.bf16.msra.mxu0 0
        %792 = vmatpush.bf16.msra.mxu0 %v780
        %793 = vmatpush.bf16.msra.mxu0 %v779
        %794 = vmatmul.bf16.gmra.mxu0 %v784
        %v795 = vpop.f32.mrf.mxu0
        %v796 = vadd.f32 %v769, %v795
        %v797 = vpop.f32.mrf.mxu0
        %798 = vdwg.mxu0
        %v799 = vld [vmem:[#allocation8] sm:$0xf]
        %v800 = vld [vmem:[#allocation8 + $0x4] sm:$0xf]
        %v801 = vld [vmem:[#allocation8 + $0x8] sm:$0xf]
        %v802 = vld [vmem:[#allocation8 + $0xc] sm:$0xf]
        %v803 = vld [vmem:[%s8] sm:$0x1]
        %v805 = vperm.slane %v803, 0
        %v811 = vunpack.c.l.b16 %v799
        %v812 = vunpack.c.l.b16 %v800
        %v813 = vunpack.c.l.b16 %v801
        %v814 = vunpack.c.l.b16 %v802
        %v815 = vpack.c.b16 %v812, %v811
        %v816 = vpack.c.b16 %v814, %v813
        %v820 = vsel %vm746, %v721, 0
        %822 = vmatpush.bf16.msra.mxu0 0
        %823 = vmatpush.bf16.msra.mxu0 0
        %824 = vmatpush.bf16.msra.mxu0 0
        %825 = vmatpush.bf16.msra.mxu0 0
        %826 = vmatpush.bf16.msra.mxu0 0
        %827 = vmatpush.bf16.msra.mxu0 0
        %828 = vmatpush.bf16.msra.mxu0 %v816
        %829 = vmatpush.bf16.msra.mxu0 %v815
        %830 = vmatmul.bf16.gmra.mxu0 %v820
        %v831 = vpop.f32.mrf.mxu0
        %v832 = vadd.f32 %v805, %v831
        %v833 = vpop.f32.mrf.mxu0
        %834 = vdwg.mxu0
        %v835 = vpack.c.bf16 %v760, %v760
        %v836 = vpack.c.bf16 %v796, %v796
        %v837 = vpack.c.bf16 %v832, %v832
        %vm838 = vcmask 64512
        %v840 = vsel %vm838, %v835, 0
        %v843 = vsel %vm838, %v836, 0
        %845 = vmatpush.bf16.xpose.msra.mxu0 0
        %846 = vmatpush.bf16.xpose.msra.mxu0 0
        %847 = vmatpush.bf16.xpose.msra.mxu0 0
        %848 = vmatpush.bf16.xpose.msra.mxu0 0
        %849 = vmatpush.bf16.xpose.msra.mxu0 0
        %850 = vmatpush.bf16.xpose.msra.mxu0 0
        %851 = vmatpush.bf16.xpose.msra.mxu0 0
        %852 = vmatpush.bf16.xpose.msra.mxu0 %v843
        %853 = vmatmul.bf16.gmra.mxu0 %v840
        %v854 = vpop.f32.mrf.mxu0
        %v855 = vadd.f32 0.0, %v854
        %v856 = vpop.f32.mrf.mxu0
        %857 = vdwg.mxu0
        %v858 = vsel %vm838, %v855, -inf
        %859 = vmax.xlane.f32.xlu0 %v858
        %v860 = vpop.xlane.xlu0 %859
        %v861 = vsub.f32 %v855, %v860
        %v862 = vmul.f32 %v861, 1.442695
        %v863 = vpow.pop %v862
        %v864 = vsel %vm838, %v863, 0.0
        %865 = vadd.xlane.f32.xlu0 %v864
        %v866 = vpop.xlane.xlu0 %865
        %v867 = vrcp.pop %v866
        %v868 = vmul.f32 %v863, %v867
        %v869 = vpack.c.bf16 %v868, %v868
        %v871 = vsel %vm838, %v869, 0
        %vm873 = vcmask 1043456
        %v875 = vsel %vm873, %v837, 0
        %877 = vmatpush.bf16.msra.mxu0 0
        %878 = vmatpush.bf16.msra.mxu0 0
        %879 = vmatpush.bf16.msra.mxu0 0
        %880 = vmatpush.bf16.msra.mxu0 0
        %881 = vmatpush.bf16.msra.mxu0 0
        %882 = vmatpush.bf16.msra.mxu0 0
        %883 = vmatpush.bf16.msra.mxu0 0
        %884 = vmatpush.bf16.msra.mxu0 %v875
        %885 = vmatmul.bf16.gmra.mxu0 %v871
        %v886 = vpop.f32.mrf.mxu0
        %v887 = vadd.f32 0.0, %v886
        %v888 = vpop.f32.mrf.mxu0
        %889 = vdwg.mxu0
        %890 = vst.msk [vmem:[#allocation2] sm:$0xff] %vm838, %v887
        %v892 = vunpack.c.l.b16 %v835
        %v893 = vpack.c.b16 %v892, %v892
        %894 = vrot.lane.b32.xlu0 %v893, 120
        %v895 = vpop.permute.xlu0 %894
        %v897 = vunpack.c.l.b16 %v836
        %v898 = vpack.c.b16 %v897, %v897
        %899 = vrot.lane.b32.xlu0 %v898, 120
        %v900 = vpop.permute.xlu0 %899
        %v902 = vsel %vm838, %v895, 0
        %v905 = vsel %vm838, %v900, 0
        %907 = vmatpush.bf16.xpose.msra.mxu0 0
        %908 = vmatpush.bf16.xpose.msra.mxu0 0
        %909 = vmatpush.bf16.xpose.msra.mxu0 0
        %910 = vmatpush.bf16.xpose.msra.mxu0 0
        %911 = vmatpush.bf16.xpose.msra.mxu0 0
        %912 = vmatpush.bf16.xpose.msra.mxu0 0
        %913 = vmatpush.bf16.xpose.msra.mxu0 0
        %914 = vmatpush.bf16.xpose.msra.mxu0 %v905
        %915 = vmatmul.bf16.gmra.mxu0 %v902
        %v916 = vpop.f32.mrf.mxu0
        %v917 = vadd.f32 0.0, %v916
        %v918 = vpop.f32.mrf.mxu0
        %919 = vdwg.mxu0
        %v920 = vsel %vm838, %v917, -inf
        %921 = vmax.xlane.f32.xlu0 %v920
        %v922 = vpop.xlane.xlu0 %921
        %v923 = vsub.f32 %v917, %v922
        %v924 = vmul.f32 %v923, 1.442695
        %v925 = vpow.pop %v924
        %v926 = vsel %vm838, %v925, 0.0
        %927 = vadd.xlane.f32.xlu0 %v926
        %v928 = vpop.xlane.xlu0 %927
        %v929 = vrcp.pop %v928
        %v930 = vmul.f32 %v925, %v929
        %v931 = vpack.c.bf16 %v930, %v930
        %v933 = vunpack.c.l.b16 %v837
        %v934 = vpack.c.b16 %v933, %v933
        %935 = vrot.lane.b32.xlu0 %v934, 120
        %v936 = vpop.permute.xlu0 %935
        %v938 = vsel %vm838, %v931, 0
        %v941 = vsel %vm873, %v936, 0
        %943 = vmatpush.bf16.msra.mxu0 0
        %944 = vmatpush.bf16.msra.mxu0 0
        %945 = vmatpush.bf16.msra.mxu0 0
        %946 = vmatpush.bf16.msra.mxu0 0
        %947 = vmatpush.bf16.msra.mxu0 0
        %948 = vmatpush.bf16.msra.mxu0 0
        %949 = vmatpush.bf16.msra.mxu0 0
        %950 = vmatpush.bf16.msra.mxu0 %v941
        %951 = vmatmul.bf16.gmra.mxu0 %v938
        %v952 = vpop.f32.mrf.mxu0
        %v953 = vadd.f32 0.0, %v952
        %v954 = vpop.f32.mrf.mxu0
        %955 = vdwg.mxu0
        %957 = vrot.lane.b32.xlu0 %v953, 8
        %v958 = vpop.permute.xlu0 %957
        %vm960 = vcmask 130112
        %961 = vst.msk [vmem:[#allocation2] sm:$0xff] %vm960, %v958
        %962 = vrot.lane.b32.xlu0 %v893, 112
        %v963 = vpop.permute.xlu0 %962
        %964 = vrot.lane.b32.xlu0 %v898, 112
        %v965 = vpop.permute.xlu0 %964
        %v967 = vsel %vm838, %v963, 0
        %v970 = vsel %vm838, %v965, 0
        %972 = vmatpush.bf16.xpose.msra.mxu0 0
        %973 = vmatpush.bf16.xpose.msra.mxu0 0
        %974 = vmatpush.bf16.xpose.msra.mxu0 0
        %975 = vmatpush.bf16.xpose.msra.mxu0 0
        %976 = vmatpush.bf16.xpose.msra.mxu0 0
        %977 = vmatpush.bf16.xpose.msra.mxu0 0
        %978 = vmatpush.bf16.xpose.msra.mxu0 0
        %979 = vmatpush.bf16.xpose.msra.mxu0 %v970
        %980 = vmatmul.bf16.gmra.mxu0 %v967
        %v981 = vpop.f32.mrf.mxu0
        %v982 = vadd.f32 0.0, %v981
        %v983 = vpop.f32.mrf.mxu0
        %984 = vdwg.mxu0
        %v985 = vsel %vm838, %v982, -inf
        %986 = vmax.xlane.f32.xlu0 %v985
        %v987 = vpop.xlane.xlu0 %986
        %v988 = vsub.f32 %v982, %v987
        %v989 = vmul.f32 %v988, 1.442695
        %v990 = vpow.pop %v989
        %v991 = vsel %vm838, %v990, 0.0
        %992 = vadd.xlane.f32.xlu0 %v991
        %v993 = vpop.xlane.xlu0 %992
        %v994 = vrcp.pop %v993
        %v995 = vmul.f32 %v990, %v994
        %v996 = vpack.c.bf16 %v995, %v995
        %997 = vrot.lane.b32.xlu0 %v934, 112
        %v998 = vpop.permute.xlu0 %997
        %v1000 = vsel %vm838, %v996, 0
        %v1003 = vsel %vm873, %v998, 0
        %1005 = vmatpush.bf16.msra.mxu0 0
        %1006 = vmatpush.bf16.msra.mxu0 0
        %1007 = vmatpush.bf16.msra.mxu0 0
        %1008 = vmatpush.bf16.msra.mxu0 0
        %1009 = vmatpush.bf16.msra.mxu0 0
        %1010 = vmatpush.bf16.msra.mxu0 0
        %1011 = vmatpush.bf16.msra.mxu0 0
        %1012 = vmatpush.bf16.msra.mxu0 %v1003
        %1013 = vmatmul.bf16.gmra.mxu0 %v1000
        %v1014 = vpop.f32.mrf.mxu0
        %v1015 = vadd.f32 0.0, %v1014
        %v1016 = vpop.f32.mrf.mxu0
        %1017 = vdwg.mxu0
        %1019 = vrot.lane.b32.xlu0 %v1015, 16
        %v1020 = vpop.permute.xlu0 %1019
        %vm1022 = vcmask 195712
        %1023 = vst.msk [vmem:[#allocation2] sm:$0xff] %vm1022, %v1020
        %1024 = vrot.lane.b32.xlu0 %v893, 104
        %v1025 = vpop.permute.xlu0 %1024
        %1026 = vrot.lane.b32.xlu0 %v898, 104
        %v1027 = vpop.permute.xlu0 %1026
        %v1029 = vsel %vm838, %v1025, 0
        %v1032 = vsel %vm838, %v1027, 0
        %1034 = vmatpush.bf16.xpose.msra.mxu0 0
        %1035 = vmatpush.bf16.xpose.msra.mxu0 0
        %1036 = vmatpush.bf16.xpose.msra.mxu0 0
        %1037 = vmatpush.bf16.xpose.msra.mxu0 0
        %1038 = vmatpush.bf16.xpose.msra.mxu0 0
        %1039 = vmatpush.bf16.xpose.msra.mxu0 0
        %1040 = vmatpush.bf16.xpose.msra.mxu0 0
        %1041 = vmatpush.bf16.xpose.msra.mxu0 %v1032
        %1042 = vmatmul.bf16.gmra.mxu0 %v1029
        %v1043 = vpop.f32.mrf.mxu0
        %v1044 = vadd.f32 0.0, %v1043
        %v1045 = vpop.f32.mrf.mxu0
        %1046 = vdwg.mxu0
        %v1047 = vsel %vm838, %v1044, -inf
        %1048 = vmax.xlane.f32.xlu0 %v1047
        %v1049 = vpop.xlane.xlu0 %1048
        %v1050 = vsub.f32 %v1044, %v1049
        %v1051 = vmul.f32 %v1050, 1.442695
        %v1052 = vpow.pop %v1051
        %v1053 = vsel %vm838, %v1052, 0.0
        %1054 = vadd.xlane.f32.xlu0 %v1053
        %v1055 = vpop.xlane.xlu0 %1054
        %v1056 = vrcp.pop %v1055
        %v1057 = vmul.f32 %v1052, %v1056
        %v1058 = vpack.c.bf16 %v1057, %v1057
        %1059 = vrot.lane.b32.xlu0 %v934, 104
        %v1060 = vpop.permute.xlu0 %1059
        %v1062 = vsel %vm838, %v1058, 0
        %v1065 = vsel %vm873, %v1060, 0
        %1067 = vmatpush.bf16.msra.mxu0 0
        %1068 = vmatpush.bf16.msra.mxu0 0
        %1069 = vmatpush.bf16.msra.mxu0 0
        %1070 = vmatpush.bf16.msra.mxu0 0
        %1071 = vmatpush.bf16.msra.mxu0 0
        %1072 = vmatpush.bf16.msra.mxu0 0
        %1073 = vmatpush.bf16.msra.mxu0 0
        %1074 = vmatpush.bf16.msra.mxu0 %v1065
        %1075 = vmatmul.bf16.gmra.mxu0 %v1062
        %v1076 = vpop.f32.mrf.mxu0
        %v1077 = vadd.f32 0.0, %v1076
        %v1078 = vpop.f32.mrf.mxu0
        %1079 = vdwg.mxu0
        %1081 = vrot.lane.b32.xlu0 %v1077, 24
        %v1082 = vpop.permute.xlu0 %1081
        %vm1084 = vcmask 261312
        %1085 = vst.msk [vmem:[#allocation2] sm:$0xff] %vm1084, %v1082
        %v1086 = vld [vmem:[#allocation2] sm:$0xff]
        %v1087 = vpack.c.bf16 %v1086, %v1086
        %v1088 = vld [vmem:[#allocation9] sm:$0xf]
        %v1089 = vld [vmem:[#allocation9 + $0x4] sm:$0xf]
        %v1090 = vld [vmem:[#allocation9 + $0x8] sm:$0xf]
        %v1091 = vld [vmem:[#allocation9 + $0xc] sm:$0xf]
        %v1096 = vunpack.c.l.b16 %v1088
        %v1097 = vunpack.c.l.b16 %v1089
        %v1098 = vunpack.c.l.b16 %v1090
        %v1099 = vunpack.c.l.b16 %v1091
        %v1100 = vpack.c.b16 %v1097, %v1096
        %v1101 = vpack.c.b16 %v1099, %v1098
        %v1105 = vsel %vm746, %v1087, 0
        %1107 = vmatpush.bf16.msra.mxu0 0
        %1108 = vmatpush.bf16.msra.mxu0 0
        %1109 = vmatpush.bf16.msra.mxu0 0
        %1110 = vmatpush.bf16.msra.mxu0 0
        %1111 = vmatpush.bf16.msra.mxu0 0
        %1112 = vmatpush.bf16.msra.mxu0 0
        %1113 = vmatpush.bf16.msra.mxu0 %v1101
        %1114 = vmatpush.bf16.msra.mxu0 %v1100
        %1115 = vmatmul.bf16.gmra.mxu0 %v1105
        %v1116 = vpop.f32.mrf.mxu0
        %v1117 = vadd.f32 0.0, %v1116
        %v1118 = vpop.f32.mrf.mxu0
        %1119 = vdwg.mxu0
        %v1120 = vadd.f32 %v724, %v1117
        %v1121 = vadd.f32 %v716, %v1120
        %v1122 = vld [vmem:[%s11] sm:$0x1]
        %v1123 = vld [vmem:[%s12] sm:$0x1]
        %v1124 = vsel %vm746, %v1121, 0.0
        %1125 = vadd.xlane.f32.xlu0 %v1124
        %v1126 = vpop.xlane.xlu0 %1125
        %v1127 = vrcp.pop 32.0
        %v1128 = vmul.f32 32.0, %v1127
        %v1129 = vsub.f32 1.0, %v1128
        %v1130 = vmul.f32 %v1127, %v1129
        %v1131 = vadd.f32 %v1127, %v1130
        %vm1132 = vweird.f32 %v1127
        %v1133 = vsel %vm1132, %v1127, %v1131
        %v1134 = vmul.f32 %v1126, %v1133
        %v1135 = vmul.f32 %v1121, %v1121
        %v1136 = vsel %vm746, %v1135, 0.0
        %1137 = vadd.xlane.f32.xlu0 %v1136
        %v1138 = vpop.xlane.xlu0 %1137
        %v1139 = vmul.f32 %v1138, %v1133
        %v1140 = vmul.f32 %v1134, %v1134
        %v1141 = vsub.f32 %v1139, %v1140
        %v1142 = vsub.f32 %v1121, %v1134
        %v1143 = vadd.f32 %v1141, 1e-05
        %v1144 = vrsqrt.pop %v1143
        %v1145 = vmul.f32 %v1144, %v1143
        %v1146 = vmul.f32 %v1145, %v1144
        %v1147 = vmul.f32 0.5, %v1146
        %v1148 = vsub.f32 1.5, %v1147
        %v1149 = vmul.f32 %v1144, %v1148
        %vm1150 = vweird.f32 %v1143
        %vm1151 = vweird.f32 %v1144
        %vm1152 = vmor %vm1150, %vm1151
        %v1153 = vsel %vm1152, %v1144, %v1149
        %v1154 = vmul.f32 %v1142, %v1153
        %v1156 = vperm.slane %v1122, 0
        %v1158 = vmul.f32 %v1154, %v1156
        %v1160 = vperm.slane %v1123, 0
        %v1162 = vadd.f32 %v1158, %v1160
        %v1163 = vpack.c.bf16 %v1162, %v1162
        %v1164 = vld [vmem:[#allocation11] sm:$0xf]
        %v1165 = vld [vmem:[#allocation11 + $0x4] sm:$0xf]
        %v1166 = vld [vmem:[#allocation11 + $0x8] sm:$0xf]
        %v1167 = vld [vmem:[#allocation11 + $0xc] sm:$0xf]
        %v1168 = vld [vmem:[%s14] sm:$0x1]
        %v1170 = vperm.slane %v1168, 0
        %v1176 = vunpack.c.l.b16 %v1164
        %v1177 = vunpack.c.l.b16 %v1165
        %v1178 = vunpack.c.l.b16 %v1166
        %v1179 = vunpack.c.l.b16 %v1167
        %v1180 = vpack.c.b16 %v1177, %v1176
        %v1181 = vpack.c.b16 %v1179, %v1178
        %v1185 = vsel %vm746, %v1163, 0
        %1187 = vmatpush.bf16.msra.mxu0 0
        %1188 = vmatpush.bf16.msra.mxu0 0
        %1189 = vmatpush.bf16.msra.mxu0 0
        %1190 = vmatpush.bf16.msra.mxu0 0
        %1191 = vmatpush.bf16.msra.mxu0 0
        %1192 = vmatpush.bf16.msra.mxu0 0
        %1193 = vmatpush.bf16.msra.mxu0 %v1181
        %1194 = vmatpush.bf16.msra.mxu0 %v1180
        %1195 = vmatmul.bf16.gmra.mxu0 %v1185
        %v1196 = vpop.f32.mrf.mxu0
        %v1197 = vadd.f32 %v1170, %v1196
        %v1198 = vpop.f32.mrf.mxu0
        %1199 = vdwg.mxu0
        %vm1200 = vcmp.ge.f32.partialorder %v1197, 0.0
        %v1201 = vmul.f32 %v1197, 0.01
        %v1202 = vsel %vm1200, %v1197, %v1201
        %v1203 = vpack.c.bf16 %v1202, %v1202
        %v1204 = vld [vmem:[%s15] sm:$0xf]
        %v1205 = vld [vmem:[%s15 + $0x4] sm:$0xf]
        %v1206 = vld [vmem:[%s15 + $0x8] sm:$0xf]
        %v1207 = vld [vmem:[%s15 + $0xc] sm:$0xf]
        %v1208 = vld [vmem:[%s15 + $0x10] sm:$0xf]
        %v1209 = vld [vmem:[%s15 + $0x14] sm:$0xf]
        %v1210 = vld [vmem:[%s15 + $0x18] sm:$0xf]
        %v1211 = vld [vmem:[%s15 + $0x1c] sm:$0xf]
        %v1212 = vld [vmem:[%s16] sm:$0x1]
        %v1214 = vperm.slane %v1212, 0
        %v1224 = vunpack.c.l.b16 %v1204
        %v1225 = vunpack.c.l.b16 %v1205
        %v1226 = vunpack.c.l.b16 %v1206
        %v1227 = vunpack.c.l.b16 %v1207
        %v1228 = vunpack.c.l.b16 %v1208
        %v1229 = vunpack.c.l.b16 %v1209
        %v1230 = vunpack.c.l.b16 %v1210
        %v1231 = vunpack.c.l.b16 %v1211
        %v1232 = vpack.c.b16 %v1225, %v1224
        %v1233 = vpack.c.b16 %v1227, %v1226
        %v1234 = vpack.c.b16 %v1229, %v1228
        %v1235 = vpack.c.b16 %v1231, %v1230
        %vm1240 = vcmask 523264
        %v1242 = vsel %vm1240, %v1203, 0
        %1244 = vmatpush.bf16.msra.mxu0 0
        %1245 = vmatpush.bf16.msra.mxu0 0
        %1246 = vmatpush.bf16.msra.mxu0 0
        %1247 = vmatpush.bf16.msra.mxu0 0
        %1248 = vmatpush.bf16.msra.mxu0 %v1235
        %1249 = vmatpush.bf16.msra.mxu0 %v1234
        %1250 = vmatpush.bf16.msra.mxu0 %v1233
        %1251 = vmatpush.bf16.msra.mxu0 %v1232
        %1252 = vmatmul.bf16.gmra.mxu0 %v1242
        %v1253 = vpop.f32.mrf.mxu0
        %v1254 = vadd.f32 %v1214, %v1253
        %v1255 = vpop.f32.mrf.mxu0
        %1256 = vdwg.mxu0
        %v1257 = vadd.f32 %v1162, %v1254
        %v1258 = vld [vmem:[%s17] sm:$0x1]
        %v1259 = vld [vmem:[%s18] sm:$0x1]
        %v1260 = vsel %vm746, %v1257, 0.0
        %1261 = vadd.xlane.f32.xlu0 %v1260
        %v1262 = vpop.xlane.xlu0 %1261
        %v1263 = vmul.f32 %v1262, %v1133
        %v1264 = vmul.f32 %v1257, %v1257
        %v1265 = vsel %vm746, %v1264, 0.0
        %1266 = vadd.xlane.f32.xlu0 %v1265
        %v1267 = vpop.xlane.xlu0 %1266
        %v1268 = vmul.f32 %v1267, %v1133
        %v1269 = vmul.f32 %v1263, %v1263
        %v1270 = vsub.f32 %v1268, %v1269
        %v1271 = vsub.f32 %v1257, %v1263
        %v1272 = vadd.f32 %v1270, 1e-05
        %v1273 = vrsqrt.pop %v1272
        %v1274 = vmul.f32 %v1273, %v1272
        %v1275 = vmul.f32 %v1274, %v1273
        %v1276 = vmul.f32 0.5, %v1275
        %v1277 = vsub.f32 1.5, %v1276
        %v1278 = vmul.f32 %v1273, %v1277
        %vm1279 = vweird.f32 %v1272
        %vm1280 = vweird.f32 %v1273
        %vm1281 = vmor %vm1279, %vm1280
        %v1282 = vsel %vm1281, %v1273, %v1278
        %v1283 = vmul.f32 %v1271, %v1282
        %v1285 = vperm.slane %v1258, 0
        %v1287 = vmul.f32 %v1283, %v1285
        %v1289 = vperm.slane %v1259, 0
        %v1291 = vadd.f32 %v1287, %v1289
        %1292 = vst.msk [vmem:[%s702] sm:$0xff] %vm746, %v1291
        %s1293 = sand.u32 %s458, 1
        %s1294 = scalar_lea.sflag [#allocation5], %s1293
        %s1295 = sand.u32 %s458, 1
        %s1296 = smul.addr %s1295, 8
        %s1297 = scalar_lea.vmem [#allocation12], %s1296
        // Predicated region
        $region117: #{tpu_custom_call.1} parent=95 // pred_check
          %p1298 = pneg %p468
        $region118: #{tpu_custom_call.1} parent=95 // pred_check_branch
          %1300 = sbr.rel (%p1298) target = $region120
        $region119: #{tpu_custom_call.1} parent=95 // pred_region
          %1302 = vsyncadd %s1294, 0
          %s1303 = smul.addr %s36, 8
          %s1304 = scalar_lea.hbm %s19, %s1303
          %s1306 = sshll.u32 %s1297, 4
          %s1307 = int_to_ptr.vmem [resolvable:$true] %s1306
          %s1308 = sshll.u32 %s1304, 4
          %s1309 = int_to_ptr.hbm [resolvable:$true] %s1308
          %1311 = dma.vmem_to_hbm [thread:$0]  %s1307, 128, %s1309, %s1294
        $region120: #{tpu_custom_call.1} parent=95 // pred_fallthru
          _
      $region96: #{tpu_custom_call.1} parent=5 // pred_fallthru
        _
      %p1312 = scmp.le.s32.totalorder 2, %s31
      // Predicated region
      $region121: #{tpu_custom_call.1} parent=5 // pred_check
        %p1313 = pneg %p1312
      $region122: #{tpu_custom_call.1} parent=5 // pred_check_branch
        %1315 = sbr.rel (%p1313) target = $region124
      $region123: #{tpu_custom_call.1} parent=5 // pred_region
        %s1316 = ssub.s32 %s31, 2
        // Predicated region
        $region125: #{tpu_custom_call.1} parent=123 // pred_check
          %p1317 = pneg %p474
        $region126: #{tpu_custom_call.1} parent=123 // pred_check_branch
          %1319 = sbr.rel (%p1317) target = $region128
        $region127: #{tpu_custom_call.1} parent=123 // pred_region
          %s1320 = sand.u32 %s459, 1
          %s1321 = scalar_lea.sflag [#allocation5], %s1320
          %s1322 = sand.u32 %s459, 1
          %s1323 = smul.addr %s1322, 8
          %s1324 = scalar_lea.vmem [#allocation12], %s1323
          %1326 = dma.done %s1321, 128
        $region128: #{tpu_custom_call.1} parent=123 // pred_fallthru
          _
      $region124: #{tpu_custom_call.1} parent=5 // pred_fallthru
        _
    $region6: #{tpu_custom_call.1} parent=1 // loop_footer
      %s35 = sadd.s32 1, %s31
    $region7: #{tpu_custom_call.1} parent=1 // loop_footer_branch
      %30 = sbr.rel target = $region3
    $region8: #{tpu_custom_call.1} parent=1 // loop_exit
      _
    %1327 = vsyncpa [#allocation4], 1
    %s1328 = scalar_lea.sflag [#allocation4], 1
    %1329 = vsyncpa %s1328, 1
    %1330 = vsyncpa [#allocation7], 1
    %1331 = vsyncpa [#allocation10], 1
    %1332 = vsyncpa [#allocation5], 1
    %s1333 = scalar_lea.sflag [#allocation5], 1
    %1334 = vsyncpa %s1333, 1

</llo_original>
